<compile_context>
chip_gen: v7x
topology: tpu7x:2x2x1
jax: 0.10.0
libtpu: 0.0.40
codegen_flags: <defaults>
</compile_context>

<pallas_src>
import math

import jax
import jax.numpy as jnp
from jax.experimental import pallas as pl
from jax.experimental.pallas import tpu as pltpu

# ----------------------- synthetic DINOv2-like config -----------------------
PATCH = 14          # DINOv2 patch size
HIDDEN = 32         # hidden size (small synthetic)
HEADS = 2
HEAD_DIM = HIDDEN // HEADS
LAYERS = 2
MLP = HIDDEN * 4
EPS = 1e-6          # DINOv2 layer_norm_eps

# HF AutoImageProcessor (Dinov2) normalization constants (do_rescale=False path)
IMAGENET_MEAN = jnp.array([0.485, 0.456, 0.406], jnp.float32)
IMAGENET_STD = jnp.array([0.229, 0.224, 0.225], jnp.float32)


# ------------------------------ shared helpers -------------------------------
def _gelu(x):
    # TODO(synk): HF DINOv2 uses exact erf-GELU (nn.GELU()); tanh approximation
    # is used because erf has no guaranteed Mosaic lowering.
    c = jnp.float32(math.sqrt(2.0 / math.pi))
    return 0.5 * x * (1.0 + jnp.tanh(c * (x + 0.044715 * x * x * x)))


def _ln(x, g, b):
    mu = jnp.mean(x, axis=-1, keepdims=True)
    var = jnp.mean(jnp.square(x - mu), axis=-1, keepdims=True)
    return (x - mu) * jax.lax.rsqrt(var + EPS) * g + b


# ------------------------------ fused ViT kernel ------------------------------
def _dino_fused_kernel(patches_ref, pw_ref, clspos_ref, mask_ref,
                       ln1_ref, qkvw_ref, qkvb_ref, wo_ref, bo_ref,
                       ln2_ref, w1_ref, b1_ref, w2_ref, b2_ref,
                       lnf_ref, o_ref, buf_ref):
    """One grid step = TB full sequences; everything stays in VMEM.

    patches_ref : (TB*NP, F)  bf16  im2col patches (NP patches per sequence)
    pw_ref      : (F, H)      bf16  patch-embed weight (ImageNet norm folded in)
    clspos_ref  : (L, H)      f32   row 0: cls+pos[0]; rows 1:: pos + patch bias
    mask_ref    : (M, M)      f32   additive block-diagonal attention mask
    ln1/ln2/lnf : (LAYERS,2,H)/(2,H) f32   rows: [gamma; beta]
    qkvw        : (LAYERS,H,3H) bf16  (attention scale folded into Q columns)
    qkvb        : (LAYERS,1,3H) f32
    wo, w2      : bf16 with LayerScale folded in; bo, b2 f32 with LS folded in
    o_ref       : (TB, L, H)  f32
    buf_ref     : (M, H)      f32   VMEM assembly buffer (h rows / head ctx)
    """
    tb, L, _ = o_ref.shape
    NP = L - 1

    # ---- patch embedding: single (TB*NP, F) x (F, H) MXU matmul ----
    emb = jnp.dot(patches_ref[...], pw_ref[...],
                  preferred_element_type=jnp.float32)            # (TB*NP, H) f32

    # ---- assemble per-sequence [CLS | patches] rows into the VMEM buffer ----
    cls_row = clspos_ref[0:1, :]                                 # cls + pos[0]
    pos_rest = clspos_ref[1:, :]                                 # pos[1:] + bias
    for b in range(tb):
        buf_ref[pl.ds(b * L, 1), :] = cls_row
        buf_ref[pl.ds(b * L + 1, NP), :] = emb[b * NP:(b + 1) * NP, :] + pos_rest
    h = buf_ref[...]                                             # (M, H) f32

    for li in range(LAYERS):
        # ---- attention block ----
        ln1 = ln1_ref[li]                                        # (2, H)
        x1 = _ln(h, ln1[0:1, :], ln1[1:2, :])
        qkv = jnp.dot(x1.astype(jnp.bfloat16), qkvw_ref[li],
                      preferred_element_type=jnp.float32) + qkvb_ref[li]   # (M,3H)
        for hd in range(HEADS):
            lo = hd * HEAD_DIM
            hi = lo + HEAD_DIM
            q = qkv[:, lo:hi]                                    # (M, hd) scaled
            k = qkv[:, HIDDEN + lo:HIDDEN + hi]
            v = qkv[:, 2 * HIDDEN + lo:2 * HIDDEN + hi]
            # block-diagonal scores: one matmul covers all TB sequences
            s = jax.lax.dot_general(q, k, (((1,), (1,)), ((), ())),
                                    preferred_element_type=jnp.float32)    # (M,M)
            s = s + mask_ref[...]
            m = jnp.max(s, axis=-1, keepdims=True)
            p = jnp.exp(s - m)
            p = p * pl.reciprocal(jnp.sum(p, axis=-1, keepdims=True),
                                  approx=True)
            ctx_h = jnp.dot(p, v, preferred_element_type=jnp.float32)      # (M,hd)
            buf_ref[:, lo:hi] = ctx_h                            # pack heads
        ctx = buf_ref[...]                                       # (M, H)
        # single out-projection matmul (LayerScale folded into wo/bo)
        h = h + jnp.dot(ctx.astype(jnp.bfloat16), wo_ref[li],
                        preferred_element_type=jnp.float32) + bo_ref[li]

        # ---- MLP block ----
        ln2 = ln2_ref[li]
        x2 = _ln(h, ln2[0:1, :], ln2[1:2, :])
        m1 = jnp.dot(x2.astype(jnp.bfloat16), w1_ref[li],
                     preferred_element_type=jnp.float32) + b1_ref[li]      # (M,MLP)
        m1 = _gelu(m1)
        h = h + jnp.dot(m1.astype(jnp.bfloat16), w2_ref[li],
                        preferred_element_type=jnp.float32) + b2_ref[li]

    lnf = lnf_ref[...]
    out = _ln(h, lnf[0:1, :], lnf[1:2, :])                       # (M, H)
    for b in range(tb):
        o_ref[b] = out[b * L:(b + 1) * L, :]


# ------------------------------- parameters ----------------------------------
def init_params(key, seq_len):
    """Raw synthetic DINOv2-style parameters."""
    def nrm(k, shape, scale=0.02):
        return scale * jax.random.normal(k, shape, jnp.float32)

    keys = jax.random.split(key, 4 + LAYERS)
    params = {
        "patch_w": nrm(keys[0], (3 * PATCH * PATCH, HIDDEN)),
        "patch_b": nrm(keys[1], (HIDDEN,)),
        "cls": nrm(keys[2], (1, 1, HIDDEN)),
        "pos": nrm(keys[3], (1, seq_len, HIDDEN)),
        "ln_f_g": jnp.ones((HIDDEN,), jnp.float32),
        "ln_f_b": jnp.zeros((HIDDEN,), jnp.float32),
        "layers": [],
    }
    for li in range(LAYERS):
        lk = jax.random.split(keys[4 + li], 12)
        params["layers"].append({
            "ln1_g": jnp.ones((HIDDEN,), jnp.float32),
            "ln1_b": jnp.zeros((HIDDEN,), jnp.float32),
            "wq": nrm(lk[0], (HIDDEN, HIDDEN)), "bq": nrm(lk[1], (HIDDEN,)),
            "wk": nrm(lk[2], (HIDDEN, HIDDEN)), "bk": nrm(lk[3], (HIDDEN,)),
            "wv": nrm(lk[4], (HIDDEN, HIDDEN)), "bv": nrm(lk[5], (HIDDEN,)),
            "wo": nrm(lk[6], (HIDDEN, HIDDEN)), "bo": nrm(lk[7], (HIDDEN,)),
            "ls1": jnp.full((HIDDEN,), 1.0, jnp.float32),   # DINOv2 LayerScale
            "ln2_g": jnp.ones((HIDDEN,), jnp.float32),
            "ln2_b": jnp.zeros((HIDDEN,), jnp.float32),
            "w1": nrm(lk[8], (HIDDEN, MLP)), "b1": nrm(lk[9], (MLP,)),
            "w2": nrm(lk[10], (MLP, HIDDEN)), "b2": nrm(lk[11], (HIDDEN,)),
            "ls2": jnp.full((HIDDEN,), 1.0, jnp.float32),
        })
    return params


def prepare_params(p):
    """One-time folds + stacking + bf16 weight cast (done outside the forward)."""
    seq_len = p["pos"].shape[1]

    # Fold ImageNet normalization ((x - mean) / std) into the patch-embed
    # weights/bias.  im2col feature order is (C, PATCH, PATCH), C outermost.
    scale_vec = jnp.repeat(1.0 / IMAGENET_STD, PATCH * PATCH)        # (F,)
    mean_vec = jnp.repeat(IMAGENET_MEAN, PATCH * PATCH)
    pw = p["patch_w"] * scale_vec[:, None]
    pb = p["patch_b"] - (mean_vec * scale_vec) @ p["patch_w"]        # (H,)

    # Fold the patch-embed bias into the position embedding (patch rows only)
    # and merge the CLS token into row 0.
    add = jnp.concatenate(
        [p["cls"].reshape(1, HIDDEN),
         jnp.broadcast_to(pb, (seq_len - 1, HIDDEN))], axis=0)
    clspos = p["pos"][0] + add                                       # (L, H)

    att_scale = 1.0 / math.sqrt(HEAD_DIM)

    def stack(fn):
        return jnp.stack([fn(lp) for lp in p["layers"]], axis=0)

    ln1 = stack(lambda lp: jnp.stack([lp["ln1_g"], lp["ln1_b"]], axis=0))
    qkv_w = stack(lambda lp: jnp.concatenate(
        [lp["wq"] * att_scale, lp["wk"], lp["wv"]], axis=1))
    qkv_b = stack(lambda lp: jnp.concatenate(
        [lp["bq"] * att_scale, lp["bk"], lp["bv"]], axis=0).reshape(1, 3 * HIDDEN))
    wo = stack(lambda lp: lp["wo"] * lp["ls1"][None, :])
    bo = stack(lambda lp: (lp["bo"] * lp["ls1"]).reshape(1, HIDDEN))
    ln2 = stack(lambda lp: jnp.stack([lp["ln2_g"], lp["ln2_b"]], axis=0))
    w1 = stack(lambda lp: lp["w1"])
    b1 = stack(lambda lp: lp["b1"].reshape(1, MLP))
    w2 = stack(lambda lp: lp["w2"] * lp["ls2"][None, :])
    b2 = stack(lambda lp: (lp["b2"] * lp["ls2"]).reshape(1, HIDDEN))
    lnf = jnp.stack([p["ln_f_g"], p["ln_f_b"]], axis=0)

    return {
        "patch_w": pw.astype(jnp.bfloat16),
        "clspos": clspos,
        "ln1": ln1,
        "qkv_w": qkv_w.astype(jnp.bfloat16), "qkv_b": qkv_b,
        "wo": wo.astype(jnp.bfloat16), "bo": bo,
        "ln2": ln2,
        "w1": w1.astype(jnp.bfloat16), "b1": b1,
        "w2": w2.astype(jnp.bfloat16), "b2": b2,
        "lnf": lnf,
    }


# --------------------------------- forward -----------------------------------
def _pick_tb(bn, n_patch):
    """Largest per-step sequence batch that keeps the bf16 patches block
    sublane-aligned (16 rows) and leaves a grid of >= 2 steps (both v7x TCs)."""
    cands = [d for d in range(1, bn + 1)
             if bn % d == 0 and (d * n_patch) % 16 == 0 and bn // d >= 2]
    if cands:
        return max(cands)
    return bn      # fallback: one step, full-dim block (always a legal block)


def dino_v2_forward(images, pp):
    """images: (B, N, C, H, W) float32 in [0,1] -> (B, N*L, HIDDEN)."""
    B, N, C, H, W = images.shape
    BN = B * N
    ph, pw_ = H // PATCH, W // PATCH
    n_patch = ph * pw_
    L = n_patch + 1
    F = C * PATCH * PATCH

    tb = _pick_tb(BN, n_patch)
    grid = BN // tb
    M = tb * L

    # TODO(synk): the HF processor's bilinear 224x224 resize and pos-emb
    # interpolation are omitted; inputs must already be patch-divisible.
    # ImageNet normalization is folded into the patch-embed weights.
    x = images.reshape(BN, C, H, W)            # 'b n c h w -> (b n) c h w'
    # patch-embed conv (kernel = stride = PATCH) as an im2col matmul
    x = x.reshape(BN, C, ph, PATCH, pw_, PATCH)
    x = x.transpose(0, 2, 4, 1, 3, 5).reshape(BN * n_patch, F)
    patches = x.astype(jnp.bfloat16)           # halve the dominant HBM stream

    # additive block-diagonal mask: sequence b only attends within itself
    seq_id = jnp.repeat(jnp.arange(tb, dtype=jnp.int32), L)
    attn_mask = jnp.where(seq_id[:, None] == seq_id[None, :],
                          jnp.float32(0.0), jnp.float32(-1e30))

    out = pl.pallas_call(
        _dino_fused_kernel,
        out_shape=jax.ShapeDtypeStruct((BN, L, HIDDEN), jnp.float32),
        grid=(grid,),
        in_specs=[
            pl.BlockSpec((tb * n_patch, F), lambda i: (i, 0)),            # patches
            pl.BlockSpec((F, HIDDEN), lambda i: (0, 0)),                  # patch_w
            pl.BlockSpec((L, HIDDEN), lambda i: (0, 0)),                  # clspos
            pl.BlockSpec((M, M), lambda i: (0, 0)),                       # attn mask
            pl.BlockSpec((LAYERS, 2, HIDDEN), lambda i: (0, 0, 0)),       # ln1
            pl.BlockSpec((LAYERS, HIDDEN, 3 * HIDDEN), lambda i: (0, 0, 0)),  # qkv_w
            pl.BlockSpec((LAYERS, 1, 3 * HIDDEN), lambda i: (0, 0, 0)),   # qkv_b
            pl.BlockSpec((LAYERS, HIDDEN, HIDDEN), lambda i: (0, 0, 0)),  # wo
            pl.BlockSpec((LAYERS, 1, HIDDEN), lambda i: (0, 0, 0)),       # bo
            pl.BlockSpec((LAYERS, 2, HIDDEN), lambda i: (0, 0, 0)),       # ln2
            pl.BlockSpec((LAYERS, HIDDEN, MLP), lambda i: (0, 0, 0)),     # w1
            pl.BlockSpec((LAYERS, 1, MLP), lambda i: (0, 0, 0)),          # b1
            pl.BlockSpec((LAYERS, MLP, HIDDEN), lambda i: (0, 0, 0)),     # w2
            pl.BlockSpec((LAYERS, 1, HIDDEN), lambda i: (0, 0, 0)),       # b2
            pl.BlockSpec((2, HIDDEN), lambda i: (0, 0)),                  # lnf
        ],
        out_specs=pl.BlockSpec((tb, L, HIDDEN), lambda i: (i, 0, 0)),
        scratch_shapes=[pltpu.VMEM((M, HIDDEN), jnp.float32)],
        compiler_params=pltpu.CompilerParams(
            dimension_semantics=("parallel",)),   # v7x: split steps over both TCs
    )(patches, pp["patch_w"], pp["clspos"], attn_mask, pp["ln1"],
      pp["qkv_w"], pp["qkv_b"], pp["wo"], pp["bo"], pp["ln2"],
      pp["w1"], pp["b1"], pp["w2"], pp["b2"], pp["lnf"])

    return out.reshape(B, N * L, HIDDEN)        # '(b n) l c -> b (n l) c'


# -------------------------- pure-JAX reference (f32) --------------------------
def reference_forward(images, p):
    B, N, C, H, W = images.shape
    BN = B * N
    ph, pw_ = H // PATCH, W // PATCH
    n_patch = ph * pw_
    L = n_patch + 1
    F = C * PATCH * PATCH

    x = images.reshape(BN, C, H, W)
    x = (x - IMAGENET_MEAN[None, :, None, None]) / IMAGENET_STD[None, :, None, None]
    x = x.reshape(BN, C, ph, PATCH, pw_, PATCH)
    x = x.transpose(0, 2, 4, 1, 3, 5).reshape(BN, n_patch, F)

    h = x @ p["patch_w"] + p["patch_b"]
    cls = jnp.broadcast_to(p["cls"], (BN, 1, HIDDEN))
    h = jnp.concatenate([cls, h], axis=1) + p["pos"]

    def split_heads(t):
        return t.reshape(BN, L, HEADS, HEAD_DIM).transpose(0, 2, 1, 3)

    for lp in p["layers"]:
        x1 = _ln(h, lp["ln1_g"], lp["ln1_b"])
        q = split_heads(x1 @ lp["wq"] + lp["bq"])
        k = split_heads(x1 @ lp["wk"] + lp["bk"])
        v = split_heads(x1 @ lp["wv"] + lp["bv"])
        s = jnp.einsum("bhqd,bhkd->bhqk", q, k) / math.sqrt(HEAD_DIM)
        a = jax.nn.softmax(s, axis=-1)
        ctx = jnp.einsum("bhqk,bhkd->bhqd", a, v)
        ctx = ctx.transpose(0, 2, 1, 3).reshape(BN, L, HIDDEN)
        h = h + (ctx @ lp["wo"] + lp["bo"]) * lp["ls1"]
        x2 = _ln(h, lp["ln2_g"], lp["ln2_b"])
        m = _gelu(x2 @ lp["w1"] + lp["b1"])
        h = h + (m @ lp["w2"] + lp["b2"]) * lp["ls2"]

    h = _ln(h, p["ln_f_g"], p["ln_f_b"])
    return h.reshape(B, N * L, HIDDEN)


# ------------------------------------ main -----------------------------------
if __name__ == "__main__":
    key = jax.random.PRNGKey(0)
    kp, kx = jax.random.split(key)

    B, N, C, H, W = 2, 4, 3, 28, 28            # 28/14 = 2 -> 4 patches per view
    n_patch = (H // PATCH) * (W // PATCH)
    L = n_patch + 1

    raw_params = init_params(kp, seq_len=L)
    params = prepare_params(raw_params)
    images = jax.random.uniform(kx, (B, N, C, H, W), jnp.float32)

    fwd = jax.jit(dino_v2_forward)
    out = jax.block_until_ready(fwd(images, params))

    assert out.shape == (B, N * L, HIDDEN), out.shape
    assert out.dtype == jnp.float32
    assert bool(jnp.all(jnp.isfinite(out)))

    # loose tolerance: kernel uses bf16 MXU operands + approx reciprocal
    ref = reference_forward(images, raw_params)
    max_err = float(jnp.max(jnp.abs(out - ref)))
    assert max_err < 5e-2, max_err

    print("KERNEL_OK")
</pallas_src>

<mosaic_0001>
module attributes {stable_mosaic.version = 11 : i64} {
  func.func @_dino_fused_kernel(%arg0: i32, %arg1: memref<16x588xbf16, #tpu.memory_space<vmem>>, %arg2: memref<588x32xbf16, #tpu.memory_space<vmem>>, %arg3: memref<5x32xf32, #tpu.memory_space<vmem>>, %arg4: memref<20x20xf32, #tpu.memory_space<vmem>>, %arg5: memref<2x2x32xf32, #tpu.memory_space<vmem>>, %arg6: memref<2x32x96xbf16, #tpu.memory_space<vmem>>, %arg7: memref<2x1x96xf32, #tpu.memory_space<vmem>>, %arg8: memref<2x32x32xbf16, #tpu.memory_space<vmem>>, %arg9: memref<2x1x32xf32, #tpu.memory_space<vmem>>, %arg10: memref<2x2x32xf32, #tpu.memory_space<vmem>>, %arg11: memref<2x32x128xbf16, #tpu.memory_space<vmem>>, %arg12: memref<2x1x128xf32, #tpu.memory_space<vmem>>, %arg13: memref<2x128x32xbf16, #tpu.memory_space<vmem>>, %arg14: memref<2x1x32xf32, #tpu.memory_space<vmem>>, %arg15: memref<2x32xf32, #tpu.memory_space<vmem>>, %arg16: memref<4x5x32xf32, #tpu.memory_space<vmem>>, %arg17: memref<20x32xf32, #tpu.memory_space<vmem>>) attributes {dimension_semantics = [#tpu.dimension_semantics<parallel>], iteration_bounds = array<i64: 2>, scalar_prefetch = 0 : i64, scratch_operands = 1 : i64, tpu.core_type = #tpu.core_type<tc>, window_params = [{transform_indices = @transform_0, window_bounds = array<i64: 16, 588>}, {pipeline_mode = #tpu.pipeline_mode<synchronous>, transform_indices = @transform_1, window_bounds = array<i64: 588, 32>}, {pipeline_mode = #tpu.pipeline_mode<synchronous>, transform_indices = @transform_2, window_bounds = array<i64: 5, 32>}, {pipeline_mode = #tpu.pipeline_mode<synchronous>, transform_indices = @transform_3, window_bounds = array<i64: 20, 20>}, {pipeline_mode = #tpu.pipeline_mode<synchronous>, transform_indices = @transform_4, window_bounds = array<i64: 2, 2, 32>}, {pipeline_mode = #tpu.pipeline_mode<synchronous>, transform_indices = @transform_5, window_bounds = array<i64: 2, 32, 96>}, {pipeline_mode = #tpu.pipeline_mode<synchronous>, transform_indices = @transform_6, window_bounds = array<i64: 2, 1, 96>}, {pipeline_mode = #tpu.pipeline_mode<synchronous>, transform_indices = @transform_7, window_bounds = array<i64: 2, 32, 32>}, {pipeline_mode = #tpu.pipeline_mode<synchronous>, transform_indices = @transform_8, window_bounds = array<i64: 2, 1, 32>}, {pipeline_mode = #tpu.pipeline_mode<synchronous>, transform_indices = @transform_9, window_bounds = array<i64: 2, 2, 32>}, {pipeline_mode = #tpu.pipeline_mode<synchronous>, transform_indices = @transform_10, window_bounds = array<i64: 2, 32, 128>}, {pipeline_mode = #tpu.pipeline_mode<synchronous>, transform_indices = @transform_11, window_bounds = array<i64: 2, 1, 128>}, {pipeline_mode = #tpu.pipeline_mode<synchronous>, transform_indices = @transform_12, window_bounds = array<i64: 2, 128, 32>}, {pipeline_mode = #tpu.pipeline_mode<synchronous>, transform_indices = @transform_13, window_bounds = array<i64: 2, 1, 32>}, {pipeline_mode = #tpu.pipeline_mode<synchronous>, transform_indices = @transform_14, window_bounds = array<i64: 2, 32>}, {transform_indices = @transform_15, window_bounds = array<i64: 4, 5, 32>}]} {
    %c0 = arith.constant 0 : index
    %c0_0 = arith.constant 0 : index
    %0 = vector.load %arg1[%c0, %c0_0] : memref<16x588xbf16, #tpu.memory_space<vmem>>, vector<16x588xbf16>
    %c0_1 = arith.constant 0 : index
    %c0_2 = arith.constant 0 : index
    %1 = vector.load %arg2[%c0_1, %c0_2] : memref<588x32xbf16, #tpu.memory_space<vmem>>, vector<588x32xbf16>
    %cst = arith.constant dense<0.000000e+00> : vector<16x32xf32>
    %2 = tpu.matmul %0, %1, %cst {dimension_numbers = #tpu.dot_dimension_numbers<[1], [0], [0], [1], [0, 0, 1, 1], [], []>} : vector<16x588xbf16>, vector<588x32xbf16>, vector<16x32xf32> -> vector<16x32xf32>
    %c0_3 = arith.constant 0 : index
    %c0_4 = arith.constant 0 : index
    %3 = vector.load %arg3[%c0_3, %c0_4] : memref<5x32xf32, #tpu.memory_space<vmem>>, vector<1x32xf32>
    %c1 = arith.constant 1 : index
    %c0_5 = arith.constant 0 : index
    %4 = vector.load %arg3[%c1, %c0_5] : memref<5x32xf32, #tpu.memory_space<vmem>>, vector<4x32xf32>
    %c0_6 = arith.constant 0 : index
    %c0_7 = arith.constant 0 : index
    %5 = vector.load %arg17[%c0_6, %c0_7] : memref<20x32xf32, #tpu.memory_space<vmem>>, vector<1x32xf32>
    tpu.vector_store %arg17[%c0_6, %c0_7], %3 {strides = array<i32>} : memref<20x32xf32, #tpu.memory_space<vmem>>, vector<1x32xf32>,
    %6 = vector.extract_strided_slice %2 {offsets = [0, 0], sizes = [4, 32], strides = [1, 1]} : vector<16x32xf32> to vector<4x32xf32>
    %7 = arith.addf %6, %4 : vector<4x32xf32>
    %c1_8 = arith.constant 1 : index
    %c0_9 = arith.constant 0 : index
    %8 = vector.load %arg17[%c1_8, %c0_9] : memref<20x32xf32, #tpu.memory_space<vmem>>, vector<4x32xf32>
    tpu.vector_store %arg17[%c1_8, %c0_9], %7 {strides = array<i32>} : memref<20x32xf32, #tpu.memory_space<vmem>>, vector<4x32xf32>,
    %c5 = arith.constant 5 : index
    %c0_10 = arith.constant 0 : index
    %9 = vector.load %arg17[%c5, %c0_10] : memref<20x32xf32, #tpu.memory_space<vmem>>, vector<1x32xf32>
    tpu.vector_store %arg17[%c5, %c0_10], %3 {strides = array<i32>} : memref<20x32xf32, #tpu.memory_space<vmem>>, vector<1x32xf32>,
    %10 = vector.extract_strided_slice %2 {offsets = [4, 0], sizes = [4, 32], strides = [1, 1]} : vector<16x32xf32> to vector<4x32xf32>
    %11 = arith.addf %10, %4 : vector<4x32xf32>
    %c6 = arith.constant 6 : index
    %c0_11 = arith.constant 0 : index
    %12 = vector.load %arg17[%c6, %c0_11] : memref<20x32xf32, #tpu.memory_space<vmem>>, vector<4x32xf32>
    tpu.vector_store %arg17[%c6, %c0_11], %11 {strides = array<i32>} : memref<20x32xf32, #tpu.memory_space<vmem>>, vector<4x32xf32>,
    %c10 = arith.constant 10 : index
    %c0_12 = arith.constant 0 : index
    %13 = vector.load %arg17[%c10, %c0_12] : memref<20x32xf32, #tpu.memory_space<vmem>>, vector<1x32xf32>
    tpu.vector_store %arg17[%c10, %c0_12], %3 {strides = array<i32>} : memref<20x32xf32, #tpu.memory_space<vmem>>, vector<1x32xf32>,
    %14 = vector.extract_strided_slice %2 {offsets = [8, 0], sizes = [4, 32], strides = [1, 1]} : vector<16x32xf32> to vector<4x32xf32>
    %15 = arith.addf %14, %4 : vector<4x32xf32>
    %c11 = arith.constant 11 : index
    %c0_13 = arith.constant 0 : index
    %16 = vector.load %arg17[%c11, %c0_13] : memref<20x32xf32, #tpu.memory_space<vmem>>, vector<4x32xf32>
    tpu.vector_store %arg17[%c11, %c0_13], %15 {strides = array<i32>} : memref<20x32xf32, #tpu.memory_space<vmem>>, vector<4x32xf32>,
    %c15 = arith.constant 15 : index
    %c0_14 = arith.constant 0 : index
    %17 = vector.load %arg17[%c15, %c0_14] : memref<20x32xf32, #tpu.memory_space<vmem>>, vector<1x32xf32>
    tpu.vector_store %arg17[%c15, %c0_14], %3 {strides = array<i32>} : memref<20x32xf32, #tpu.memory_space<vmem>>, vector<1x32xf32>,
    %18 = vector.extract_strided_slice %2 {offsets = [12, 0], sizes = [4, 32], strides = [1, 1]} : vector<16x32xf32> to vector<4x32xf32>
    %19 = arith.addf %18, %4 : vector<4x32xf32>
    %c16 = arith.constant 16 : index
    %c0_15 = arith.constant 0 : index
    %20 = vector.load %arg17[%c16, %c0_15] : memref<20x32xf32, #tpu.memory_space<vmem>>, vector<4x32xf32>
    tpu.vector_store %arg17[%c16, %c0_15], %19 {strides = array<i32>} : memref<20x32xf32, #tpu.memory_space<vmem>>, vector<4x32xf32>,
    %c0_16 = arith.constant 0 : index
    %c0_17 = arith.constant 0 : index
    %21 = vector.load %arg17[%c0_16, %c0_17] : memref<20x32xf32, #tpu.memory_space<vmem>>, vector<20x32xf32>
    %c0_18 = arith.constant 0 : index
    %c0_19 = arith.constant 0 : index
    %c0_20 = arith.constant 0 : index
    %22 = vector.load %arg5[%c0_18, %c0_19, %c0_20] : memref<2x2x32xf32, #tpu.memory_space<vmem>>, vector<1x2x32xf32>
    %23 = vector.shape_cast %22 : vector<1x2x32xf32> to vector<2x32xf32>
    %24 = vector.extract_strided_slice %23 {offsets = [0, 0], sizes = [1, 32], strides = [1, 1]} : vector<2x32xf32> to vector<1x32xf32>
    %25 = vector.extract_strided_slice %23 {offsets = [1, 0], sizes = [1, 32], strides = [1, 1]} : vector<2x32xf32> to vector<1x32xf32>
    %cst_21 = arith.constant dense<0.000000e+00> : vector<20xf32>
    %26 = vector.multi_reduction <add>, %21, %cst_21 [1] : vector<20x32xf32> to vector<20xf32>
    %27 = vector.shape_cast %26 : vector<20xf32> to vector<20x1xf32>
    %cst_22 = arith.constant 3.200000e+01 : f32
    %28 = vector.broadcast %cst_22 : f32 to vector<20x1xf32>
    %29 = arith.divf %27, %28 : vector<20x1xf32>
    %30 = vector.broadcast %29 : vector<20x1xf32> to vector<20x32xf32>
    %31 = arith.subf %21, %30 : vector<20x32xf32>
    %32 = arith.mulf %31, %31 : vector<20x32xf32>
    %cst_23 = arith.constant dense<0.000000e+00> : vector<20xf32>
    %33 = vector.multi_reduction <add>, %32, %cst_23 [1] : vector<20x32xf32> to vector<20xf32>
    %34 = vector.shape_cast %33 : vector<20xf32> to vector<20x1xf32>
    %cst_24 = arith.constant 3.200000e+01 : f32
    %35 = vector.broadcast %cst_24 : f32 to vector<20x1xf32>
    %36 = arith.divf %34, %35 : vector<20x1xf32>
    %37 = vector.broadcast %29 : vector<20x1xf32> to vector<20x32xf32>
    %38 = arith.subf %21, %37 : vector<20x32xf32>
    %cst_25 = arith.constant 9.99999997E-7 : f32
    %39 = vector.broadcast %cst_25 : f32 to vector<20x1xf32>
    %40 = arith.addf %36, %39 : vector<20x1xf32>
    %41 = math.rsqrt %40 : vector<20x1xf32>
    %42 = vector.broadcast %41 : vector<20x1xf32> to vector<20x32xf32>
    %43 = arith.mulf %38, %42 : vector<20x32xf32>
    %44 = vector.broadcast %24 : vector<1x32xf32> to vector<20x32xf32>
    %45 = arith.mulf %43, %44 : vector<20x32xf32>
    %46 = vector.broadcast %25 : vector<1x32xf32> to vector<20x32xf32>
    %47 = arith.addf %45, %46 : vector<20x32xf32>
    %48 = arith.truncf %47 : vector<20x32xf32> to vector<20x32xbf16>
    %c0_26 = arith.constant 0 : index
    %c0_27 = arith.constant 0 : index
    %c0_28 = arith.constant 0 : index
    %49 = vector.load %arg6[%c0_26, %c0_27, %c0_28] : memref<2x32x96xbf16, #tpu.memory_space<vmem>>, vector<1x32x96xbf16>
    %50 = vector.shape_cast %49 : vector<1x32x96xbf16> to vector<32x96xbf16>
    %cst_29 = arith.constant dense<0.000000e+00> : vector<20x96xf32>
    %51 = tpu.matmul %48, %50, %cst_29 {dimension_numbers = #tpu.dot_dimension_numbers<[1], [0], [0], [1], [0, 0, 1, 1], [], []>} : vector<20x32xbf16>, vector<32x96xbf16>, vector<20x96xf32> -> vector<20x96xf32>
    %c0_30 = arith.constant 0 : index
    %c0_31 = arith.constant 0 : index
    %c0_32 = arith.constant 0 : index
    %52 = vector.load %arg7[%c0_30, %c0_31, %c0_32] : memref<2x1x96xf32, #tpu.memory_space<vmem>>, vector<1x1x96xf32>
    %53 = vector.shape_cast %52 : vector<1x1x96xf32> to vector<1x96xf32>
    %54 = vector.broadcast %53 : vector<1x96xf32> to vector<20x96xf32>
    %55 = arith.addf %51, %54 : vector<20x96xf32>
    %56 = vector.extract_strided_slice %55 {offsets = [0, 0], sizes = [20, 16], strides = [1, 1]} : vector<20x96xf32> to vector<20x16xf32>
    %57 = vector.extract_strided_slice %55 {offsets = [0, 32], sizes = [20, 16], strides = [1, 1]} : vector<20x96xf32> to vector<20x16xf32>
    %58 = vector.extract_strided_slice %55 {offsets = [0, 64], sizes = [20, 16], strides = [1, 1]} : vector<20x96xf32> to vector<20x16xf32>
    %cst_33 = arith.constant dense<0.000000e+00> : vector<20x20xf32>
    %59 = tpu.matmul %56, %57, %cst_33 {dimension_numbers = #tpu.dot_dimension_numbers<[1], [1], [0], [0], [0, 0, 1, 0], [], []>} : vector<20x16xf32>, vector<20x16xf32>, vector<20x20xf32> -> vector<20x20xf32>
    %c0_34 = arith.constant 0 : index
    %c0_35 = arith.constant 0 : index
    %60 = vector.load %arg4[%c0_34, %c0_35] : memref<20x20xf32, #tpu.memory_space<vmem>>, vector<20x20xf32>
    %61 = arith.addf %59, %60 : vector<20x20xf32>
    %cst_36 = arith.constant dense<0xFF800000> : vector<20xf32>
    %62 = vector.multi_reduction <maximumf>, %61, %cst_36 [1] : vector<20x20xf32> to vector<20xf32>
    %63 = vector.shape_cast %62 : vector<20xf32> to vector<20x1xf32>
    %64 = vector.broadcast %63 : vector<20x1xf32> to vector<20x20xf32>
    %65 = arith.subf %61, %64 : vector<20x20xf32>
    %66 = math.exp %65 : vector<20x20xf32>
    %cst_37 = arith.constant dense<0.000000e+00> : vector<20xf32>
    %67 = vector.multi_reduction <add>, %66, %cst_37 [1] : vector<20x20xf32> to vector<20xf32>
    %68 = vector.shape_cast %67 : vector<20xf32> to vector<20x1xf32>
    %69 = tpu.reciprocal %68 {approx = true} : vector<20x1xf32> -> vector<20x1xf32>
    %70 = vector.broadcast %69 : vector<20x1xf32> to vector<20x20xf32>
    %71 = arith.mulf %66, %70 : vector<20x20xf32>
    %cst_38 = arith.constant dense<0.000000e+00> : vector<20x16xf32>
    %72 = tpu.matmul %71, %58, %cst_38 {dimension_numbers = #tpu.dot_dimension_numbers<[1], [0], [0], [1], [0, 0, 1, 1], [], []>} : vector<20x20xf32>, vector<20x16xf32>, vector<20x16xf32> -> vector<20x16xf32>
    %c0_39 = arith.constant 0 : index
    %c0_40 = arith.constant 0 : index
    %73 = vector.load %arg17[%c0_39, %c0_40] : memref<20x32xf32, #tpu.memory_space<vmem>>, vector<20x16xf32>
    tpu.vector_store %arg17[%c0_39, %c0_40], %72 {strides = array<i32>} : memref<20x32xf32, #tpu.memory_space<vmem>>, vector<20x16xf32>,
    %74 = vector.extract_strided_slice %55 {offsets = [0, 16], sizes = [20, 16], strides = [1, 1]} : vector<20x96xf32> to vector<20x16xf32>
    %75 = vector.extract_strided_slice %55 {offsets = [0, 48], sizes = [20, 16], strides = [1, 1]} : vector<20x96xf32> to vector<20x16xf32>
    %76 = vector.extract_strided_slice %55 {offsets = [0, 80], sizes = [20, 16], strides = [1, 1]} : vector<20x96xf32> to vector<20x16xf32>
    %cst_41 = arith.constant dense<0.000000e+00> : vector<20x20xf32>
    %77 = tpu.matmul %74, %75, %cst_41 {dimension_numbers = #tpu.dot_dimension_numbers<[1], [1], [0], [0], [0, 0, 1, 0], [], []>} : vector<20x16xf32>, vector<20x16xf32>, vector<20x20xf32> -> vector<20x20xf32>
    %c0_42 = arith.constant 0 : index
    %c0_43 = arith.constant 0 : index
    %78 = vector.load %arg4[%c0_42, %c0_43] : memref<20x20xf32, #tpu.memory_space<vmem>>, vector<20x20xf32>
    %79 = arith.addf %77, %78 : vector<20x20xf32>
    %cst_44 = arith.constant dense<0xFF800000> : vector<20xf32>
    %80 = vector.multi_reduction <maximumf>, %79, %cst_44 [1] : vector<20x20xf32> to vector<20xf32>
    %81 = vector.shape_cast %80 : vector<20xf32> to vector<20x1xf32>
    %82 = vector.broadcast %81 : vector<20x1xf32> to vector<20x20xf32>
    %83 = arith.subf %79, %82 : vector<20x20xf32>
    %84 = math.exp %83 : vector<20x20xf32>
    %cst_45 = arith.constant dense<0.000000e+00> : vector<20xf32>
    %85 = vector.multi_reduction <add>, %84, %cst_45 [1] : vector<20x20xf32> to vector<20xf32>
    %86 = vector.shape_cast %85 : vector<20xf32> to vector<20x1xf32>
    %87 = tpu.reciprocal %86 {approx = true} : vector<20x1xf32> -> vector<20x1xf32>
    %88 = vector.broadcast %87 : vector<20x1xf32> to vector<20x20xf32>
    %89 = arith.mulf %84, %88 : vector<20x20xf32>
    %cst_46 = arith.constant dense<0.000000e+00> : vector<20x16xf32>
    %90 = tpu.matmul %89, %76, %cst_46 {dimension_numbers = #tpu.dot_dimension_numbers<[1], [0], [0], [1], [0, 0, 1, 1], [], []>} : vector<20x20xf32>, vector<20x16xf32>, vector<20x16xf32> -> vector<20x16xf32>
    %c0_47 = arith.constant 0 : index
    %c16_48 = arith.constant 16 : index
    %91 = vector.load %arg17[%c0_47, %c16_48] : memref<20x32xf32, #tpu.memory_space<vmem>>, vector<20x16xf32>
    tpu.vector_store %arg17[%c0_47, %c16_48], %90 {strides = array<i32>} : memref<20x32xf32, #tpu.memory_space<vmem>>, vector<20x16xf32>,
    %c0_49 = arith.constant 0 : index
    %c0_50 = arith.constant 0 : index
    %92 = vector.load %arg17[%c0_49, %c0_50] : memref<20x32xf32, #tpu.memory_space<vmem>>, vector<20x32xf32>
    %93 = arith.truncf %92 : vector<20x32xf32> to vector<20x32xbf16>
    %c0_51 = arith.constant 0 : index
    %c0_52 = arith.constant 0 : index
    %c0_53 = arith.constant 0 : index
    %94 = vector.load %arg8[%c0_51, %c0_52, %c0_53] : memref<2x32x32xbf16, #tpu.memory_space<vmem>>, vector<1x32x32xbf16>
    %95 = vector.shape_cast %94 : vector<1x32x32xbf16> to vector<32x32xbf16>
    %cst_54 = arith.constant dense<0.000000e+00> : vector<20x32xf32>
    %96 = tpu.matmul %93, %95, %cst_54 {dimension_numbers = #tpu.dot_dimension_numbers<[1], [0], [0], [1], [0, 0, 1, 1], [], []>} : vector<20x32xbf16>, vector<32x32xbf16>, vector<20x32xf32> -> vector<20x32xf32>
    %97 = arith.addf %21, %96 : vector<20x32xf32>
    %c0_55 = arith.constant 0 : index
    %c0_56 = arith.constant 0 : index
    %c0_57 = arith.constant 0 : index
    %98 = vector.load %arg9[%c0_55, %c0_56, %c0_57] : memref<2x1x32xf32, #tpu.memory_space<vmem>>, vector<1x1x32xf32>
    %99 = vector.shape_cast %98 : vector<1x1x32xf32> to vector<1x32xf32>
    %100 = vector.broadcast %99 : vector<1x32xf32> to vector<20x32xf32>
    %101 = arith.addf %97, %100 : vector<20x32xf32>
    %c0_58 = arith.constant 0 : index
    %c0_59 = arith.constant 0 : index
    %c0_60 = arith.constant 0 : index
    %102 = vector.load %arg10[%c0_58, %c0_59, %c0_60] : memref<2x2x32xf32, #tpu.memory_space<vmem>>, vector<1x2x32xf32>
    %103 = vector.shape_cast %102 : vector<1x2x32xf32> to vector<2x32xf32>
    %104 = vector.extract_strided_slice %103 {offsets = [0, 0], sizes = [1, 32], strides = [1, 1]} : vector<2x32xf32> to vector<1x32xf32>
    %105 = vector.extract_strided_slice %103 {offsets = [1, 0], sizes = [1, 32], strides = [1, 1]} : vector<2x32xf32> to vector<1x32xf32>
    %cst_61 = arith.constant dense<0.000000e+00> : vector<20xf32>
    %106 = vector.multi_reduction <add>, %101, %cst_61 [1] : vector<20x32xf32> to vector<20xf32>
    %107 = vector.shape_cast %106 : vector<20xf32> to vector<20x1xf32>
    %cst_62 = arith.constant 3.200000e+01 : f32
    %108 = vector.broadcast %cst_62 : f32 to vector<20x1xf32>
    %109 = arith.divf %107, %108 : vector<20x1xf32>
    %110 = vector.broadcast %109 : vector<20x1xf32> to vector<20x32xf32>
    %111 = arith.subf %101, %110 : vector<20x32xf32>
    %112 = arith.mulf %111, %111 : vector<20x32xf32>
    %cst_63 = arith.constant dense<0.000000e+00> : vector<20xf32>
    %113 = vector.multi_reduction <add>, %112, %cst_63 [1] : vector<20x32xf32> to vector<20xf32>
    %114 = vector.shape_cast %113 : vector<20xf32> to vector<20x1xf32>
    %cst_64 = arith.constant 3.200000e+01 : f32
    %115 = vector.broadcast %cst_64 : f32 to vector<20x1xf32>
    %116 = arith.divf %114, %115 : vector<20x1xf32>
    %117 = vector.broadcast %109 : vector<20x1xf32> to vector<20x32xf32>
    %118 = arith.subf %101, %117 : vector<20x32xf32>
    %cst_65 = arith.constant 9.99999997E-7 : f32
    %119 = vector.broadcast %cst_65 : f32 to vector<20x1xf32>
    %120 = arith.addf %116, %119 : vector<20x1xf32>
    %121 = math.rsqrt %120 : vector<20x1xf32>
    %122 = vector.broadcast %121 : vector<20x1xf32> to vector<20x32xf32>
    %123 = arith.mulf %118, %122 : vector<20x32xf32>
    %124 = vector.broadcast %104 : vector<1x32xf32> to vector<20x32xf32>
    %125 = arith.mulf %123, %124 : vector<20x32xf32>
    %126 = vector.broadcast %105 : vector<1x32xf32> to vector<20x32xf32>
    %127 = arith.addf %125, %126 : vector<20x32xf32>
    %128 = arith.truncf %127 : vector<20x32xf32> to vector<20x32xbf16>
    %c0_66 = arith.constant 0 : index
    %c0_67 = arith.constant 0 : index
    %c0_68 = arith.constant 0 : index
    %129 = vector.load %arg11[%c0_66, %c0_67, %c0_68] : memref<2x32x128xbf16, #tpu.memory_space<vmem>>, vector<1x32x128xbf16>
    %130 = vector.shape_cast %129 : vector<1x32x128xbf16> to vector<32x128xbf16>
    %cst_69 = arith.constant dense<0.000000e+00> : vector<20x128xf32>
    %131 = tpu.matmul %128, %130, %cst_69 {dimension_numbers = #tpu.dot_dimension_numbers<[1], [0], [0], [1], [0, 0, 1, 1], [], []>} : vector<20x32xbf16>, vector<32x128xbf16>, vector<20x128xf32> -> vector<20x128xf32>
    %c0_70 = arith.constant 0 : index
    %c0_71 = arith.constant 0 : index
    %c0_72 = arith.constant 0 : index
    %132 = vector.load %arg12[%c0_70, %c0_71, %c0_72] : memref<2x1x128xf32, #tpu.memory_space<vmem>>, vector<1x1x128xf32>
    %133 = vector.shape_cast %132 : vector<1x1x128xf32> to vector<1x128xf32>
    %134 = vector.broadcast %133 : vector<1x128xf32> to vector<20x128xf32>
    %135 = arith.addf %131, %134 : vector<20x128xf32>
    %cst_73 = arith.constant 5.000000e-01 : f32
    %136 = vector.broadcast %cst_73 : f32 to vector<20x128xf32>
    %137 = arith.mulf %136, %135 : vector<20x128xf32>
    %cst_74 = arith.constant 4.471500e-02 : f32
    %138 = vector.broadcast %cst_74 : f32 to vector<20x128xf32>
    %139 = arith.mulf %138, %135 : vector<20x128xf32>
    %140 = arith.mulf %139, %135 : vector<20x128xf32>
    %141 = arith.mulf %140, %135 : vector<20x128xf32>
    %142 = arith.addf %135, %141 : vector<20x128xf32>
    %cst_75 = arith.constant 0.797884583 : f32
    %143 = vector.broadcast %cst_75 : f32 to vector<20x128xf32>
    %144 = arith.mulf %143, %142 : vector<20x128xf32>
    %145 = math.tanh %144 : vector<20x128xf32>
    %cst_76 = arith.constant 1.000000e+00 : f32
    %146 = vector.broadcast %cst_76 : f32 to vector<20x128xf32>
    %147 = arith.addf %146, %145 : vector<20x128xf32>
    %148 = arith.mulf %137, %147 : vector<20x128xf32>
    %149 = arith.truncf %148 : vector<20x128xf32> to vector<20x128xbf16>
    %c0_77 = arith.constant 0 : index
    %c0_78 = arith.constant 0 : index
    %c0_79 = arith.constant 0 : index
    %150 = vector.load %arg13[%c0_77, %c0_78, %c0_79] : memref<2x128x32xbf16, #tpu.memory_space<vmem>>, vector<1x128x32xbf16>
    %151 = vector.shape_cast %150 : vector<1x128x32xbf16> to vector<128x32xbf16>
    %cst_80 = arith.constant dense<0.000000e+00> : vector<20x32xf32>
    %152 = tpu.matmul %149, %151, %cst_80 {dimension_numbers = #tpu.dot_dimension_numbers<[1], [0], [0], [1], [0, 0, 1, 1], [], []>} : vector<20x128xbf16>, vector<128x32xbf16>, vector<20x32xf32> -> vector<20x32xf32>
    %153 = arith.addf %101, %152 : vector<20x32xf32>
    %c0_81 = arith.constant 0 : index
    %c0_82 = arith.constant 0 : index
    %c0_83 = arith.constant 0 : index
    %154 = vector.load %arg14[%c0_81, %c0_82, %c0_83] : memref<2x1x32xf32, #tpu.memory_space<vmem>>, vector<1x1x32xf32>
    %155 = vector.shape_cast %154 : vector<1x1x32xf32> to vector<1x32xf32>
    %156 = vector.broadcast %155 : vector<1x32xf32> to vector<20x32xf32>
    %157 = arith.addf %153, %156 : vector<20x32xf32>
    %c1_84 = arith.constant 1 : index
    %c0_85 = arith.constant 0 : index
    %c0_86 = arith.constant 0 : index
    %158 = vector.load %arg5[%c1_84, %c0_85, %c0_86] : memref<2x2x32xf32, #tpu.memory_space<vmem>>, vector<1x2x32xf32>
    %159 = vector.shape_cast %158 : vector<1x2x32xf32> to vector<2x32xf32>
    %160 = vector.extract_strided_slice %159 {offsets = [0, 0], sizes = [1, 32], strides = [1, 1]} : vector<2x32xf32> to vector<1x32xf32>
    %161 = vector.extract_strided_slice %159 {offsets = [1, 0], sizes = [1, 32], strides = [1, 1]} : vector<2x32xf32> to vector<1x32xf32>
    %cst_87 = arith.constant dense<0.000000e+00> : vector<20xf32>
    %162 = vector.multi_reduction <add>, %157, %cst_87 [1] : vector<20x32xf32> to vector<20xf32>
    %163 = vector.shape_cast %162 : vector<20xf32> to vector<20x1xf32>
    %cst_88 = arith.constant 3.200000e+01 : f32
    %164 = vector.broadcast %cst_88 : f32 to vector<20x1xf32>
    %165 = arith.divf %163, %164 : vector<20x1xf32>
    %166 = vector.broadcast %165 : vector<20x1xf32> to vector<20x32xf32>
    %167 = arith.subf %157, %166 : vector<20x32xf32>
    %168 = arith.mulf %167, %167 : vector<20x32xf32>
    %cst_89 = arith.constant dense<0.000000e+00> : vector<20xf32>
    %169 = vector.multi_reduction <add>, %168, %cst_89 [1] : vector<20x32xf32> to vector<20xf32>
    %170 = vector.shape_cast %169 : vector<20xf32> to vector<20x1xf32>
    %cst_90 = arith.constant 3.200000e+01 : f32
    %171 = vector.broadcast %cst_90 : f32 to vector<20x1xf32>
    %172 = arith.divf %170, %171 : vector<20x1xf32>
    %173 = vector.broadcast %165 : vector<20x1xf32> to vector<20x32xf32>
    %174 = arith.subf %157, %173 : vector<20x32xf32>
    %cst_91 = arith.constant 9.99999997E-7 : f32
    %175 = vector.broadcast %cst_91 : f32 to vector<20x1xf32>
    %176 = arith.addf %172, %175 : vector<20x1xf32>
    %177 = math.rsqrt %176 : vector<20x1xf32>
    %178 = vector.broadcast %177 : vector<20x1xf32> to vector<20x32xf32>
    %179 = arith.mulf %174, %178 : vector<20x32xf32>
    %180 = vector.broadcast %160 : vector<1x32xf32> to vector<20x32xf32>
    %181 = arith.mulf %179, %180 : vector<20x32xf32>
    %182 = vector.broadcast %161 : vector<1x32xf32> to vector<20x32xf32>
    %183 = arith.addf %181, %182 : vector<20x32xf32>
    %184 = arith.truncf %183 : vector<20x32xf32> to vector<20x32xbf16>
    %c1_92 = arith.constant 1 : index
    %c0_93 = arith.constant 0 : index
    %c0_94 = arith.constant 0 : index
    %185 = vector.load %arg6[%c1_92, %c0_93, %c0_94] : memref<2x32x96xbf16, #tpu.memory_space<vmem>>, vector<1x32x96xbf16>
    %186 = vector.shape_cast %185 : vector<1x32x96xbf16> to vector<32x96xbf16>
    %cst_95 = arith.constant dense<0.000000e+00> : vector<20x96xf32>
    %187 = tpu.matmul %184, %186, %cst_95 {dimension_numbers = #tpu.dot_dimension_numbers<[1], [0], [0], [1], [0, 0, 1, 1], [], []>} : vector<20x32xbf16>, vector<32x96xbf16>, vector<20x96xf32> -> vector<20x96xf32>
    %c1_96 = arith.constant 1 : index
    %c0_97 = arith.constant 0 : index
    %c0_98 = arith.constant 0 : index
    %188 = vector.load %arg7[%c1_96, %c0_97, %c0_98] : memref<2x1x96xf32, #tpu.memory_space<vmem>>, vector<1x1x96xf32>
    %189 = vector.shape_cast %188 : vector<1x1x96xf32> to vector<1x96xf32>
    %190 = vector.broadcast %189 : vector<1x96xf32> to vector<20x96xf32>
    %191 = arith.addf %187, %190 : vector<20x96xf32>
    %192 = vector.extract_strided_slice %191 {offsets = [0, 0], sizes = [20, 16], strides = [1, 1]} : vector<20x96xf32> to vector<20x16xf32>
    %193 = vector.extract_strided_slice %191 {offsets = [0, 32], sizes = [20, 16], strides = [1, 1]} : vector<20x96xf32> to vector<20x16xf32>
    %194 = vector.extract_strided_slice %191 {offsets = [0, 64], sizes = [20, 16], strides = [1, 1]} : vector<20x96xf32> to vector<20x16xf32>
    %cst_99 = arith.constant dense<0.000000e+00> : vector<20x20xf32>
    %195 = tpu.matmul %192, %193, %cst_99 {dimension_numbers = #tpu.dot_dimension_numbers<[1], [1], [0], [0], [0, 0, 1, 0], [], []>} : vector<20x16xf32>, vector<20x16xf32>, vector<20x20xf32> -> vector<20x20xf32>
    %c0_100 = arith.constant 0 : index
    %c0_101 = arith.constant 0 : index
    %196 = vector.load %arg4[%c0_100, %c0_101] : memref<20x20xf32, #tpu.memory_space<vmem>>, vector<20x20xf32>
    %197 = arith.addf %195, %196 : vector<20x20xf32>
    %cst_102 = arith.constant dense<0xFF800000> : vector<20xf32>
    %198 = vector.multi_reduction <maximumf>, %197, %cst_102 [1] : vector<20x20xf32> to vector<20xf32>
    %199 = vector.shape_cast %198 : vector<20xf32> to vector<20x1xf32>
    %200 = vector.broadcast %199 : vector<20x1xf32> to vector<20x20xf32>
    %201 = arith.subf %197, %200 : vector<20x20xf32>
    %202 = math.exp %201 : vector<20x20xf32>
    %cst_103 = arith.constant dense<0.000000e+00> : vector<20xf32>
    %203 = vector.multi_reduction <add>, %202, %cst_103 [1] : vector<20x20xf32> to vector<20xf32>
    %204 = vector.shape_cast %203 : vector<20xf32> to vector<20x1xf32>
    %205 = tpu.reciprocal %204 {approx = true} : vector<20x1xf32> -> vector<20x1xf32>
    %206 = vector.broadcast %205 : vector<20x1xf32> to vector<20x20xf32>
    %207 = arith.mulf %202, %206 : vector<20x20xf32>
    %cst_104 = arith.constant dense<0.000000e+00> : vector<20x16xf32>
    %208 = tpu.matmul %207, %194, %cst_104 {dimension_numbers = #tpu.dot_dimension_numbers<[1], [0], [0], [1], [0, 0, 1, 1], [], []>} : vector<20x20xf32>, vector<20x16xf32>, vector<20x16xf32> -> vector<20x16xf32>
    %c0_105 = arith.constant 0 : index
    %c0_106 = arith.constant 0 : index
    %209 = vector.load %arg17[%c0_105, %c0_106] : memref<20x32xf32, #tpu.memory_space<vmem>>, vector<20x16xf32>
    tpu.vector_store %arg17[%c0_105, %c0_106], %208 {strides = array<i32>} : memref<20x32xf32, #tpu.memory_space<vmem>>, vector<20x16xf32>,
    %210 = vector.extract_strided_slice %191 {offsets = [0, 16], sizes = [20, 16], strides = [1, 1]} : vector<20x96xf32> to vector<20x16xf32>
    %211 = vector.extract_strided_slice %191 {offsets = [0, 48], sizes = [20, 16], strides = [1, 1]} : vector<20x96xf32> to vector<20x16xf32>
    %212 = vector.extract_strided_slice %191 {offsets = [0, 80], sizes = [20, 16], strides = [1, 1]} : vector<20x96xf32> to vector<20x16xf32>
    %cst_107 = arith.constant dense<0.000000e+00> : vector<20x20xf32>
    %213 = tpu.matmul %210, %211, %cst_107 {dimension_numbers = #tpu.dot_dimension_numbers<[1], [1], [0], [0], [0, 0, 1, 0], [], []>} : vector<20x16xf32>, vector<20x16xf32>, vector<20x20xf32> -> vector<20x20xf32>
    %c0_108 = arith.constant 0 : index
    %c0_109 = arith.constant 0 : index
    %214 = vector.load %arg4[%c0_108, %c0_109] : memref<20x20xf32, #tpu.memory_space<vmem>>, vector<20x20xf32>
    %215 = arith.addf %213, %214 : vector<20x20xf32>
    %cst_110 = arith.constant dense<0xFF800000> : vector<20xf32>
    %216 = vector.multi_reduction <maximumf>, %215, %cst_110 [1] : vector<20x20xf32> to vector<20xf32>
    %217 = vector.shape_cast %216 : vector<20xf32> to vector<20x1xf32>
    %218 = vector.broadcast %217 : vector<20x1xf32> to vector<20x20xf32>
    %219 = arith.subf %215, %218 : vector<20x20xf32>
    %220 = math.exp %219 : vector<20x20xf32>
    %cst_111 = arith.constant dense<0.000000e+00> : vector<20xf32>
    %221 = vector.multi_reduction <add>, %220, %cst_111 [1] : vector<20x20xf32> to vector<20xf32>
    %222 = vector.shape_cast %221 : vector<20xf32> to vector<20x1xf32>
    %223 = tpu.reciprocal %222 {approx = true} : vector<20x1xf32> -> vector<20x1xf32>
    %224 = vector.broadcast %223 : vector<20x1xf32> to vector<20x20xf32>
    %225 = arith.mulf %220, %224 : vector<20x20xf32>
    %cst_112 = arith.constant dense<0.000000e+00> : vector<20x16xf32>
    %226 = tpu.matmul %225, %212, %cst_112 {dimension_numbers = #tpu.dot_dimension_numbers<[1], [0], [0], [1], [0, 0, 1, 1], [], []>} : vector<20x20xf32>, vector<20x16xf32>, vector<20x16xf32> -> vector<20x16xf32>
    %c0_113 = arith.constant 0 : index
    %c16_114 = arith.constant 16 : index
    %227 = vector.load %arg17[%c0_113, %c16_114] : memref<20x32xf32, #tpu.memory_space<vmem>>, vector<20x16xf32>
    tpu.vector_store %arg17[%c0_113, %c16_114], %226 {strides = array<i32>} : memref<20x32xf32, #tpu.memory_space<vmem>>, vector<20x16xf32>,
    %c0_115 = arith.constant 0 : index
    %c0_116 = arith.constant 0 : index
    %228 = vector.load %arg17[%c0_115, %c0_116] : memref<20x32xf32, #tpu.memory_space<vmem>>, vector<20x32xf32>
    %229 = arith.truncf %228 : vector<20x32xf32> to vector<20x32xbf16>
    %c1_117 = arith.constant 1 : index
    %c0_118 = arith.constant 0 : index
    %c0_119 = arith.constant 0 : index
    %230 = vector.load %arg8[%c1_117, %c0_118, %c0_119] : memref<2x32x32xbf16, #tpu.memory_space<vmem>>, vector<1x32x32xbf16>
    %231 = vector.shape_cast %230 : vector<1x32x32xbf16> to vector<32x32xbf16>
    %cst_120 = arith.constant dense<0.000000e+00> : vector<20x32xf32>
    %232 = tpu.matmul %229, %231, %cst_120 {dimension_numbers = #tpu.dot_dimension_numbers<[1], [0], [0], [1], [0, 0, 1, 1], [], []>} : vector<20x32xbf16>, vector<32x32xbf16>, vector<20x32xf32> -> vector<20x32xf32>
    %233 = arith.addf %157, %232 : vector<20x32xf32>
    %c1_121 = arith.constant 1 : index
    %c0_122 = arith.constant 0 : index
    %c0_123 = arith.constant 0 : index
    %234 = vector.load %arg9[%c1_121, %c0_122, %c0_123] : memref<2x1x32xf32, #tpu.memory_space<vmem>>, vector<1x1x32xf32>
    %235 = vector.shape_cast %234 : vector<1x1x32xf32> to vector<1x32xf32>
    %236 = vector.broadcast %235 : vector<1x32xf32> to vector<20x32xf32>
    %237 = arith.addf %233, %236 : vector<20x32xf32>
    %c1_124 = arith.constant 1 : index
    %c0_125 = arith.constant 0 : index
    %c0_126 = arith.constant 0 : index
    %238 = vector.load %arg10[%c1_124, %c0_125, %c0_126] : memref<2x2x32xf32, #tpu.memory_space<vmem>>, vector<1x2x32xf32>
    %239 = vector.shape_cast %238 : vector<1x2x32xf32> to vector<2x32xf32>
    %240 = vector.extract_strided_slice %239 {offsets = [0, 0], sizes = [1, 32], strides = [1, 1]} : vector<2x32xf32> to vector<1x32xf32>
    %241 = vector.extract_strided_slice %239 {offsets = [1, 0], sizes = [1, 32], strides = [1, 1]} : vector<2x32xf32> to vector<1x32xf32>
    %cst_127 = arith.constant dense<0.000000e+00> : vector<20xf32>
    %242 = vector.multi_reduction <add>, %237, %cst_127 [1] : vector<20x32xf32> to vector<20xf32>
    %243 = vector.shape_cast %242 : vector<20xf32> to vector<20x1xf32>
    %cst_128 = arith.constant 3.200000e+01 : f32
    %244 = vector.broadcast %cst_128 : f32 to vector<20x1xf32>
    %245 = arith.divf %243, %244 : vector<20x1xf32>
    %246 = vector.broadcast %245 : vector<20x1xf32> to vector<20x32xf32>
    %247 = arith.subf %237, %246 : vector<20x32xf32>
    %248 = arith.mulf %247, %247 : vector<20x32xf32>
    %cst_129 = arith.constant dense<0.000000e+00> : vector<20xf32>
    %249 = vector.multi_reduction <add>, %248, %cst_129 [1] : vector<20x32xf32> to vector<20xf32>
    %250 = vector.shape_cast %249 : vector<20xf32> to vector<20x1xf32>
    %cst_130 = arith.constant 3.200000e+01 : f32
    %251 = vector.broadcast %cst_130 : f32 to vector<20x1xf32>
    %252 = arith.divf %250, %251 : vector<20x1xf32>
    %253 = vector.broadcast %245 : vector<20x1xf32> to vector<20x32xf32>
    %254 = arith.subf %237, %253 : vector<20x32xf32>
    %cst_131 = arith.constant 9.99999997E-7 : f32
    %255 = vector.broadcast %cst_131 : f32 to vector<20x1xf32>
    %256 = arith.addf %252, %255 : vector<20x1xf32>
    %257 = math.rsqrt %256 : vector<20x1xf32>
    %258 = vector.broadcast %257 : vector<20x1xf32> to vector<20x32xf32>
    %259 = arith.mulf %254, %258 : vector<20x32xf32>
    %260 = vector.broadcast %240 : vector<1x32xf32> to vector<20x32xf32>
    %261 = arith.mulf %259, %260 : vector<20x32xf32>
    %262 = vector.broadcast %241 : vector<1x32xf32> to vector<20x32xf32>
    %263 = arith.addf %261, %262 : vector<20x32xf32>
    %264 = arith.truncf %263 : vector<20x32xf32> to vector<20x32xbf16>
    %c1_132 = arith.constant 1 : index
    %c0_133 = arith.constant 0 : index
    %c0_134 = arith.constant 0 : index
    %265 = vector.load %arg11[%c1_132, %c0_133, %c0_134] : memref<2x32x128xbf16, #tpu.memory_space<vmem>>, vector<1x32x128xbf16>
    %266 = vector.shape_cast %265 : vector<1x32x128xbf16> to vector<32x128xbf16>
    %cst_135 = arith.constant dense<0.000000e+00> : vector<20x128xf32>
    %267 = tpu.matmul %264, %266, %cst_135 {dimension_numbers = #tpu.dot_dimension_numbers<[1], [0], [0], [1], [0, 0, 1, 1], [], []>} : vector<20x32xbf16>, vector<32x128xbf16>, vector<20x128xf32> -> vector<20x128xf32>
    %c1_136 = arith.constant 1 : index
    %c0_137 = arith.constant 0 : index
    %c0_138 = arith.constant 0 : index
    %268 = vector.load %arg12[%c1_136, %c0_137, %c0_138] : memref<2x1x128xf32, #tpu.memory_space<vmem>>, vector<1x1x128xf32>
    %269 = vector.shape_cast %268 : vector<1x1x128xf32> to vector<1x128xf32>
    %270 = vector.broadcast %269 : vector<1x128xf32> to vector<20x128xf32>
    %271 = arith.addf %267, %270 : vector<20x128xf32>
    %cst_139 = arith.constant 5.000000e-01 : f32
    %272 = vector.broadcast %cst_139 : f32 to vector<20x128xf32>
    %273 = arith.mulf %272, %271 : vector<20x128xf32>
    %cst_140 = arith.constant 4.471500e-02 : f32
    %274 = vector.broadcast %cst_140 : f32 to vector<20x128xf32>
    %275 = arith.mulf %274, %271 : vector<20x128xf32>
    %276 = arith.mulf %275, %271 : vector<20x128xf32>
    %277 = arith.mulf %276, %271 : vector<20x128xf32>
    %278 = arith.addf %271, %277 : vector<20x128xf32>
    %cst_141 = arith.constant 0.797884583 : f32
    %279 = vector.broadcast %cst_141 : f32 to vector<20x128xf32>
    %280 = arith.mulf %279, %278 : vector<20x128xf32>
    %281 = math.tanh %280 : vector<20x128xf32>
    %cst_142 = arith.constant 1.000000e+00 : f32
    %282 = vector.broadcast %cst_142 : f32 to vector<20x128xf32>
    %283 = arith.addf %282, %281 : vector<20x128xf32>
    %284 = arith.mulf %273, %283 : vector<20x128xf32>
    %285 = arith.truncf %284 : vector<20x128xf32> to vector<20x128xbf16>
    %c1_143 = arith.constant 1 : index
    %c0_144 = arith.constant 0 : index
    %c0_145 = arith.constant 0 : index
    %286 = vector.load %arg13[%c1_143, %c0_144, %c0_145] : memref<2x128x32xbf16, #tpu.memory_space<vmem>>, vector<1x128x32xbf16>
    %287 = vector.shape_cast %286 : vector<1x128x32xbf16> to vector<128x32xbf16>
    %cst_146 = arith.constant dense<0.000000e+00> : vector<20x32xf32>
    %288 = tpu.matmul %285, %287, %cst_146 {dimension_numbers = #tpu.dot_dimension_numbers<[1], [0], [0], [1], [0, 0, 1, 1], [], []>} : vector<20x128xbf16>, vector<128x32xbf16>, vector<20x32xf32> -> vector<20x32xf32>
    %289 = arith.addf %237, %288 : vector<20x32xf32>
    %c1_147 = arith.constant 1 : index
    %c0_148 = arith.constant 0 : index
    %c0_149 = arith.constant 0 : index
    %290 = vector.load %arg14[%c1_147, %c0_148, %c0_149] : memref<2x1x32xf32, #tpu.memory_space<vmem>>, vector<1x1x32xf32>
    %291 = vector.shape_cast %290 : vector<1x1x32xf32> to vector<1x32xf32>
    %292 = vector.broadcast %291 : vector<1x32xf32> to vector<20x32xf32>
    %293 = arith.addf %289, %292 : vector<20x32xf32>
    %c0_150 = arith.constant 0 : index
    %c0_151 = arith.constant 0 : index
    %294 = vector.load %arg15[%c0_150, %c0_151] : memref<2x32xf32, #tpu.memory_space<vmem>>, vector<2x32xf32>
    %295 = vector.extract_strided_slice %294 {offsets = [0, 0], sizes = [1, 32], strides = [1, 1]} : vector<2x32xf32> to vector<1x32xf32>
    %296 = vector.extract_strided_slice %294 {offsets = [1, 0], sizes = [1, 32], strides = [1, 1]} : vector<2x32xf32> to vector<1x32xf32>
    %cst_152 = arith.constant dense<0.000000e+00> : vector<20xf32>
    %297 = vector.multi_reduction <add>, %293, %cst_152 [1] : vector<20x32xf32> to vector<20xf32>
    %298 = vector.shape_cast %297 : vector<20xf32> to vector<20x1xf32>
    %cst_153 = arith.constant 3.200000e+01 : f32
    %299 = vector.broadcast %cst_153 : f32 to vector<20x1xf32>
    %300 = arith.divf %298, %299 : vector<20x1xf32>
    %301 = vector.broadcast %300 : vector<20x1xf32> to vector<20x32xf32>
    %302 = arith.subf %293, %301 : vector<20x32xf32>
    %303 = arith.mulf %302, %302 : vector<20x32xf32>
    %cst_154 = arith.constant dense<0.000000e+00> : vector<20xf32>
    %304 = vector.multi_reduction <add>, %303, %cst_154 [1] : vector<20x32xf32> to vector<20xf32>
    %305 = vector.shape_cast %304 : vector<20xf32> to vector<20x1xf32>
    %cst_155 = arith.constant 3.200000e+01 : f32
    %306 = vector.broadcast %cst_155 : f32 to vector<20x1xf32>
    %307 = arith.divf %305, %306 : vector<20x1xf32>
    %308 = vector.broadcast %300 : vector<20x1xf32> to vector<20x32xf32>
    %309 = arith.subf %293, %308 : vector<20x32xf32>
    %cst_156 = arith.constant 9.99999997E-7 : f32
    %310 = vector.broadcast %cst_156 : f32 to vector<20x1xf32>
    %311 = arith.addf %307, %310 : vector<20x1xf32>
    %312 = math.rsqrt %311 : vector<20x1xf32>
    %313 = vector.broadcast %312 : vector<20x1xf32> to vector<20x32xf32>
    %314 = arith.mulf %309, %313 : vector<20x32xf32>
    %315 = vector.broadcast %295 : vector<1x32xf32> to vector<20x32xf32>
    %316 = arith.mulf %314, %315 : vector<20x32xf32>
    %317 = vector.broadcast %296 : vector<1x32xf32> to vector<20x32xf32>
    %318 = arith.addf %316, %317 : vector<20x32xf32>
    %319 = vector.extract_strided_slice %318 {offsets = [0, 0], sizes = [5, 32], strides = [1, 1]} : vector<20x32xf32> to vector<5x32xf32>
    %c0_157 = arith.constant 0 : index
    %c0_158 = arith.constant 0 : index
    %c0_159 = arith.constant 0 : index
    %320 = vector.load %arg16[%c0_157, %c0_158, %c0_159] : memref<4x5x32xf32, #tpu.memory_space<vmem>>, vector<1x5x32xf32>
    %321 = vector.shape_cast %320 : vector<1x5x32xf32> to vector<5x32xf32>
    %322 = vector.shape_cast %319 : vector<5x32xf32> to vector<1x5x32xf32>
    tpu.vector_store %arg16[%c0_157, %c0_158, %c0_159], %322 {strides = array<i32>} : memref<4x5x32xf32, #tpu.memory_space<vmem>>, vector<1x5x32xf32>,
    %323 = vector.extract_strided_slice %318 {offsets = [5, 0], sizes = [5, 32], strides = [1, 1]} : vector<20x32xf32> to vector<5x32xf32>
    %c1_160 = arith.constant 1 : index
    %c0_161 = arith.constant 0 : index
    %c0_162 = arith.constant 0 : index
    %324 = vector.load %arg16[%c1_160, %c0_161, %c0_162] : memref<4x5x32xf32, #tpu.memory_space<vmem>>, vector<1x5x32xf32>
    %325 = vector.shape_cast %324 : vector<1x5x32xf32> to vector<5x32xf32>
    %326 = vector.shape_cast %323 : vector<5x32xf32> to vector<1x5x32xf32>
    tpu.vector_store %arg16[%c1_160, %c0_161, %c0_162], %326 {strides = array<i32>} : memref<4x5x32xf32, #tpu.memory_space<vmem>>, vector<1x5x32xf32>,
    %327 = vector.extract_strided_slice %318 {offsets = [10, 0], sizes = [5, 32], strides = [1, 1]} : vector<20x32xf32> to vector<5x32xf32>
    %c2 = arith.constant 2 : index
    %c0_163 = arith.constant 0 : index
    %c0_164 = arith.constant 0 : index
    %328 = vector.load %arg16[%c2, %c0_163, %c0_164] : memref<4x5x32xf32, #tpu.memory_space<vmem>>, vector<1x5x32xf32>
    %329 = vector.shape_cast %328 : vector<1x5x32xf32> to vector<5x32xf32>
    %330 = vector.shape_cast %327 : vector<5x32xf32> to vector<1x5x32xf32>
    tpu.vector_store %arg16[%c2, %c0_163, %c0_164], %330 {strides = array<i32>} : memref<4x5x32xf32, #tpu.memory_space<vmem>>, vector<1x5x32xf32>,
    %331 = vector.extract_strided_slice %318 {offsets = [15, 0], sizes = [5, 32], strides = [1, 1]} : vector<20x32xf32> to vector<5x32xf32>
    %c3 = arith.constant 3 : index
    %c0_165 = arith.constant 0 : index
    %c0_166 = arith.constant 0 : index
    %332 = vector.load %arg16[%c3, %c0_165, %c0_166] : memref<4x5x32xf32, #tpu.memory_space<vmem>>, vector<1x5x32xf32>
    %333 = vector.shape_cast %332 : vector<1x5x32xf32> to vector<5x32xf32>
    %334 = vector.shape_cast %331 : vector<5x32xf32> to vector<1x5x32xf32>
    tpu.vector_store %arg16[%c3, %c0_165, %c0_166], %334 {strides = array<i32>} : memref<4x5x32xf32, #tpu.memory_space<vmem>>, vector<1x5x32xf32>,
    return
  }
  func.func @transform_0(%arg0: i32) -> (i32, i32) {
    %c0_i32 = arith.constant 0 : i32
    %c0_i32_0 = arith.constant 0 : i32
    return %arg0, %c0_i32 : i32, i32
  }
  func.func @transform_1(%arg0: i32) -> (i32, i32) {
    %c0_i32 = arith.constant 0 : i32
    %c0_i32_0 = arith.constant 0 : i32
    %c0_i32_1 = arith.constant 0 : i32
    return %c0_i32, %c0_i32_0 : i32, i32
  }
  func.func @transform_2(%arg0: i32) -> (i32, i32) {
    %c0_i32 = arith.constant 0 : i32
    %c0_i32_0 = arith.constant 0 : i32
    %c0_i32_1 = arith.constant 0 : i32
    return %c0_i32, %c0_i32_0 : i32, i32
  }
  func.func @transform_3(%arg0: i32) -> (i32, i32) {
    %c0_i32 = arith.constant 0 : i32
    %c0_i32_0 = arith.constant 0 : i32
    %c0_i32_1 = arith.constant 0 : i32
    return %c0_i32, %c0_i32_0 : i32, i32
  }
  func.func @transform_4(%arg0: i32) -> (i32, i32, i32) {
    %c0_i32 = arith.constant 0 : i32
    %c0_i32_0 = arith.constant 0 : i32
    %c0_i32_1 = arith.constant 0 : i32
    %c0_i32_2 = arith.constant 0 : i32
    return %c0_i32, %c0_i32_0, %c0_i32_1 : i32, i32, i32
  }
  func.func @transform_5(%arg0: i32) -> (i32, i32, i32) {
    %c0_i32 = arith.constant 0 : i32
    %c0_i32_0 = arith.constant 0 : i32
    %c0_i32_1 = arith.constant 0 : i32
    %c0_i32_2 = arith.constant 0 : i32
    return %c0_i32, %c0_i32_0, %c0_i32_1 : i32, i32, i32
  }
  func.func @transform_6(%arg0: i32) -> (i32, i32, i32) {
    %c0_i32 = arith.constant 0 : i32
    %c0_i32_0 = arith.constant 0 : i32
    %c0_i32_1 = arith.constant 0 : i32
    %c0_i32_2 = arith.constant 0 : i32
    return %c0_i32, %c0_i32_0, %c0_i32_1 : i32, i32, i32
  }
  func.func @transform_7(%arg0: i32) -> (i32, i32, i32) {
    %c0_i32 = arith.constant 0 : i32
    %c0_i32_0 = arith.constant 0 : i32
    %c0_i32_1 = arith.constant 0 : i32
    %c0_i32_2 = arith.constant 0 : i32
    return %c0_i32, %c0_i32_0, %c0_i32_1 : i32, i32, i32
  }
  func.func @transform_8(%arg0: i32) -> (i32, i32, i32) {
    %c0_i32 = arith.constant 0 : i32
    %c0_i32_0 = arith.constant 0 : i32
    %c0_i32_1 = arith.constant 0 : i32
    %c0_i32_2 = arith.constant 0 : i32
    return %c0_i32, %c0_i32_0, %c0_i32_1 : i32, i32, i32
  }
  func.func @transform_9(%arg0: i32) -> (i32, i32, i32) {
    %c0_i32 = arith.constant 0 : i32
    %c0_i32_0 = arith.constant 0 : i32
    %c0_i32_1 = arith.constant 0 : i32
    %c0_i32_2 = arith.constant 0 : i32
    return %c0_i32, %c0_i32_0, %c0_i32_1 : i32, i32, i32
  }
  func.func @transform_10(%arg0: i32) -> (i32, i32, i32) {
    %c0_i32 = arith.constant 0 : i32
    %c0_i32_0 = arith.constant 0 : i32
    %c0_i32_1 = arith.constant 0 : i32
    %c0_i32_2 = arith.constant 0 : i32
    return %c0_i32, %c0_i32_0, %c0_i32_1 : i32, i32, i32
  }
  func.func @transform_11(%arg0: i32) -> (i32, i32, i32) {
    %c0_i32 = arith.constant 0 : i32
    %c0_i32_0 = arith.constant 0 : i32
    %c0_i32_1 = arith.constant 0 : i32
    %c0_i32_2 = arith.constant 0 : i32
    return %c0_i32, %c0_i32_0, %c0_i32_1 : i32, i32, i32
  }
  func.func @transform_12(%arg0: i32) -> (i32, i32, i32) {
    %c0_i32 = arith.constant 0 : i32
    %c0_i32_0 = arith.constant 0 : i32
    %c0_i32_1 = arith.constant 0 : i32
    %c0_i32_2 = arith.constant 0 : i32
    return %c0_i32, %c0_i32_0, %c0_i32_1 : i32, i32, i32
  }
  func.func @transform_13(%arg0: i32) -> (i32, i32, i32) {
    %c0_i32 = arith.constant 0 : i32
    %c0_i32_0 = arith.constant 0 : i32
    %c0_i32_1 = arith.constant 0 : i32
    %c0_i32_2 = arith.constant 0 : i32
    return %c0_i32, %c0_i32_0, %c0_i32_1 : i32, i32, i32
  }
  func.func @transform_14(%arg0: i32) -> (i32, i32) {
    %c0_i32 = arith.constant 0 : i32
    %c0_i32_0 = arith.constant 0 : i32
    %c0_i32_1 = arith.constant 0 : i32
    return %c0_i32, %c0_i32_0 : i32, i32
  }
  func.func @transform_15(%arg0: i32) -> (i32, i32, i32) {
    %c0_i32 = arith.constant 0 : i32
    %c0_i32_0 = arith.constant 0 : i32
    %c0_i32_1 = arith.constant 0 : i32
    return %arg0, %c0_i32, %c0_i32_0 : i32, i32, i32
  }
}

</mosaic_0001>

<llo_original>
// kernel: eq.8
$region0: #{eq.8}
  %s0 = inlined_call_operand.vmem [shape: s32[4,5], index: 0, kind: input, shape index: {}]
  %s1 = inlined_call_operand.vmem [shape: s32[20], index: 1, kind: output, shape index: {}]
  $region1: #{eq.8} parent=0
    #allocation0 [shape = 'u8[4096]{0}', space=vmem, size = 0x1000, scoped, tag = 'scoped mem for output reshape']
    #allocation1 [shape = 'u8[4096]{0}', space=vmem, size = 0x1000, scoped, tag = 'scoped mem for input reshape']
    %s3 = sshllo.u32 0, 4
    %v4 = vld [vmem:[%s0] sm:%s3]
    %5 = vst [vmem:[#allocation1] sm:%s3] %v4
    %v6 = vld [vmem:[#allocation1] sm:$0x1]
    %vm7 = vcmask 39936
    %8 = vst.msk [vmem:[#allocation0] sm:$0x1] %vm7, %v6
    %s9 = scalar_lea.vmem [#allocation1], 3
    %v10 = vld [vmem:[%s9] sm:$0x1]
    %11 = vrot.lane.b32.xlu0 %v10, 15
    %v12 = vpop.permute.xlu0 %11
    %vm13 = vcmask 162936
    %14 = vst.msk [vmem:[#allocation0] sm:$0x1] %vm13, %v12
    %s15 = scalar_lea.vmem [#allocation1], 2
    %v16 = vld [vmem:[%s15] sm:$0x1]
    %17 = vrot.lane.b32.xlu0 %v16, 10
    %v18 = vpop.permute.xlu0 %17
    %vm19 = vcmask 121936
    %20 = vst.msk [vmem:[#allocation0] sm:$0x1] %vm19, %v18
    %s21 = scalar_lea.vmem [#allocation1], 1
    %v22 = vld [vmem:[%s21] sm:$0x1]
    %23 = vrot.lane.b32.xlu0 %v22, 5
    %v24 = vpop.permute.xlu0 %23
    %vm25 = vcmask 80936
    %26 = vst.msk [vmem:[#allocation0] sm:$0x1] %vm25, %v24
    %s28 = sshllo.u32 0, 1
    %v30 = vld [vmem:[#allocation0] sm:%s28]
    %s31 = sshllo.u32 0, 1
    %32 = vst [vmem:[%s1] sm:%s31] %v30

// kernel: dino_v2_forward.1
$region0: #{dino_v2_forward.1}
  #allocation0 [shape = 'u32[]', space=smem, size = 0x4, offset = 0x4, fixed_abs, tag = 'smem constant byte address 0x4 - core index']
  #allocation1 [shape = 'u32[144,128]{1,0:T(1,128)}', space=vmem, size = 0x12000, scoped, tag = 'internal scratch']
  #allocation2 [shape = 'f32[20,32]{1,0:T(8,128)}', space=vmem, size = 0x3000, scoped, tag = 'scratch operand']
  %s0 = inlined_call_operand.vmem [shape: bf16[32,588], index: 0, kind: input, shape index: {}]
  %s1 = inlined_call_operand.vmem [shape: bf16[588,32], index: 1, kind: input, shape index: {}]
  %s2 = inlined_call_operand.vmem [shape: f32[5,32], index: 2, kind: input, shape index: {}]
  %s3 = inlined_call_operand.vmem [shape: f32[20,20], index: 3, kind: input, shape index: {}]
  %s4 = inlined_call_operand.vmem [shape: f32[2,2,32], index: 4, kind: input, shape index: {}]
  %s5 = inlined_call_operand.vmem [shape: bf16[2,32,96], index: 5, kind: input, shape index: {}]
  %s6 = inlined_call_operand.vmem [shape: f32[2,1,96], index: 6, kind: input, shape index: {}]
  %s7 = inlined_call_operand.vmem [shape: bf16[2,32,32], index: 7, kind: input, shape index: {}]
  %s8 = inlined_call_operand.vmem [shape: f32[2,1,32], index: 8, kind: input, shape index: {}]
  %s9 = inlined_call_operand.vmem [shape: f32[2,2,32], index: 9, kind: input, shape index: {}]
  %s10 = inlined_call_operand.vmem [shape: bf16[2,32,128], index: 10, kind: input, shape index: {}]
  %s11 = inlined_call_operand.vmem [shape: f32[2,1,128], index: 11, kind: input, shape index: {}]
  %s12 = inlined_call_operand.vmem [shape: bf16[2,128,32], index: 12, kind: input, shape index: {}]
  %s13 = inlined_call_operand.vmem [shape: f32[2,1,32], index: 13, kind: input, shape index: {}]
  %s14 = inlined_call_operand.vmem [shape: f32[2,32], index: 14, kind: input, shape index: {}]
  %s15 = inlined_call_operand.vmem [shape: f32[8,5,32], index: 15, kind: output, shape index: {}]
  %s16 = sld [smem:[#allocation0]]
  $region93: #{dino_v2_forward.1} parent=0
    _
  %s18 = ssub.s32 1, %s16
  %s19 = scalar_select 0, %s18, %s16
  loop: start=0, step=1, limit=4
  $region2: #{dino_v2_forward.1} parent=0 // loop_pre_header
    _
  $region3: #{dino_v2_forward.1} parent=0 // loop_header
    %s21 = sphi 0, %s25
    %p22 = scmp.ge.s32.totalorder %s21, 4
    %s31 = sphi 0, %s33
    %s34 = sphi 0, %s31
    %s35 = sphi 0, %s34
    %s51 = sphi 0, %s35
    %s55 = sphi 0, %s55
    %s57 = sphi 0, %s55
    %s58 = sphi 0, %s57
    %s72 = sphi 0, %s58
    %s76 = sphi 0, %s76
    %s78 = sphi 0, %s76
    %s79 = sphi 0, %s78
    %s93 = sphi 0, %s79
    %s97 = sphi 0, %s97
    %s99 = sphi 0, %s97
    %s100 = sphi 0, %s99
    %s114 = sphi 0, %s100
    %s118 = sphi 0, %s118
    %s120 = sphi 0, %s118
    %s121 = sphi 0, %s120
    %s135 = sphi 0, %s121
    %s139 = sphi 0, %s139
    %s141 = sphi 0, %s139
    %s142 = sphi 0, %s141
    %s156 = sphi 0, %s142
    %s160 = sphi 0, %s160
    %s162 = sphi 0, %s160
    %s163 = sphi 0, %s162
    %s177 = sphi 0, %s163
    %s181 = sphi 0, %s181
    %s183 = sphi 0, %s181
    %s184 = sphi 0, %s183
    %s198 = sphi 0, %s184
    %s202 = sphi 0, %s202
    %s204 = sphi 0, %s202
    %s205 = sphi 0, %s204
    %s219 = sphi 0, %s205
    %s223 = sphi 0, %s223
    %s225 = sphi 0, %s223
    %s226 = sphi 0, %s225
    %s240 = sphi 0, %s226
    %s244 = sphi 0, %s244
    %s246 = sphi 0, %s244
    %s247 = sphi 0, %s246
    %s261 = sphi 0, %s247
    %s265 = sphi 0, %s265
    %s267 = sphi 0, %s265
    %s268 = sphi 0, %s267
    %s282 = sphi 0, %s268
    %s286 = sphi 0, %s286
    %s288 = sphi 0, %s286
    %s289 = sphi 0, %s288
    %s303 = sphi 0, %s289
    %s307 = sphi 0, %s307
    %s309 = sphi 0, %s307
    %s310 = sphi 0, %s309
    %s324 = sphi 0, %s310
    %s328 = sphi 0, %s328
    %s330 = sphi 0, %s328
    %s331 = sphi 0, %s330
    %s345 = sphi 0, %s331
    %s351 = sphi 0, %s353
    %s354 = sphi 0, %s351
    %s355 = sphi 0, %s354
    %s371 = sphi 0, %s355
  $region4: #{dino_v2_forward.1} parent=0 // loop_header_branch
    %24 = sbr.rel (%p22) target = $region8
  $region5: #{dino_v2_forward.1} parent=0 // loop_body
    %s26 = ssub.s32 %s21, 1
    %s27 = ssub.s32 %s21, 2
    %s28 = sadd.s32 %s21, 1
    %s29 = ssub.s32 %s21, %s28
    %p30 = scmp.eq.s32.totalorder %s29, 0
    %s32 = sadd.s32 %s31, 1
    %s33 = scalar_select %p30, %s31, %s32
    %p36 = pneg %p30
    %p37 = scmp.eq.s32.totalorder %s21, 1
    %p38 = por %p36, %p37
    %p39 = scmp.ne.s32.totalorder %s31, %s34
    %p40 = scmp.eq.s32.totalorder %s21, 0
    %p41 = por %p39, %p40
    %p42 = scmp.ne.s32.totalorder %s31, %s34
    %p43 = scmp.eq.s32.totalorder %s26, 1
    %p44 = por %p42, %p43
    %p45 = scmp.ne.s32.totalorder %s34, %s35
    %p46 = scmp.eq.s32.totalorder %s26, 0
    %p47 = por %p45, %p46
    %p48 = scmp.ne.s32.totalorder %s34, %s35
    %p49 = scmp.eq.s32.totalorder %s27, 1
    %p50 = por %p48, %p49
    %p52 = scmp.ne.s32.totalorder %s35, %s51
    %p53 = scmp.eq.s32.totalorder %s27, 0
    %p54 = por %p52, %p53
    %s56 = sadd.s32 %s55, 1
    %p59 = scmp.eq.s32.totalorder %s21, 1
    %p60 = scmp.ne.s32.totalorder %s55, %s57
    %p61 = scmp.eq.s32.totalorder %s21, 0
    %p62 = por %p60, %p61
    %p63 = scmp.ne.s32.totalorder %s55, %s57
    %p64 = scmp.eq.s32.totalorder %s26, 1
    %p65 = por %p63, %p64
    %p66 = scmp.ne.s32.totalorder %s57, %s58
    %p67 = scmp.eq.s32.totalorder %s26, 0
    %p68 = por %p66, %p67
    %p69 = scmp.ne.s32.totalorder %s57, %s58
    %p70 = scmp.eq.s32.totalorder %s27, 1
    %p71 = por %p69, %p70
    %p73 = scmp.ne.s32.totalorder %s58, %s72
    %p74 = scmp.eq.s32.totalorder %s27, 0
    %p75 = por %p73, %p74
    %s77 = sadd.s32 %s76, 1
    %p80 = scmp.eq.s32.totalorder %s21, 1
    %p81 = scmp.ne.s32.totalorder %s76, %s78
    %p82 = scmp.eq.s32.totalorder %s21, 0
    %p83 = por %p81, %p82
    %p84 = scmp.ne.s32.totalorder %s76, %s78
    %p85 = scmp.eq.s32.totalorder %s26, 1
    %p86 = por %p84, %p85
    %p87 = scmp.ne.s32.totalorder %s78, %s79
    %p88 = scmp.eq.s32.totalorder %s26, 0
    %p89 = por %p87, %p88
    %p90 = scmp.ne.s32.totalorder %s78, %s79
    %p91 = scmp.eq.s32.totalorder %s27, 1
    %p92 = por %p90, %p91
    %p94 = scmp.ne.s32.totalorder %s79, %s93
    %p95 = scmp.eq.s32.totalorder %s27, 0
    %p96 = por %p94, %p95
    %s98 = sadd.s32 %s97, 1
    %p101 = scmp.eq.s32.totalorder %s21, 1
    %p102 = scmp.ne.s32.totalorder %s97, %s99
    %p103 = scmp.eq.s32.totalorder %s21, 0
    %p104 = por %p102, %p103
    %p105 = scmp.ne.s32.totalorder %s97, %s99
    %p106 = scmp.eq.s32.totalorder %s26, 1
    %p107 = por %p105, %p106
    %p108 = scmp.ne.s32.totalorder %s99, %s100
    %p109 = scmp.eq.s32.totalorder %s26, 0
    %p110 = por %p108, %p109
    %p111 = scmp.ne.s32.totalorder %s99, %s100
    %p112 = scmp.eq.s32.totalorder %s27, 1
    %p113 = por %p111, %p112
    %p115 = scmp.ne.s32.totalorder %s100, %s114
    %p116 = scmp.eq.s32.totalorder %s27, 0
    %p117 = por %p115, %p116
    %s119 = sadd.s32 %s118, 1
    %p122 = scmp.eq.s32.totalorder %s21, 1
    %p123 = scmp.ne.s32.totalorder %s118, %s120
    %p124 = scmp.eq.s32.totalorder %s21, 0
    %p125 = por %p123, %p124
    %p126 = scmp.ne.s32.totalorder %s118, %s120
    %p127 = scmp.eq.s32.totalorder %s26, 1
    %p128 = por %p126, %p127
    %p129 = scmp.ne.s32.totalorder %s120, %s121
    %p130 = scmp.eq.s32.totalorder %s26, 0
    %p131 = por %p129, %p130
    %p132 = scmp.ne.s32.totalorder %s120, %s121
    %p133 = scmp.eq.s32.totalorder %s27, 1
    %p134 = por %p132, %p133
    %p136 = scmp.ne.s32.totalorder %s121, %s135
    %p137 = scmp.eq.s32.totalorder %s27, 0
    %p138 = por %p136, %p137
    %s140 = sadd.s32 %s139, 1
    %p143 = scmp.eq.s32.totalorder %s21, 1
    %p144 = scmp.ne.s32.totalorder %s139, %s141
    %p145 = scmp.eq.s32.totalorder %s21, 0
    %p146 = por %p144, %p145
    %p147 = scmp.ne.s32.totalorder %s139, %s141
    %p148 = scmp.eq.s32.totalorder %s26, 1
    %p149 = por %p147, %p148
    %p150 = scmp.ne.s32.totalorder %s141, %s142
    %p151 = scmp.eq.s32.totalorder %s26, 0
    %p152 = por %p150, %p151
    %p153 = scmp.ne.s32.totalorder %s141, %s142
    %p154 = scmp.eq.s32.totalorder %s27, 1
    %p155 = por %p153, %p154
    %p157 = scmp.ne.s32.totalorder %s142, %s156
    %p158 = scmp.eq.s32.totalorder %s27, 0
    %p159 = por %p157, %p158
    %s161 = sadd.s32 %s160, 1
    %p164 = scmp.eq.s32.totalorder %s21, 1
    %p165 = scmp.ne.s32.totalorder %s160, %s162
    %p166 = scmp.eq.s32.totalorder %s21, 0
    %p167 = por %p165, %p166
    %p168 = scmp.ne.s32.totalorder %s160, %s162
    %p169 = scmp.eq.s32.totalorder %s26, 1
    %p170 = por %p168, %p169
    %p171 = scmp.ne.s32.totalorder %s162, %s163
    %p172 = scmp.eq.s32.totalorder %s26, 0
    %p173 = por %p171, %p172
    %p174 = scmp.ne.s32.totalorder %s162, %s163
    %p175 = scmp.eq.s32.totalorder %s27, 1
    %p176 = por %p174, %p175
    %p178 = scmp.ne.s32.totalorder %s163, %s177
    %p179 = scmp.eq.s32.totalorder %s27, 0
    %p180 = por %p178, %p179
    %s182 = sadd.s32 %s181, 1
    %p185 = scmp.eq.s32.totalorder %s21, 1
    %p186 = scmp.ne.s32.totalorder %s181, %s183
    %p187 = scmp.eq.s32.totalorder %s21, 0
    %p188 = por %p186, %p187
    %p189 = scmp.ne.s32.totalorder %s181, %s183
    %p190 = scmp.eq.s32.totalorder %s26, 1
    %p191 = por %p189, %p190
    %p192 = scmp.ne.s32.totalorder %s183, %s184
    %p193 = scmp.eq.s32.totalorder %s26, 0
    %p194 = por %p192, %p193
    %p195 = scmp.ne.s32.totalorder %s183, %s184
    %p196 = scmp.eq.s32.totalorder %s27, 1
    %p197 = por %p195, %p196
    %p199 = scmp.ne.s32.totalorder %s184, %s198
    %p200 = scmp.eq.s32.totalorder %s27, 0
    %p201 = por %p199, %p200
    %s203 = sadd.s32 %s202, 1
    %p206 = scmp.eq.s32.totalorder %s21, 1
    %p207 = scmp.ne.s32.totalorder %s202, %s204
    %p208 = scmp.eq.s32.totalorder %s21, 0
    %p209 = por %p207, %p208
    %p210 = scmp.ne.s32.totalorder %s202, %s204
    %p211 = scmp.eq.s32.totalorder %s26, 1
    %p212 = por %p210, %p211
    %p213 = scmp.ne.s32.totalorder %s204, %s205
    %p214 = scmp.eq.s32.totalorder %s26, 0
    %p215 = por %p213, %p214
    %p216 = scmp.ne.s32.totalorder %s204, %s205
    %p217 = scmp.eq.s32.totalorder %s27, 1
    %p218 = por %p216, %p217
    %p220 = scmp.ne.s32.totalorder %s205, %s219
    %p221 = scmp.eq.s32.totalorder %s27, 0
    %p222 = por %p220, %p221
    %s224 = sadd.s32 %s223, 1
    %p227 = scmp.eq.s32.totalorder %s21, 1
    %p228 = scmp.ne.s32.totalorder %s223, %s225
    %p229 = scmp.eq.s32.totalorder %s21, 0
    %p230 = por %p228, %p229
    %p231 = scmp.ne.s32.totalorder %s223, %s225
    %p232 = scmp.eq.s32.totalorder %s26, 1
    %p233 = por %p231, %p232
    %p234 = scmp.ne.s32.totalorder %s225, %s226
    %p235 = scmp.eq.s32.totalorder %s26, 0
    %p236 = por %p234, %p235
    %p237 = scmp.ne.s32.totalorder %s225, %s226
    %p238 = scmp.eq.s32.totalorder %s27, 1
    %p239 = por %p237, %p238
    %p241 = scmp.ne.s32.totalorder %s226, %s240
    %p242 = scmp.eq.s32.totalorder %s27, 0
    %p243 = por %p241, %p242
    %s245 = sadd.s32 %s244, 1
    %p248 = scmp.eq.s32.totalorder %s21, 1
    %p249 = scmp.ne.s32.totalorder %s244, %s246
    %p250 = scmp.eq.s32.totalorder %s21, 0
    %p251 = por %p249, %p250
    %p252 = scmp.ne.s32.totalorder %s244, %s246
    %p253 = scmp.eq.s32.totalorder %s26, 1
    %p254 = por %p252, %p253
    %p255 = scmp.ne.s32.totalorder %s246, %s247
    %p256 = scmp.eq.s32.totalorder %s26, 0
    %p257 = por %p255, %p256
    %p258 = scmp.ne.s32.totalorder %s246, %s247
    %p259 = scmp.eq.s32.totalorder %s27, 1
    %p260 = por %p258, %p259
    %p262 = scmp.ne.s32.totalorder %s247, %s261
    %p263 = scmp.eq.s32.totalorder %s27, 0
    %p264 = por %p262, %p263
    %s266 = sadd.s32 %s265, 1
    %p269 = scmp.eq.s32.totalorder %s21, 1
    %p270 = scmp.ne.s32.totalorder %s265, %s267
    %p271 = scmp.eq.s32.totalorder %s21, 0
    %p272 = por %p270, %p271
    %p273 = scmp.ne.s32.totalorder %s265, %s267
    %p274 = scmp.eq.s32.totalorder %s26, 1
    %p275 = por %p273, %p274
    %p276 = scmp.ne.s32.totalorder %s267, %s268
    %p277 = scmp.eq.s32.totalorder %s26, 0
    %p278 = por %p276, %p277
    %p279 = scmp.ne.s32.totalorder %s267, %s268
    %p280 = scmp.eq.s32.totalorder %s27, 1
    %p281 = por %p279, %p280
    %p283 = scmp.ne.s32.totalorder %s268, %s282
    %p284 = scmp.eq.s32.totalorder %s27, 0
    %p285 = por %p283, %p284
    %s287 = sadd.s32 %s286, 1
    %p290 = scmp.eq.s32.totalorder %s21, 1
    %p291 = scmp.ne.s32.totalorder %s286, %s288
    %p292 = scmp.eq.s32.totalorder %s21, 0
    %p293 = por %p291, %p292
    %p294 = scmp.ne.s32.totalorder %s286, %s288
    %p295 = scmp.eq.s32.totalorder %s26, 1
    %p296 = por %p294, %p295
    %p297 = scmp.ne.s32.totalorder %s288, %s289
    %p298 = scmp.eq.s32.totalorder %s26, 0
    %p299 = por %p297, %p298
    %p300 = scmp.ne.s32.totalorder %s288, %s289
    %p301 = scmp.eq.s32.totalorder %s27, 1
    %p302 = por %p300, %p301
    %p304 = scmp.ne.s32.totalorder %s289, %s303
    %p305 = scmp.eq.s32.totalorder %s27, 0
    %p306 = por %p304, %p305
    %s308 = sadd.s32 %s307, 1
    %p311 = scmp.eq.s32.totalorder %s21, 1
    %p312 = scmp.ne.s32.totalorder %s307, %s309
    %p313 = scmp.eq.s32.totalorder %s21, 0
    %p314 = por %p312, %p313
    %p315 = scmp.ne.s32.totalorder %s307, %s309
    %p316 = scmp.eq.s32.totalorder %s26, 1
    %p317 = por %p315, %p316
    %p318 = scmp.ne.s32.totalorder %s309, %s310
    %p319 = scmp.eq.s32.totalorder %s26, 0
    %p320 = por %p318, %p319
    %p321 = scmp.ne.s32.totalorder %s309, %s310
    %p322 = scmp.eq.s32.totalorder %s27, 1
    %p323 = por %p321, %p322
    %p325 = scmp.ne.s32.totalorder %s310, %s324
    %p326 = scmp.eq.s32.totalorder %s27, 0
    %p327 = por %p325, %p326
    %s329 = sadd.s32 %s328, 1
    %p332 = scmp.eq.s32.totalorder %s21, 1
    %p333 = scmp.ne.s32.totalorder %s328, %s330
    %p334 = scmp.eq.s32.totalorder %s21, 0
    %p335 = por %p333, %p334
    %p336 = scmp.ne.s32.totalorder %s328, %s330
    %p337 = scmp.eq.s32.totalorder %s26, 1
    %p338 = por %p336, %p337
    %p339 = scmp.ne.s32.totalorder %s330, %s331
    %p340 = scmp.eq.s32.totalorder %s26, 0
    %p341 = por %p339, %p340
    %p342 = scmp.ne.s32.totalorder %s330, %s331
    %p343 = scmp.eq.s32.totalorder %s27, 1
    %p344 = por %p342, %p343
    %p346 = scmp.ne.s32.totalorder %s331, %s345
    %p347 = scmp.eq.s32.totalorder %s27, 0
    %p348 = por %p346, %p347
    %s349 = ssub.s32 %s21, %s28
    %p350 = scmp.eq.s32.totalorder %s349, 0
    %s352 = sadd.s32 %s351, 1
    %s353 = scalar_select %p350, %s351, %s352
    %p356 = pneg %p350
    %p357 = scmp.eq.s32.totalorder %s21, 1
    %p358 = por %p356, %p357
    %p359 = scmp.ne.s32.totalorder %s351, %s354
    %p360 = scmp.eq.s32.totalorder %s21, 0
    %p361 = por %p359, %p360
    %p362 = scmp.ne.s32.totalorder %s351, %s354
    %p363 = scmp.eq.s32.totalorder %s26, 1
    %p364 = por %p362, %p363
    %p365 = scmp.ne.s32.totalorder %s354, %s355
    %p366 = scmp.eq.s32.totalorder %s26, 0
    %p367 = por %p365, %p366
    %p368 = scmp.ne.s32.totalorder %s354, %s355
    %p369 = scmp.eq.s32.totalorder %s27, 1
    %p370 = por %p368, %p369
    %p372 = scmp.ne.s32.totalorder %s355, %s371
    %p373 = scmp.eq.s32.totalorder %s27, 0
    %p374 = por %p372, %p373
    %p375 = scmp.le.s32.totalorder 1, %s21
    %p376 = scmp.lt.s32.totalorder %s21, 3
    %p377 = pnand %p375, %p376
    %p378 = pneg %p377
    // Predicated region
    $region9: #{dino_v2_forward.1} parent=5 // pred_check
      _
    $region10: #{dino_v2_forward.1} parent=5 // pred_check_branch
      %380 = sbr.rel (%p377) target = $region12
    $region11: #{dino_v2_forward.1} parent=5 // pred_region
      %s381 = ssub.s32 %s21, 1
      // Predicated region
      $region13: #{dino_v2_forward.1} parent=11 // pred_check
        %p382 = pneg %p68
      $region14: #{dino_v2_forward.1} parent=11 // pred_check_branch
        %384 = sbr.rel (%p382) target = $region16
      $region15: #{dino_v2_forward.1} parent=11 // pred_region
        _
      $region16: #{dino_v2_forward.1} parent=11 // pred_fallthru
        _
      // Predicated region
      $region17: #{dino_v2_forward.1} parent=11 // pred_check
        %p385 = pneg %p89
      $region18: #{dino_v2_forward.1} parent=11 // pred_check_branch
        %387 = sbr.rel (%p385) target = $region20
      $region19: #{dino_v2_forward.1} parent=11 // pred_region
        _
      $region20: #{dino_v2_forward.1} parent=11 // pred_fallthru
        _
      // Predicated region
      $region21: #{dino_v2_forward.1} parent=11 // pred_check
        %p388 = pneg %p110
      $region22: #{dino_v2_forward.1} parent=11 // pred_check_branch
        %390 = sbr.rel (%p388) target = $region24
      $region23: #{dino_v2_forward.1} parent=11 // pred_region
        _
      $region24: #{dino_v2_forward.1} parent=11 // pred_fallthru
        _
      // Predicated region
      $region25: #{dino_v2_forward.1} parent=11 // pred_check
        %p391 = pneg %p131
      $region26: #{dino_v2_forward.1} parent=11 // pred_check_branch
        %393 = sbr.rel (%p391) target = $region28
      $region27: #{dino_v2_forward.1} parent=11 // pred_region
        _
      $region28: #{dino_v2_forward.1} parent=11 // pred_fallthru
        _
      // Predicated region
      $region29: #{dino_v2_forward.1} parent=11 // pred_check
        %p394 = pneg %p152
      $region30: #{dino_v2_forward.1} parent=11 // pred_check_branch
        %396 = sbr.rel (%p394) target = $region32
      $region31: #{dino_v2_forward.1} parent=11 // pred_region
        _
      $region32: #{dino_v2_forward.1} parent=11 // pred_fallthru
        _
      // Predicated region
      $region33: #{dino_v2_forward.1} parent=11 // pred_check
        %p397 = pneg %p173
      $region34: #{dino_v2_forward.1} parent=11 // pred_check_branch
        %399 = sbr.rel (%p397) target = $region36
      $region35: #{dino_v2_forward.1} parent=11 // pred_region
        _
      $region36: #{dino_v2_forward.1} parent=11 // pred_fallthru
        _
      // Predicated region
      $region37: #{dino_v2_forward.1} parent=11 // pred_check
        %p400 = pneg %p194
      $region38: #{dino_v2_forward.1} parent=11 // pred_check_branch
        %402 = sbr.rel (%p400) target = $region40
      $region39: #{dino_v2_forward.1} parent=11 // pred_region
        _
      $region40: #{dino_v2_forward.1} parent=11 // pred_fallthru
        _
      // Predicated region
      $region41: #{dino_v2_forward.1} parent=11 // pred_check
        %p403 = pneg %p215
      $region42: #{dino_v2_forward.1} parent=11 // pred_check_branch
        %405 = sbr.rel (%p403) target = $region44
      $region43: #{dino_v2_forward.1} parent=11 // pred_region
        _
      $region44: #{dino_v2_forward.1} parent=11 // pred_fallthru
        _
      // Predicated region
      $region45: #{dino_v2_forward.1} parent=11 // pred_check
        %p406 = pneg %p236
      $region46: #{dino_v2_forward.1} parent=11 // pred_check_branch
        %408 = sbr.rel (%p406) target = $region48
      $region47: #{dino_v2_forward.1} parent=11 // pred_region
        _
      $region48: #{dino_v2_forward.1} parent=11 // pred_fallthru
        _
      // Predicated region
      $region49: #{dino_v2_forward.1} parent=11 // pred_check
        %p409 = pneg %p257
      $region50: #{dino_v2_forward.1} parent=11 // pred_check_branch
        %411 = sbr.rel (%p409) target = $region52
      $region51: #{dino_v2_forward.1} parent=11 // pred_region
        _
      $region52: #{dino_v2_forward.1} parent=11 // pred_fallthru
        _
      // Predicated region
      $region53: #{dino_v2_forward.1} parent=11 // pred_check
        %p412 = pneg %p278
      $region54: #{dino_v2_forward.1} parent=11 // pred_check_branch
        %414 = sbr.rel (%p412) target = $region56
      $region55: #{dino_v2_forward.1} parent=11 // pred_region
        _
      $region56: #{dino_v2_forward.1} parent=11 // pred_fallthru
        _
      // Predicated region
      $region57: #{dino_v2_forward.1} parent=11 // pred_check
        %p415 = pneg %p299
      $region58: #{dino_v2_forward.1} parent=11 // pred_check_branch
        %417 = sbr.rel (%p415) target = $region60
      $region59: #{dino_v2_forward.1} parent=11 // pred_region
        _
      $region60: #{dino_v2_forward.1} parent=11 // pred_fallthru
        _
      // Predicated region
      $region61: #{dino_v2_forward.1} parent=11 // pred_check
        %p418 = pneg %p320
      $region62: #{dino_v2_forward.1} parent=11 // pred_check_branch
        %420 = sbr.rel (%p418) target = $region64
      $region63: #{dino_v2_forward.1} parent=11 // pred_region
        _
      $region64: #{dino_v2_forward.1} parent=11 // pred_fallthru
        _
      // Predicated region
      $region65: #{dino_v2_forward.1} parent=11 // pred_check
        %p421 = pneg %p341
      $region66: #{dino_v2_forward.1} parent=11 // pred_check_branch
        %423 = sbr.rel (%p421) target = $region68
      $region67: #{dino_v2_forward.1} parent=11 // pred_region
        _
      $region68: #{dino_v2_forward.1} parent=11 // pred_fallthru
        _
    $region12: #{dino_v2_forward.1} parent=5 // pred_fallthru
      _
    %p424 = scmp.lt.s32.totalorder %s21, 2
    // Predicated region
    $region69: #{dino_v2_forward.1} parent=5 // pred_check
      %p425 = pneg %p424
    $region70: #{dino_v2_forward.1} parent=5 // pred_check_branch
      %427 = sbr.rel (%p425) target = $region72
    $region71: #{dino_v2_forward.1} parent=5 // pred_region
      // Predicated region
      $region73: #{dino_v2_forward.1} parent=71 // pred_check
        %p428 = pneg %p41
      $region74: #{dino_v2_forward.1} parent=71 // pred_check_branch
        %430 = sbr.rel (%p428) target = $region76
      $region75: #{dino_v2_forward.1} parent=71 // pred_region
        %s431 = smul.u32 2, %s21
        %p432 = scmp.lt.s32.totalorder %s431, 3
        %s433 = scalar_select %p432, %s431, 3
        %s434 = smul.addr %s433, 5
        %s435 = smul.addr %s434, 4
        %s436 = scalar_lea.vmem %s0, %s435
        %s437 = smul.u32 2, %s21
      $region76: #{dino_v2_forward.1} parent=71 // pred_fallthru
        _
    $region72: #{dino_v2_forward.1} parent=5 // pred_fallthru
      _
    %p438 = scmp.le.s32.totalorder 1, %s21
    %p439 = scmp.lt.s32.totalorder %s21, 3
    %p440 = pnand %p438, %p439
    %p441 = pneg %p440
    // Predicated region
    $region77: #{dino_v2_forward.1} parent=5 // pred_check
      _
    $region78: #{dino_v2_forward.1} parent=5 // pred_check_branch
      %443 = sbr.rel (%p440) target = $region80
    $region79: #{dino_v2_forward.1} parent=5 // pred_region
      %s444 = ssub.s32 %s21, 1
      %s445 = smul.u32 2, %s26
      %p446 = scmp.lt.s32.totalorder %s445, 3
      %s447 = scalar_select %p446, %s445, 3
      %s448 = smul.addr %s447, 5
      %s449 = smul.addr %s448, 4
      %s450 = scalar_lea.vmem %s0, %s449
      %p451 = pneg %p47
      %p452 = pneg %p44
      %p453 = pneg %p68
      %p454 = pneg %p65
      %p455 = pneg %p89
      %p456 = pneg %p86
      %p457 = pneg %p110
      %p458 = pneg %p107
      %p459 = pneg %p131
      %p460 = pneg %p128
      %p461 = pneg %p152
      %p462 = pneg %p149
      %p463 = pneg %p173
      %p464 = pneg %p170
      %p465 = pneg %p194
      %p466 = pneg %p191
      %p467 = pneg %p215
      %p468 = pneg %p212
      %p469 = pneg %p236
      %p470 = pneg %p233
      %p471 = pneg %p257
      %p472 = pneg %p254
      %p473 = pneg %p278
      %p474 = pneg %p275
      %p475 = pneg %p299
      %p476 = pneg %p296
      %p477 = pneg %p320
      %p478 = pneg %p317
      %p479 = pneg %p341
      %p480 = pneg %p338
      %p481 = pneg %p367
      %p482 = pneg %p364
      %s483 = smul.u32 4, %s26
      %p484 = scmp.lt.s32.totalorder %s483, 7
      %s485 = scalar_select %p484, %s483, 7
      %s486 = smul.addr %s485, 8
      %s487 = scalar_lea.vmem %s15, %s486
      %s488 = smul.u32 2, %s26
      %p489 = scmp.lt.s32.totalorder %s488, 3
      %s490 = scalar_select %p489, %s488, 3
      %s491 = smul.addr %s490, 5
      %s492 = smul.addr %s491, 4
      %s493 = scalar_lea.vmem %s0, %s492
      %s494 = smul.u32 2, %s26
      %s495 = smul.u32 4, %s26
      %p496 = scmp.lt.s32.totalorder %s495, 7
      %s497 = scalar_select %p496, %s495, 7
      %s498 = smul.addr %s497, 8
      %s499 = scalar_lea.vmem %s15, %s498
      %s500 = smul.u32 4, %s26
      %v502 = vld [vmem:[%s493] sm:$0xff]
      %v503 = vld [vmem:[%s493 + $0x8] sm:$0xff]
      %v504 = vld [vmem:[%s493 + $0x10] sm:$0xf]
      %v505 = vld [vmem:[%s493 + $0x14] sm:$0xff]
      %v506 = vld [vmem:[%s493 + $0x1c] sm:$0xff]
      %v507 = vld [vmem:[%s493 + $0x24] sm:$0xf]
      %v508 = vld [vmem:[%s1] sm:$0xf]
      %v509 = vld [vmem:[%s1 + $0x4] sm:$0xf]
      %v510 = vld [vmem:[%s1 + $0x8] sm:$0xf]
      %v511 = vld [vmem:[%s1 + $0xc] sm:$0xf]
      %v512 = vld [vmem:[%s1 + $0x10] sm:$0xf]
      %v513 = vld [vmem:[%s1 + $0x14] sm:$0xf]
      %v514 = vld [vmem:[%s1 + $0x18] sm:$0xf]
      %v515 = vld [vmem:[%s1 + $0x1c] sm:$0xf]
      %v516 = vld [vmem:[%s1 + $0x20] sm:$0xf]
      %v517 = vld [vmem:[%s1 + $0x24] sm:$0xf]
      %v518 = vld [vmem:[%s1 + $0x28] sm:$0xf]
      %v519 = vld [vmem:[%s1 + $0x2c] sm:$0xf]
      %v520 = vld [vmem:[%s1 + $0x30] sm:$0xf]
      %v521 = vld [vmem:[%s1 + $0x34] sm:$0xf]
      %v522 = vld [vmem:[%s1 + $0x38] sm:$0xf]
      %v523 = vld [vmem:[%s1 + $0x3c] sm:$0xf]
      %v524 = vld [vmem:[%s1 + $0x40] sm:$0xf]
      %v525 = vld [vmem:[%s1 + $0x44] sm:$0xf]
      %v526 = vld [vmem:[%s1 + $0x48] sm:$0xf]
      %v527 = vld [vmem:[%s1 + $0x4c] sm:$0xf]
      %v528 = vld [vmem:[%s1 + $0x50] sm:$0xf]
      %v529 = vld [vmem:[%s1 + $0x54] sm:$0xf]
      %v530 = vld [vmem:[%s1 + $0x58] sm:$0xf]
      %v531 = vld [vmem:[%s1 + $0x5c] sm:$0xf]
      %v532 = vld [vmem:[%s1 + $0x60] sm:$0xf]
      %v533 = vld [vmem:[%s1 + $0x64] sm:$0xf]
      %v534 = vld [vmem:[%s1 + $0x68] sm:$0xf]
      %v535 = vld [vmem:[%s1 + $0x6c] sm:$0xf]
      %v536 = vld [vmem:[%s1 + $0x70] sm:$0xf]
      %v537 = vld [vmem:[%s1 + $0x74] sm:$0xf]
      %v538 = vld [vmem:[%s1 + $0x78] sm:$0xf]
      %v539 = vld [vmem:[%s1 + $0x7c] sm:$0xf]
      %v540 = vld [vmem:[%s1 + $0x80] sm:$0xf]
      %v541 = vld [vmem:[%s1 + $0x84] sm:$0xf]
      %v542 = vld [vmem:[%s1 + $0x88] sm:$0xf]
      %v543 = vld [vmem:[%s1 + $0x8c] sm:$0xf]
      %v544 = vld [vmem:[%s1 + $0x90] sm:$0xf]
      %v545 = vld [vmem:[%s1 + $0x94] sm:$0xf]
      %v546 = vld [vmem:[%s1 + $0x98] sm:$0xf]
      %v547 = vld [vmem:[%s1 + $0x9c] sm:$0xf]
      %v548 = vld [vmem:[%s1 + $0xa0] sm:$0xf]
      %v549 = vld [vmem:[%s1 + $0xa4] sm:$0xf]
      %v550 = vld [vmem:[%s1 + $0xa8] sm:$0xf]
      %v551 = vld [vmem:[%s1 + $0xac] sm:$0xf]
      %v552 = vld [vmem:[%s1 + $0xb0] sm:$0xf]
      %v553 = vld [vmem:[%s1 + $0xb4] sm:$0xf]
      %v554 = vld [vmem:[%s1 + $0xb8] sm:$0xf]
      %v555 = vld [vmem:[%s1 + $0xbc] sm:$0xf]
      %v556 = vld [vmem:[%s1 + $0xc0] sm:$0xf]
      %v557 = vld [vmem:[%s1 + $0xc4] sm:$0xf]
      %v558 = vld [vmem:[%s1 + $0xc8] sm:$0xf]
      %v559 = vld [vmem:[%s1 + $0xcc] sm:$0xf]
      %v560 = vld [vmem:[%s1 + $0xd0] sm:$0xf]
      %v561 = vld [vmem:[%s1 + $0xd4] sm:$0xf]
      %v562 = vld [vmem:[%s1 + $0xd8] sm:$0xf]
      %v563 = vld [vmem:[%s1 + $0xdc] sm:$0xf]
      %v564 = vld [vmem:[%s1 + $0xe0] sm:$0xf]
      %v565 = vld [vmem:[%s1 + $0xe4] sm:$0xf]
      %v566 = vld [vmem:[%s1 + $0xe8] sm:$0xf]
      %v567 = vld [vmem:[%s1 + $0xec] sm:$0xf]
      %v568 = vld [vmem:[%s1 + $0xf0] sm:$0xf]
      %v569 = vld [vmem:[%s1 + $0xf4] sm:$0xf]
      %v570 = vld [vmem:[%s1 + $0xf8] sm:$0xf]
      %v571 = vld [vmem:[%s1 + $0xfc] sm:$0xf]
      %v572 = vld [vmem:[%s1 + $0x100] sm:$0xf]
      %v573 = vld [vmem:[%s1 + $0x104] sm:$0xf]
      %v574 = vld [vmem:[%s1 + $0x108] sm:$0xf]
      %v575 = vld [vmem:[%s1 + $0x10c] sm:$0xf]
      %v576 = vld [vmem:[%s1 + $0x110] sm:$0xf]
      %v577 = vld [vmem:[%s1 + $0x114] sm:$0xf]
      %v578 = vld [vmem:[%s1 + $0x118] sm:$0xf]
      %v579 = vld [vmem:[%s1 + $0x11c] sm:$0xf]
      %v580 = vld [vmem:[%s1 + $0x120] sm:$0xf]
      %v581 = vld [vmem:[%s1 + $0x124] sm:$0x3]
      %v588 = vunpack.c.l.b16 %v502
      %v589 = vunpack.c.h.b16 %v502
      %v590 = vunpack.c.l.b16 %v503
      %v591 = vunpack.c.h.b16 %v503
      %v592 = vunpack.c.l.b16 %v504
      %v593 = vunpack.c.l.b16 %v505
      %v594 = vunpack.c.h.b16 %v505
      %v595 = vunpack.c.l.b16 %v506
      %v596 = vunpack.c.h.b16 %v506
      %v597 = vunpack.c.l.b16 %v507
      %v598 = vpack.c.b16 %v593, %v588
      %v599 = vpack.c.b16 %v594, %v589
      %v600 = vpack.c.b16 %v595, %v590
      %v601 = vpack.c.b16 %v596, %v591
      %v602 = vpack.c.b16 %v597, %v592
      %v681 = vunpack.c.l.b16 %v508
      %v682 = vunpack.c.l.b16 %v509
      %v683 = vunpack.c.l.b16 %v510
      %v684 = vunpack.c.l.b16 %v511
      %v685 = vunpack.c.l.b16 %v512
      %v686 = vunpack.c.l.b16 %v513
      %v687 = vunpack.c.l.b16 %v514
      %v688 = vunpack.c.l.b16 %v515
      %v689 = vunpack.c.l.b16 %v516
      %v690 = vunpack.c.l.b16 %v517
      %v691 = vunpack.c.l.b16 %v518
      %v692 = vunpack.c.l.b16 %v519
      %v693 = vunpack.c.l.b16 %v520
      %v694 = vunpack.c.l.b16 %v521
      %v695 = vunpack.c.l.b16 %v522
      %v696 = vunpack.c.l.b16 %v523
      %v697 = vunpack.c.l.b16 %v524
      %v698 = vunpack.c.l.b16 %v525
      %v699 = vunpack.c.l.b16 %v526
      %v700 = vunpack.c.l.b16 %v527
      %v701 = vunpack.c.l.b16 %v528
      %v702 = vunpack.c.l.b16 %v529
      %v703 = vunpack.c.l.b16 %v530
      %v704 = vunpack.c.l.b16 %v531
      %v705 = vunpack.c.l.b16 %v532
      %v706 = vunpack.c.l.b16 %v533
      %v707 = vunpack.c.l.b16 %v534
      %v708 = vunpack.c.l.b16 %v535
      %v709 = vunpack.c.l.b16 %v536
      %v710 = vunpack.c.l.b16 %v537
      %v711 = vunpack.c.l.b16 %v538
      %v712 = vunpack.c.l.b16 %v539
      %v713 = vunpack.c.l.b16 %v540
      %v714 = vunpack.c.l.b16 %v541
      %v715 = vunpack.c.l.b16 %v542
      %v716 = vunpack.c.l.b16 %v543
      %v717 = vunpack.c.l.b16 %v544
      %v718 = vunpack.c.l.b16 %v545
      %v719 = vunpack.c.l.b16 %v546
      %v720 = vunpack.c.l.b16 %v547
      %v721 = vunpack.c.l.b16 %v548
      %v722 = vunpack.c.l.b16 %v549
      %v723 = vunpack.c.l.b16 %v550
      %v724 = vunpack.c.l.b16 %v551
      %v725 = vunpack.c.l.b16 %v552
      %v726 = vunpack.c.l.b16 %v553
      %v727 = vunpack.c.l.b16 %v554
      %v728 = vunpack.c.l.b16 %v555
      %v729 = vunpack.c.l.b16 %v556
      %v730 = vunpack.c.l.b16 %v557
      %v731 = vunpack.c.l.b16 %v558
      %v732 = vunpack.c.l.b16 %v559
      %v733 = vunpack.c.l.b16 %v560
      %v734 = vunpack.c.l.b16 %v561
      %v735 = vunpack.c.l.b16 %v562
      %v736 = vunpack.c.l.b16 %v563
      %v737 = vunpack.c.l.b16 %v564
      %v738 = vunpack.c.l.b16 %v565
      %v739 = vunpack.c.l.b16 %v566
      %v740 = vunpack.c.l.b16 %v567
      %v741 = vunpack.c.l.b16 %v568
      %v742 = vunpack.c.l.b16 %v569
      %v743 = vunpack.c.l.b16 %v570
      %v744 = vunpack.c.l.b16 %v571
      %v745 = vunpack.c.l.b16 %v572
      %v746 = vunpack.c.l.b16 %v573
      %v747 = vunpack.c.l.b16 %v574
      %v748 = vunpack.c.l.b16 %v575
      %v749 = vunpack.c.l.b16 %v576
      %v750 = vunpack.c.l.b16 %v577
      %v751 = vunpack.c.l.b16 %v578
      %v752 = vunpack.c.l.b16 %v579
      %v753 = vunpack.c.l.b16 %v580
      %v754 = vunpack.c.l.b16 %v581
      %v755 = vpack.c.b16 %v682, %v681
      %v756 = vpack.c.b16 %v684, %v683
      %v757 = vpack.c.b16 %v686, %v685
      %v758 = vpack.c.b16 %v688, %v687
      %v759 = vpack.c.b16 %v690, %v689
      %v760 = vpack.c.b16 %v692, %v691
      %v761 = vpack.c.b16 %v694, %v693
      %v762 = vpack.c.b16 %v696, %v695
      %v763 = vpack.c.b16 %v698, %v697
      %v764 = vpack.c.b16 %v700, %v699
      %v765 = vpack.c.b16 %v702, %v701
      %v766 = vpack.c.b16 %v704, %v703
      %v767 = vpack.c.b16 %v706, %v705
      %v768 = vpack.c.b16 %v708, %v707
      %v769 = vpack.c.b16 %v710, %v709
      %v770 = vpack.c.b16 %v712, %v711
      %v771 = vpack.c.b16 %v714, %v713
      %v772 = vpack.c.b16 %v716, %v715
      %v773 = vpack.c.b16 %v718, %v717
      %v774 = vpack.c.b16 %v720, %v719
      %v775 = vpack.c.b16 %v722, %v721
      %v776 = vpack.c.b16 %v724, %v723
      %v777 = vpack.c.b16 %v726, %v725
      %v778 = vpack.c.b16 %v728, %v727
      %v779 = vpack.c.b16 %v730, %v729
      %v780 = vpack.c.b16 %v732, %v731
      %v781 = vpack.c.b16 %v734, %v733
      %v782 = vpack.c.b16 %v736, %v735
      %v783 = vpack.c.b16 %v738, %v737
      %v784 = vpack.c.b16 %v740, %v739
      %v785 = vpack.c.b16 %v742, %v741
      %v786 = vpack.c.b16 %v744, %v743
      %v787 = vpack.c.b16 %v746, %v745
      %v788 = vpack.c.b16 %v748, %v747
      %v789 = vpack.c.b16 %v750, %v749
      %v790 = vpack.c.b16 %v752, %v751
      %v791 = vpack.c.b16 %v754, %v753
      %vm828 = vcmask 621568
      %v830 = vsel %vm828, %v602, 0
      %vm832 = vcmask 1045504
      %v834 = vsel %vm832, %v791, 0
      %836 = vmatprep.subr.bf16.mxu0 0
      %837 = vmatpush1.bf16.msra.mxu0 %v755
      %838 = vmatprep.subr.bf16.mxu0 0
      %839 = vmatpush1.bf16.msra.mxu0 %v756
      %840 = vmatprep.subr.bf16.mxu0 0
      %841 = vmatpush1.bf16.msra.mxu0 %v757
      %842 = vmatprep.subr.bf16.mxu0 0
      %843 = vmatpush1.bf16.msra.mxu0 %v758
      %844 = vmatprep.subr.bf16.mxu0 0
      %845 = vmatpush1.bf16.msra.mxu0 %v759
      %846 = vmatprep.subr.bf16.mxu0 0
      %847 = vmatpush1.bf16.msra.mxu0 %v760
      %848 = vmatprep.subr.bf16.mxu0 0
      %849 = vmatpush1.bf16.msra.mxu0 %v761
      %850 = vmatprep.subr.bf16.mxu0 0
      %851 = vmatpush1.bf16.msra.mxu0 %v762
      %852 = vmatprep.subr.bf16.mxu0 0
      %853 = vmatpush1.bf16.msra.mxu0 %v763
      %854 = vmatprep.subr.bf16.mxu0 0
      %855 = vmatpush1.bf16.msra.mxu0 %v764
      %856 = vmatprep.subr.bf16.mxu0 0
      %857 = vmatpush1.bf16.msra.mxu0 %v765
      %858 = vmatprep.subr.bf16.mxu0 0
      %859 = vmatpush1.bf16.msra.mxu0 %v766
      %860 = vmatprep.subr.bf16.mxu0 0
      %861 = vmatpush1.bf16.msra.mxu0 %v767
      %862 = vmatprep.subr.bf16.mxu0 0
      %863 = vmatpush1.bf16.msra.mxu0 %v768
      %864 = vmatprep.subr.bf16.mxu0 0
      %865 = vmatpush1.bf16.msra.mxu0 %v769
      %866 = vmatprep.subr.bf16.mxu0 0
      %867 = vmatpush1.bf16.msra.mxu0 %v770
      %868 = vmatprep.mubr.bf16.mxu0 %v599
      %869 = vmatmul.mubr.bf16.gmra.mrb[0].mxu0 %v598
      %v870 = vpop.f32.mrb[0].mxu0
      %v871 = vadd.f32 0.0, %v870
      %v872 = vpop.f32.mrb[0].mxu0
      %v873 = vpop.f32.mrb[0].mxu0
      %v874 = vadd.f32 0.0, %v873
      %v875 = vpop.f32.mrb[0].mxu0
      %876 = vdwg.mxu0
      %877 = vmatprep.subr.bf16.mxu0 0
      %878 = vmatpush1.bf16.msra.mxu0 %v771
      %879 = vmatprep.subr.bf16.mxu0 0
      %880 = vmatpush1.bf16.msra.mxu0 %v772
      %881 = vmatprep.subr.bf16.mxu0 0
      %882 = vmatpush1.bf16.msra.mxu0 %v773
      %883 = vmatprep.subr.bf16.mxu0 0
      %884 = vmatpush1.bf16.msra.mxu0 %v774
      %885 = vmatprep.subr.bf16.mxu0 0
      %886 = vmatpush1.bf16.msra.mxu0 %v775
      %887 = vmatprep.subr.bf16.mxu0 0
      %888 = vmatpush1.bf16.msra.mxu0 %v776
      %889 = vmatprep.subr.bf16.mxu0 0
      %890 = vmatpush1.bf16.msra.mxu0 %v777
      %891 = vmatprep.subr.bf16.mxu0 0
      %892 = vmatpush1.bf16.msra.mxu0 %v778
      %893 = vmatprep.subr.bf16.mxu0 0
      %894 = vmatpush1.bf16.msra.mxu0 %v779
      %895 = vmatprep.subr.bf16.mxu0 0
      %896 = vmatpush1.bf16.msra.mxu0 %v780
      %897 = vmatprep.subr.bf16.mxu0 0
      %898 = vmatpush1.bf16.msra.mxu0 %v781
      %899 = vmatprep.subr.bf16.mxu0 0
      %900 = vmatpush1.bf16.msra.mxu0 %v782
      %901 = vmatprep.subr.bf16.mxu0 0
      %902 = vmatpush1.bf16.msra.mxu0 %v783
      %903 = vmatprep.subr.bf16.mxu0 0
      %904 = vmatpush1.bf16.msra.mxu0 %v784
      %905 = vmatprep.subr.bf16.mxu0 0
      %906 = vmatpush1.bf16.msra.mxu0 %v785
      %907 = vmatprep.subr.bf16.mxu0 0
      %908 = vmatpush1.bf16.msra.mxu0 %v786
      %909 = vmatprep.mubr.bf16.mxu0 %v601
      %910 = vmatmul.mubr.bf16.gmra.mrb[0].mxu0 %v600
      %v911 = vpop.f32.mrb[0].mxu0
      %v912 = vadd.f32 %v871, %v911
      %v913 = vpop.f32.mrb[0].mxu0
      %v914 = vpop.f32.mrb[0].mxu0
      %v915 = vadd.f32 %v874, %v914
      %v916 = vpop.f32.mrb[0].mxu0
      %917 = vdwg.mxu0
      %918 = vmatprep.subr.bf16.mxu0 0
      %919 = vmatpush1.bf16.msra.mxu0 %v787
      %920 = vmatprep.subr.bf16.mxu0 0
      %921 = vmatpush1.bf16.msra.mxu0 %v788
      %922 = vmatprep.subr.bf16.mxu0 0
      %923 = vmatpush1.bf16.msra.mxu0 %v789
      %924 = vmatprep.subr.bf16.mxu0 0
      %925 = vmatpush1.bf16.msra.mxu0 %v790
      %926 = vmatprep.subr.bf16.mxu0 0
      %927 = vmatpush1.bf16.msra.mxu0 %v834
      %928 = vmatprep.subr.bf16.mxu0 0
      %929 = vmatpush1.bf16.msra.mxu0 0
      %930 = vmatprep.subr.bf16.mxu0 0
      %931 = vmatpush1.bf16.msra.mxu0 0
      %932 = vmatprep.subr.bf16.mxu0 0
      %933 = vmatpush1.bf16.msra.mxu0 0
      %934 = vmatprep.subr.bf16.mxu0 0
      %935 = vmatpush1.bf16.msra.mxu0 0
      %936 = vmatprep.subr.bf16.mxu0 0
      %937 = vmatpush1.bf16.msra.mxu0 0
      %938 = vmatprep.subr.bf16.mxu0 0
      %939 = vmatpush1.bf16.msra.mxu0 0
      %940 = vmatprep.subr.bf16.mxu0 0
      %941 = vmatpush1.bf16.msra.mxu0 0
      %942 = vmatprep.subr.bf16.mxu0 0
      %943 = vmatpush1.bf16.msra.mxu0 0
      %944 = vmatprep.subr.bf16.mxu0 0
      %945 = vmatpush1.bf16.msra.mxu0 0
      %946 = vmatprep.subr.bf16.mxu0 0
      %947 = vmatpush1.bf16.msra.mxu0 0
      %948 = vmatprep.subr.bf16.mxu0 0
      %949 = vmatpush1.bf16.msra.mxu0 0
      %950 = vmatprep.mubr.bf16.mxu0 0
      %951 = vmatmul.mubr.bf16.gmra.mrb[0].mxu0 %v830
      %v952 = vpop.f32.mrb[0].mxu0
      %v953 = vadd.f32 %v912, %v952
      %v954 = vpop.f32.mrb[0].mxu0
      %v955 = vpop.f32.mrb[0].mxu0
      %v956 = vadd.f32 %v915, %v955
      %v957 = vpop.f32.mrb[0].mxu0
      %958 = vdwg.mxu0
      %v959 = vld [vmem:[%s2] sm:$0x1]
      %v960 = vld [vmem:[%s2 + $0x1] sm:$0xf]
      %vm961 = vcmask 253952
      %962 = vst.msk [vmem:[#allocation2] sm:$0x1] %vm961, %v959
      %v963 = vadd.f32 %v953, %v960
      %vm964 = vcmask 257024
      %965 = vst.msk [vmem:[#allocation2 + $0x1] sm:$0xf] %vm964, %v963
      %966 = vst.msk [vmem:[#allocation2 + $0x5] sm:$0x1] %vm961, %v959
      %v968 = vrot.slane %v960, 4
      %v970 = vadd.f32 %v953, %v968
      %vm971 = vcmask 261124
      %972 = vst.msk [vmem:[#allocation2 + $0x2] sm:$0xf0] %vm971, %v970
      %973 = vst.msk [vmem:[#allocation2 + $0xa] sm:$0x1] %vm961, %v959
      %v974 = vadd.f32 %v956, %v960
      %975 = vst.msk [vmem:[#allocation2 + $0xb] sm:$0xf] %vm964, %v974
      %976 = vst.msk [vmem:[#allocation2 + $0xf] sm:$0x1] %vm961, %v959
      %v977 = vadd.f32 %v956, %v968
      %978 = vst.msk [vmem:[#allocation2 + $0xc] sm:$0xf0] %vm971, %v977
      %v979 = vld [vmem:[#allocation2] sm:$0xff]
      %v980 = vld [vmem:[#allocation2 + $0x8] sm:$0xff]
      %v981 = vld [vmem:[#allocation2 + $0x10] sm:$0xf]
      %v982 = vld [vmem:[%s4] sm:$0x3]
      %vm983 = vcmask 261120
      %v984 = vsel %vm983, %v979, 0.0
      %985 = vadd.xlane.f32.xlu0 %v984
      %v986 = vpop.xlane.xlu0 %985
      %v987 = vsel %vm983, %v980, 0.0
      %988 = vadd.xlane.f32.xlu0 %v987
      %v989 = vpop.xlane.xlu0 %988
      %v990 = vsel %vm964, %v981, 0.0
      %991 = vadd.xlane.f32.xlu0 %v990
      %v992 = vpop.xlane.xlu0 %991
      %v993 = vrcp.pop 32.0
      %v994 = vmul.f32 %v986, %v993
      %v995 = vmul.f32 %v989, %v993
      %v996 = vmul.f32 %v992, %v993
      %v997 = vsub.f32 %v979, %v994
      %v998 = vsub.f32 %v980, %v995
      %v999 = vsub.f32 %v981, %v996
      %v1000 = vmul.f32 %v997, %v997
      %v1001 = vmul.f32 %v998, %v998
      %v1002 = vmul.f32 %v999, %v999
      %v1003 = vsel %vm983, %v1000, 0.0
      %1004 = vadd.xlane.f32.xlu0 %v1003
      %v1005 = vpop.xlane.xlu0 %1004
      %v1006 = vsel %vm983, %v1001, 0.0
      %1007 = vadd.xlane.f32.xlu0 %v1006
      %v1008 = vpop.xlane.xlu0 %1007
      %v1009 = vsel %vm964, %v1002, 0.0
      %1010 = vadd.xlane.f32.xlu0 %v1009
      %v1011 = vpop.xlane.xlu0 %1010
      %v1012 = vmul.f32 %v1005, %v993
      %v1013 = vmul.f32 %v1008, %v993
      %v1014 = vmul.f32 %v1011, %v993
      %v1015 = vadd.f32 %v1012, 1e-06
      %v1016 = vadd.f32 %v1013, 1e-06
      %v1017 = vadd.f32 %v1014, 1e-06
      %v1018 = vrsqrt.pop %v1015
      %v1019 = vrsqrt.pop %v1016
      %v1020 = vrsqrt.pop %v1017
      %v1021 = vmul.f32 %v997, %v1018
      %v1022 = vmul.f32 %v998, %v1019
      %v1023 = vmul.f32 %v999, %v1020
      %v1024 = vlaneseq
      %v1025 = vshrl.u32 %v1024, 7
      %v1026 = vsub.s32 0, %v1025
      %v1027 = vrot.slane %v982, %v1026
      %v1028 = vmul.f32 %v1021, %v1027
      %v1029 = vmul.f32 %v1022, %v1027
      %v1030 = vmul.f32 %v1023, %v1027
      %v1031 = vlaneseq
      %v1032 = vshrl.u32 %v1031, 7
      %v1033 = vsub.s32 1, %v1032
      %v1034 = vrot.slane %v982, %v1033
      %v1035 = vadd.f32 %v1028, %v1034
      %v1036 = vadd.f32 %v1029, %v1034
      %v1037 = vadd.f32 %v1030, %v1034
      %v1038 = vpack.c.bf16 %v1036, %v1035
      %v1039 = vpack.c.bf16 %v1037, %v1037
      %v1040 = vld [vmem:[%s5] sm:$0xf]
      %v1041 = vld [vmem:[%s5 + $0x4] sm:$0xf]
      %v1042 = vld [vmem:[%s5 + $0x8] sm:$0xf]
      %v1043 = vld [vmem:[%s5 + $0xc] sm:$0xf]
      %v1044 = vld [vmem:[%s6] sm:$0x1]
      %v1046 = vlaneseq
      %v1047 = vshrl.u32 %v1046, 7
      %v1048 = vsub.s32 0, %v1047
      %v1049 = vrot.slane %v1044, %v1048
      %v1055 = vunpack.c.l.b16 %v1040
      %v1056 = vunpack.c.l.b16 %v1041
      %v1057 = vunpack.c.l.b16 %v1042
      %v1058 = vunpack.c.l.b16 %v1043
      %v1059 = vpack.c.b16 %v1056, %v1055
      %v1060 = vpack.c.b16 %v1058, %v1057
      %v1064 = vsel %vm983, %v1038, 0
      %v1067 = vsel %vm983, %v1039, 0
      %1069 = vmatprep.subr.bf16.mxu0 0
      %1070 = vmatpush1.bf16.msra.mxu0 %v1059
      %1071 = vmatprep.subr.bf16.mxu0 0
      %1072 = vmatpush1.bf16.msra.mxu0 %v1060
      %1073 = vmatprep.subr.bf16.mxu0 0
      %1074 = vmatpush1.bf16.msra.mxu0 0
      %1075 = vmatprep.subr.bf16.mxu0 0
      %1076 = vmatpush1.bf16.msra.mxu0 0
      %1077 = vmatprep.subr.bf16.mxu0 0
      %1078 = vmatpush1.bf16.msra.mxu0 0
      %1079 = vmatprep.subr.bf16.mxu0 0
      %1080 = vmatpush1.bf16.msra.mxu0 0
      %1081 = vmatprep.subr.bf16.mxu0 0
      %1082 = vmatpush1.bf16.msra.mxu0 0
      %1083 = vmatprep.subr.bf16.mxu0 0
      %1084 = vmatpush1.bf16.msra.mxu0 0
      %1085 = vmatprep.subr.bf16.mxu0 0
      %1086 = vmatpush1.bf16.msra.mxu0 0
      %1087 = vmatprep.subr.bf16.mxu0 0
      %1088 = vmatpush1.bf16.msra.mxu0 0
      %1089 = vmatprep.subr.bf16.mxu0 0
      %1090 = vmatpush1.bf16.msra.mxu0 0
      %1091 = vmatprep.subr.bf16.mxu0 0
      %1092 = vmatpush1.bf16.msra.mxu0 0
      %1093 = vmatprep.subr.bf16.mxu0 0
      %1094 = vmatpush1.bf16.msra.mxu0 0
      %1095 = vmatprep.subr.bf16.mxu0 0
      %1096 = vmatpush1.bf16.msra.mxu0 0
      %1097 = vmatprep.subr.bf16.mxu0 0
      %1098 = vmatpush1.bf16.msra.mxu0 0
      %1099 = vmatprep.subr.bf16.mxu0 0
      %1100 = vmatpush1.bf16.msra.mxu0 0
      %1101 = vmatprep.mubr.bf16.mxu0 0
      %1102 = vmatmul.mubr.bf16.gmra.mrb[0].mxu0 %v1064
      %v1103 = vpop.f32.mrb[0].mxu0
      %v1104 = vadd.f32 %v1049, %v1103
      %v1105 = vpop.f32.mrb[0].mxu0
      %v1106 = vpop.f32.mrb[0].mxu0
      %v1107 = vadd.f32 %v1049, %v1106
      %v1108 = vpop.f32.mrb[0].mxu0
      %1109 = vmatprep.mubr.bf16.mxu0 0
      %1110 = vmatmul.mubr.bf16.gmra.mrb[0].mxu0 %v1067
      %v1111 = vpop.f32.mrb[0].mxu0
      %v1112 = vadd.f32 %v1049, %v1111
      %v1113 = vpop.f32.mrb[0].mxu0
      %v1114 = vpop.f32.mrb[0].mxu0
      %v1115 = vpop.f32.mrb[0].mxu0
      %1116 = vdwg.mxu0
      %v1117 = vld [vmem:[%s3] sm:$0xff]
      %v1118 = vld [vmem:[%s3 + $0x8] sm:$0xff]
      %v1119 = vld [vmem:[%s3 + $0x10] sm:$0xf]
      %1123 = vrot.lane.b32.xlu0 %v1104, 96
      %v1124 = vpop.permute.xlu0 %1123
      %1125 = vrot.lane.b32.xlu0 %v1107, 96
      %v1126 = vpop.permute.xlu0 %1125
      %1127 = vrot.lane.b32.xlu0 %v1112, 96
      %v1128 = vpop.permute.xlu0 %1127
      %vm1129 = vcmask 130048
      %v1130 = vsel %vm1129, %v1104, 0
      %v1132 = vsel %vm1129, %v1107, 0
      %v1134 = vsel %vm1129, %v1112, 0
      %v1136 = vsel %vm1129, %v1124, 0
      %v1138 = vsel %vm1129, %v1126, 0
      %v1140 = vsel %vm1129, %v1128, 0
      %1142 = vmatprep.subr.mxu0 0.0
      %1143 = vmatpush1.xpose.msra.mxu0 %v1136
      %1144 = vmatprep.subr.mxu0 0.0
      %1145 = vmatpush1.xpose.msra.mxu0 %v1138
      %1146 = vmatprep.subr.mxu0 0.0
      %1147 = vmatpush1.xpose.msra.mxu0 %v1140
      %1148 = vmatprep.subr.mxu0 0.0
      %1149 = vmatpush1.xpose.msra.mxu0 0.0
      %1150 = vmatprep.subr.mxu0 0.0
      %1151 = vmatpush1.xpose.msra.mxu0 0.0
      %1152 = vmatprep.subr.mxu0 0.0
      %1153 = vmatpush1.xpose.msra.mxu0 0.0
      %1154 = vmatprep.subr.mxu0 0.0
      %1155 = vmatpush1.xpose.msra.mxu0 0.0
      %1156 = vmatprep.subr.mxu0 0.0
      %1157 = vmatpush1.xpose.msra.mxu0 0.0
      %1158 = vmatprep.subr.mxu0 0.0
      %1159 = vmatpush1.xpose.msra.mxu0 0.0
      %1160 = vmatprep.subr.mxu0 0.0
      %1161 = vmatpush1.xpose.msra.mxu0 0.0
      %1162 = vmatprep.subr.mxu0 0.0
      %1163 = vmatpush1.xpose.msra.mxu0 0.0
      %1164 = vmatprep.subr.mxu0 0.0
      %1165 = vmatpush1.xpose.msra.mxu0 0.0
      %1166 = vmatprep.subr.mxu0 0.0
      %1167 = vmatpush1.xpose.msra.mxu0 0.0
      %1168 = vmatprep.subr.mxu0 0.0
      %1169 = vmatpush1.xpose.msra.mxu0 0.0
      %1170 = vmatprep.subr.mxu0 0.0
      %1171 = vmatpush1.xpose.msra.mxu0 0.0
      %1172 = vmatprep.subr.mxu0 0.0
      %1173 = vmatpush1.xpose.msra.mxu0 0.0
      %1174 = vmatprep.subr.mxu0 0.0
      %1175 = vmatpush1.xpose.msra.mxu0 0.0
      %1176 = vmatprep.subr.mxu0 0.0
      %1177 = vmatpush1.xpose.msra.mxu0 0.0
      %1178 = vmatprep.subr.mxu0 0.0
      %1179 = vmatpush1.xpose.msra.mxu0 0.0
      %1180 = vmatprep.subr.mxu0 0.0
      %1181 = vmatpush1.xpose.msra.mxu0 0.0
      %1182 = vmatprep.subr.mxu0 0.0
      %1183 = vmatpush1.xpose.msra.mxu0 0.0
      %1184 = vmatprep.subr.mxu0 0.0
      %1185 = vmatpush1.xpose.msra.mxu0 0.0
      %1186 = vmatprep.subr.mxu0 0.0
      %1187 = vmatpush1.xpose.msra.mxu0 0.0
      %1188 = vmatprep.subr.mxu0 0.0
      %1189 = vmatpush1.xpose.msra.mxu0 0.0
      %1190 = vmatprep.subr.mxu0 0.0
      %1191 = vmatpush1.xpose.msra.mxu0 0.0
      %1192 = vmatprep.subr.mxu0 0.0
      %1193 = vmatpush1.xpose.msra.mxu0 0.0
      %1194 = vmatprep.subr.mxu0 0.0
      %1195 = vmatpush1.xpose.msra.mxu0 0.0
      %1196 = vmatprep.subr.mxu0 0.0
      %1197 = vmatpush1.xpose.msra.mxu0 0.0
      %1198 = vmatprep.subr.mxu0 0.0
      %1199 = vmatpush1.xpose.msra.mxu0 0.0
      %1200 = vmatprep.subr.mxu0 0.0
      %1201 = vmatpush1.xpose.msra.mxu0 0.0
      %1202 = vmatprep.subr.mxu0 0.0
      %1203 = vmatpush1.xpose.msra.mxu0 0.0
      %1204 = vmatprep.subr.mxu0 0.0
      %1205 = vmatpush1.xpose.msra.mxu0 0.0
      %1206 = vmatprep.mubr.f32.mxu0 0.0
      %1207 = vmatmul.mubr.f32.gmra.mrb[0].mxu0 %v1130
      %v1208 = vpop.f32.mrb[0].mxu0
      %v1209 = vadd.f32 %v1117, %v1208
      %v1210 = vpop.f32.mrb[0].mxu0
      %1211 = vmatprep.mubr.f32.mxu0 0.0
      %1212 = vmatmul.mubr.f32.gmra.mrb[0].mxu0 %v1132
      %v1213 = vpop.f32.mrb[0].mxu0
      %v1214 = vadd.f32 %v1118, %v1213
      %v1215 = vpop.f32.mrb[0].mxu0
      %1216 = vmatprep.mubr.f32.mxu0 0.0
      %1217 = vmatmul.mubr.f32.gmra.mrb[0].mxu0 %v1134
      %v1218 = vpop.f32.mrb[0].mxu0
      %v1219 = vadd.f32 %v1119, %v1218
      %v1220 = vpop.f32.mrb[0].mxu0
      %1221 = vdwg.mxu0
      %vm1222 = vcmask 162816
      %v1223 = vsel %vm1222, %v1209, -inf
      %1224 = vmax.xlane.f32.xlu0 %v1223
      %v1225 = vpop.xlane.xlu0 %1224
      %v1226 = vsel %vm1222, %v1214, -inf
      %1227 = vmax.xlane.f32.xlu0 %v1226
      %v1228 = vpop.xlane.xlu0 %1227
      %vm1229 = vcmask 158720
      %v1230 = vsel %vm1229, %v1219, -inf
      %1231 = vmax.xlane.f32.xlu0 %v1230
      %v1232 = vpop.xlane.xlu0 %1231
      %v1233 = vsub.f32 %v1209, %v1225
      %v1234 = vsub.f32 %v1214, %v1228
      %v1235 = vsub.f32 %v1219, %v1232
      %v1236 = vmul.f32 %v1233, 1.442695
      %v1237 = vpow.pop %v1236
      %v1238 = vmul.f32 %v1234, 1.442695
      %v1239 = vpow.pop %v1238
      %v1240 = vmul.f32 %v1235, 1.442695
      %v1241 = vpow.pop %v1240
      %v1242 = vsel %vm1222, %v1237, 0.0
      %1243 = vadd.xlane.f32.xlu0 %v1242
      %v1244 = vpop.xlane.xlu0 %1243
      %v1245 = vsel %vm1222, %v1239, 0.0
      %1246 = vadd.xlane.f32.xlu0 %v1245
      %v1247 = vpop.xlane.xlu0 %1246
      %v1248 = vsel %vm1229, %v1241, 0.0
      %1249 = vadd.xlane.f32.xlu0 %v1248
      %v1250 = vpop.xlane.xlu0 %1249
      %v1251 = vrcp.pop %v1244
      %v1252 = vrcp.pop %v1247
      %v1253 = vrcp.pop %v1250
      %v1254 = vmul.f32 %v1237, %v1251
      %v1255 = vmul.f32 %v1239, %v1252
      %v1256 = vmul.f32 %v1241, %v1253
      %1257 = vrot.lane.b32.xlu0 %v1104, 64
      %v1258 = vpop.permute.xlu0 %1257
      %1259 = vrot.lane.b32.xlu0 %v1107, 64
      %v1260 = vpop.permute.xlu0 %1259
      %1261 = vrot.lane.b32.xlu0 %v1112, 64
      %v1262 = vpop.permute.xlu0 %1261
      %v1266 = vsel %vm1222, %v1254, 0
      %v1269 = vsel %vm1222, %v1255, 0
      %v1272 = vsel %vm1222, %v1256, 0
      %vm1274 = vcmask 1043456
      %v1275 = vsel %vm1274, %v1262, 0
      %1277 = vmatprep.subr.mxu0 0.0
      %1278 = vmatpush1.msra.mxu0 %v1258
      %1279 = vmatprep.subr.mxu0 0.0
      %1280 = vmatpush1.msra.mxu0 %v1260
      %1281 = vmatprep.subr.mxu0 0.0
      %1282 = vmatpush1.msra.mxu0 %v1275
      %1283 = vmatprep.subr.mxu0 0.0
      %1284 = vmatpush1.msra.mxu0 0.0
      %1285 = vmatprep.subr.mxu0 0.0
      %1286 = vmatpush1.msra.mxu0 0.0
      %1287 = vmatprep.subr.mxu0 0.0
      %1288 = vmatpush1.msra.mxu0 0.0
      %1289 = vmatprep.subr.mxu0 0.0
      %1290 = vmatpush1.msra.mxu0 0.0
      %1291 = vmatprep.subr.mxu0 0.0
      %1292 = vmatpush1.msra.mxu0 0.0
      %1293 = vmatprep.subr.mxu0 0.0
      %1294 = vmatpush1.msra.mxu0 0.0
      %1295 = vmatprep.subr.mxu0 0.0
      %1296 = vmatpush1.msra.mxu0 0.0
      %1297 = vmatprep.subr.mxu0 0.0
      %1298 = vmatpush1.msra.mxu0 0.0
      %1299 = vmatprep.subr.mxu0 0.0
      %1300 = vmatpush1.msra.mxu0 0.0
      %1301 = vmatprep.subr.mxu0 0.0
      %1302 = vmatpush1.msra.mxu0 0.0
      %1303 = vmatprep.subr.mxu0 0.0
      %1304 = vmatpush1.msra.mxu0 0.0
      %1305 = vmatprep.subr.mxu0 0.0
      %1306 = vmatpush1.msra.mxu0 0.0
      %1307 = vmatprep.subr.mxu0 0.0
      %1308 = vmatpush1.msra.mxu0 0.0
      %1309 = vmatprep.subr.mxu0 0.0
      %1310 = vmatpush1.msra.mxu0 0.0
      %1311 = vmatprep.subr.mxu0 0.0
      %1312 = vmatpush1.msra.mxu0 0.0
      %1313 = vmatprep.subr.mxu0 0.0
      %1314 = vmatpush1.msra.mxu0 0.0
      %1315 = vmatprep.subr.mxu0 0.0
      %1316 = vmatpush1.msra.mxu0 0.0
      %1317 = vmatprep.subr.mxu0 0.0
      %1318 = vmatpush1.msra.mxu0 0.0
      %1319 = vmatprep.subr.mxu0 0.0
      %1320 = vmatpush1.msra.mxu0 0.0
      %1321 = vmatprep.subr.mxu0 0.0
      %1322 = vmatpush1.msra.mxu0 0.0
      %1323 = vmatprep.subr.mxu0 0.0
      %1324 = vmatpush1.msra.mxu0 0.0
      %1325 = vmatprep.subr.mxu0 0.0
      %1326 = vmatpush1.msra.mxu0 0.0
      %1327 = vmatprep.subr.mxu0 0.0
      %1328 = vmatpush1.msra.mxu0 0.0
      %1329 = vmatprep.subr.mxu0 0.0
      %1330 = vmatpush1.msra.mxu0 0.0
      %1331 = vmatprep.subr.mxu0 0.0
      %1332 = vmatpush1.msra.mxu0 0.0
      %1333 = vmatprep.subr.mxu0 0.0
      %1334 = vmatpush1.msra.mxu0 0.0
      %1335 = vmatprep.subr.mxu0 0.0
      %1336 = vmatpush1.msra.mxu0 0.0
      %1337 = vmatprep.subr.mxu0 0.0
      %1338 = vmatpush1.msra.mxu0 0.0
      %1339 = vmatprep.subr.mxu0 0.0
      %1340 = vmatpush1.msra.mxu0 0.0
      %1341 = vmatprep.mubr.f32.mxu0 0.0
      %1342 = vmatmul.mubr.f32.gmra.mrb[0].mxu0 %v1266
      %v1343 = vpop.f32.mrb[0].mxu0
      %v1344 = vadd.f32 0.0, %v1343
      %v1345 = vpop.f32.mrb[0].mxu0
      %1346 = vmatprep.mubr.f32.mxu0 0.0
      %1347 = vmatmul.mubr.f32.gmra.mrb[0].mxu0 %v1269
      %v1348 = vpop.f32.mrb[0].mxu0
      %v1349 = vadd.f32 0.0, %v1348
      %v1350 = vpop.f32.mrb[0].mxu0
      %1351 = vmatprep.mubr.f32.mxu0 0.0
      %1352 = vmatmul.mubr.f32.gmra.mrb[0].mxu0 %v1272
      %v1353 = vpop.f32.mrb[0].mxu0
      %v1354 = vadd.f32 0.0, %v1353
      %v1355 = vpop.f32.mrb[0].mxu0
      %1356 = vdwg.mxu0
      %1357 = vst.msk [vmem:[#allocation2] sm:$0xff] %vm1129, %v1344
      %1358 = vst.msk [vmem:[#allocation2 + $0x8] sm:$0xff] %vm1129, %v1349
      %vm1359 = vcmask 125952
      %1360 = vst.msk [vmem:[#allocation2 + $0x10] sm:$0xf] %vm1359, %v1354
      %v1361 = vld [vmem:[%s3] sm:$0xff]
      %v1362 = vld [vmem:[%s3 + $0x8] sm:$0xff]
      %v1363 = vld [vmem:[%s3 + $0x10] sm:$0xf]
      %1364 = vrot.lane.b32.xlu0 %v1104, 112
      %v1365 = vpop.permute.xlu0 %1364
      %1366 = vrot.lane.b32.xlu0 %v1107, 112
      %v1367 = vpop.permute.xlu0 %1366
      %1368 = vrot.lane.b32.xlu0 %v1112, 112
      %v1369 = vpop.permute.xlu0 %1368
      %1370 = vrot.lane.b32.xlu0 %v1104, 80
      %v1371 = vpop.permute.xlu0 %1370
      %1372 = vrot.lane.b32.xlu0 %v1107, 80
      %v1373 = vpop.permute.xlu0 %1372
      %1374 = vrot.lane.b32.xlu0 %v1112, 80
      %v1375 = vpop.permute.xlu0 %1374
      %v1376 = vsel %vm1129, %v1365, 0
      %v1378 = vsel %vm1129, %v1367, 0
      %v1380 = vsel %vm1129, %v1369, 0
      %v1382 = vsel %vm1129, %v1371, 0
      %v1384 = vsel %vm1129, %v1373, 0
      %v1386 = vsel %vm1129, %v1375, 0
      %1388 = vmatprep.subr.mxu0 0.0
      %1389 = vmatpush1.xpose.msra.mxu0 %v1382
      %1390 = vmatprep.subr.mxu0 0.0
      %1391 = vmatpush1.xpose.msra.mxu0 %v1384
      %1392 = vmatprep.subr.mxu0 0.0
      %1393 = vmatpush1.xpose.msra.mxu0 %v1386
      %1394 = vmatprep.subr.mxu0 0.0
      %1395 = vmatpush1.xpose.msra.mxu0 0.0
      %1396 = vmatprep.subr.mxu0 0.0
      %1397 = vmatpush1.xpose.msra.mxu0 0.0
      %1398 = vmatprep.subr.mxu0 0.0
      %1399 = vmatpush1.xpose.msra.mxu0 0.0
      %1400 = vmatprep.subr.mxu0 0.0
      %1401 = vmatpush1.xpose.msra.mxu0 0.0
      %1402 = vmatprep.subr.mxu0 0.0
      %1403 = vmatpush1.xpose.msra.mxu0 0.0
      %1404 = vmatprep.subr.mxu0 0.0
      %1405 = vmatpush1.xpose.msra.mxu0 0.0
      %1406 = vmatprep.subr.mxu0 0.0
      %1407 = vmatpush1.xpose.msra.mxu0 0.0
      %1408 = vmatprep.subr.mxu0 0.0
      %1409 = vmatpush1.xpose.msra.mxu0 0.0
      %1410 = vmatprep.subr.mxu0 0.0
      %1411 = vmatpush1.xpose.msra.mxu0 0.0
      %1412 = vmatprep.subr.mxu0 0.0
      %1413 = vmatpush1.xpose.msra.mxu0 0.0
      %1414 = vmatprep.subr.mxu0 0.0
      %1415 = vmatpush1.xpose.msra.mxu0 0.0
      %1416 = vmatprep.subr.mxu0 0.0
      %1417 = vmatpush1.xpose.msra.mxu0 0.0
      %1418 = vmatprep.subr.mxu0 0.0
      %1419 = vmatpush1.xpose.msra.mxu0 0.0
      %1420 = vmatprep.subr.mxu0 0.0
      %1421 = vmatpush1.xpose.msra.mxu0 0.0
      %1422 = vmatprep.subr.mxu0 0.0
      %1423 = vmatpush1.xpose.msra.mxu0 0.0
      %1424 = vmatprep.subr.mxu0 0.0
      %1425 = vmatpush1.xpose.msra.mxu0 0.0
      %1426 = vmatprep.subr.mxu0 0.0
      %1427 = vmatpush1.xpose.msra.mxu0 0.0
      %1428 = vmatprep.subr.mxu0 0.0
      %1429 = vmatpush1.xpose.msra.mxu0 0.0
      %1430 = vmatprep.subr.mxu0 0.0
      %1431 = vmatpush1.xpose.msra.mxu0 0.0
      %1432 = vmatprep.subr.mxu0 0.0
      %1433 = vmatpush1.xpose.msra.mxu0 0.0
      %1434 = vmatprep.subr.mxu0 0.0
      %1435 = vmatpush1.xpose.msra.mxu0 0.0
      %1436 = vmatprep.subr.mxu0 0.0
      %1437 = vmatpush1.xpose.msra.mxu0 0.0
      %1438 = vmatprep.subr.mxu0 0.0
      %1439 = vmatpush1.xpose.msra.mxu0 0.0
      %1440 = vmatprep.subr.mxu0 0.0
      %1441 = vmatpush1.xpose.msra.mxu0 0.0
      %1442 = vmatprep.subr.mxu0 0.0
      %1443 = vmatpush1.xpose.msra.mxu0 0.0
      %1444 = vmatprep.subr.mxu0 0.0
      %1445 = vmatpush1.xpose.msra.mxu0 0.0
      %1446 = vmatprep.subr.mxu0 0.0
      %1447 = vmatpush1.xpose.msra.mxu0 0.0
      %1448 = vmatprep.subr.mxu0 0.0
      %1449 = vmatpush1.xpose.msra.mxu0 0.0
      %1450 = vmatprep.subr.mxu0 0.0
      %1451 = vmatpush1.xpose.msra.mxu0 0.0
      %1452 = vmatprep.mubr.f32.mxu0 0.0
      %1453 = vmatmul.mubr.f32.gmra.mrb[0].mxu0 %v1376
      %v1454 = vpop.f32.mrb[0].mxu0
      %v1455 = vadd.f32 %v1361, %v1454
      %v1456 = vpop.f32.mrb[0].mxu0
      %1457 = vmatprep.mubr.f32.mxu0 0.0
      %1458 = vmatmul.mubr.f32.gmra.mrb[0].mxu0 %v1378
      %v1459 = vpop.f32.mrb[0].mxu0
      %v1460 = vadd.f32 %v1362, %v1459
      %v1461 = vpop.f32.mrb[0].mxu0
      %1462 = vmatprep.mubr.f32.mxu0 0.0
      %1463 = vmatmul.mubr.f32.gmra.mrb[0].mxu0 %v1380
      %v1464 = vpop.f32.mrb[0].mxu0
      %v1465 = vadd.f32 %v1363, %v1464
      %v1466 = vpop.f32.mrb[0].mxu0
      %1467 = vdwg.mxu0
      %v1468 = vsel %vm1222, %v1455, -inf
      %1469 = vmax.xlane.f32.xlu0 %v1468
      %v1470 = vpop.xlane.xlu0 %1469
      %v1471 = vsel %vm1222, %v1460, -inf
      %1472 = vmax.xlane.f32.xlu0 %v1471
      %v1473 = vpop.xlane.xlu0 %1472
      %v1474 = vsel %vm1229, %v1465, -inf
      %1475 = vmax.xlane.f32.xlu0 %v1474
      %v1476 = vpop.xlane.xlu0 %1475
      %v1477 = vsub.f32 %v1455, %v1470
      %v1478 = vsub.f32 %v1460, %v1473
      %v1479 = vsub.f32 %v1465, %v1476
      %v1480 = vmul.f32 %v1477, 1.442695
      %v1481 = vpow.pop %v1480
      %v1482 = vmul.f32 %v1478, 1.442695
      %v1483 = vpow.pop %v1482
      %v1484 = vmul.f32 %v1479, 1.442695
      %v1485 = vpow.pop %v1484
      %v1486 = vsel %vm1222, %v1481, 0.0
      %1487 = vadd.xlane.f32.xlu0 %v1486
      %v1488 = vpop.xlane.xlu0 %1487
      %v1489 = vsel %vm1222, %v1483, 0.0
      %1490 = vadd.xlane.f32.xlu0 %v1489
      %v1491 = vpop.xlane.xlu0 %1490
      %v1492 = vsel %vm1229, %v1485, 0.0
      %1493 = vadd.xlane.f32.xlu0 %v1492
      %v1494 = vpop.xlane.xlu0 %1493
      %v1495 = vrcp.pop %v1488
      %v1496 = vrcp.pop %v1491
      %v1497 = vrcp.pop %v1494
      %v1498 = vmul.f32 %v1481, %v1495
      %v1499 = vmul.f32 %v1483, %v1496
      %v1500 = vmul.f32 %v1485, %v1497
      %1501 = vrot.lane.b32.xlu0 %v1104, 48
      %v1502 = vpop.permute.xlu0 %1501
      %1503 = vrot.lane.b32.xlu0 %v1107, 48
      %v1504 = vpop.permute.xlu0 %1503
      %1505 = vrot.lane.b32.xlu0 %v1112, 48
      %v1506 = vpop.permute.xlu0 %1505
      %v1510 = vsel %vm1222, %v1498, 0
      %v1513 = vsel %vm1222, %v1499, 0
      %v1516 = vsel %vm1222, %v1500, 0
      %v1518 = vsel %vm1274, %v1506, 0
      %1520 = vmatprep.subr.mxu0 0.0
      %1521 = vmatpush1.msra.mxu0 %v1502
      %1522 = vmatprep.subr.mxu0 0.0
      %1523 = vmatpush1.msra.mxu0 %v1504
      %1524 = vmatprep.subr.mxu0 0.0
      %1525 = vmatpush1.msra.mxu0 %v1518
      %1526 = vmatprep.subr.mxu0 0.0
      %1527 = vmatpush1.msra.mxu0 0.0
      %1528 = vmatprep.subr.mxu0 0.0
      %1529 = vmatpush1.msra.mxu0 0.0
      %1530 = vmatprep.subr.mxu0 0.0
      %1531 = vmatpush1.msra.mxu0 0.0
      %1532 = vmatprep.subr.mxu0 0.0
      %1533 = vmatpush1.msra.mxu0 0.0
      %1534 = vmatprep.subr.mxu0 0.0
      %1535 = vmatpush1.msra.mxu0 0.0
      %1536 = vmatprep.subr.mxu0 0.0
      %1537 = vmatpush1.msra.mxu0 0.0
      %1538 = vmatprep.subr.mxu0 0.0
      %1539 = vmatpush1.msra.mxu0 0.0
      %1540 = vmatprep.subr.mxu0 0.0
      %1541 = vmatpush1.msra.mxu0 0.0
      %1542 = vmatprep.subr.mxu0 0.0
      %1543 = vmatpush1.msra.mxu0 0.0
      %1544 = vmatprep.subr.mxu0 0.0
      %1545 = vmatpush1.msra.mxu0 0.0
      %1546 = vmatprep.subr.mxu0 0.0
      %1547 = vmatpush1.msra.mxu0 0.0
      %1548 = vmatprep.subr.mxu0 0.0
      %1549 = vmatpush1.msra.mxu0 0.0
      %1550 = vmatprep.subr.mxu0 0.0
      %1551 = vmatpush1.msra.mxu0 0.0
      %1552 = vmatprep.subr.mxu0 0.0
      %1553 = vmatpush1.msra.mxu0 0.0
      %1554 = vmatprep.subr.mxu0 0.0
      %1555 = vmatpush1.msra.mxu0 0.0
      %1556 = vmatprep.subr.mxu0 0.0
      %1557 = vmatpush1.msra.mxu0 0.0
      %1558 = vmatprep.subr.mxu0 0.0
      %1559 = vmatpush1.msra.mxu0 0.0
      %1560 = vmatprep.subr.mxu0 0.0
      %1561 = vmatpush1.msra.mxu0 0.0
      %1562 = vmatprep.subr.mxu0 0.0
      %1563 = vmatpush1.msra.mxu0 0.0
      %1564 = vmatprep.subr.mxu0 0.0
      %1565 = vmatpush1.msra.mxu0 0.0
      %1566 = vmatprep.subr.mxu0 0.0
      %1567 = vmatpush1.msra.mxu0 0.0
      %1568 = vmatprep.subr.mxu0 0.0
      %1569 = vmatpush1.msra.mxu0 0.0
      %1570 = vmatprep.subr.mxu0 0.0
      %1571 = vmatpush1.msra.mxu0 0.0
      %1572 = vmatprep.subr.mxu0 0.0
      %1573 = vmatpush1.msra.mxu0 0.0
      %1574 = vmatprep.subr.mxu0 0.0
      %1575 = vmatpush1.msra.mxu0 0.0
      %1576 = vmatprep.subr.mxu0 0.0
      %1577 = vmatpush1.msra.mxu0 0.0
      %1578 = vmatprep.subr.mxu0 0.0
      %1579 = vmatpush1.msra.mxu0 0.0
      %1580 = vmatprep.subr.mxu0 0.0
      %1581 = vmatpush1.msra.mxu0 0.0
      %1582 = vmatprep.subr.mxu0 0.0
      %1583 = vmatpush1.msra.mxu0 0.0
      %1584 = vmatprep.mubr.f32.mxu0 0.0
      %1585 = vmatmul.mubr.f32.gmra.mrb[0].mxu0 %v1510
      %v1586 = vpop.f32.mrb[0].mxu0
      %v1587 = vadd.f32 0.0, %v1586
      %v1588 = vpop.f32.mrb[0].mxu0
      %1589 = vmatprep.mubr.f32.mxu0 0.0
      %1590 = vmatmul.mubr.f32.gmra.mrb[0].mxu0 %v1513
      %v1591 = vpop.f32.mrb[0].mxu0
      %v1592 = vadd.f32 0.0, %v1591
      %v1593 = vpop.f32.mrb[0].mxu0
      %1594 = vmatprep.mubr.f32.mxu0 0.0
      %1595 = vmatmul.mubr.f32.gmra.mrb[0].mxu0 %v1516
      %v1596 = vpop.f32.mrb[0].mxu0
      %v1597 = vadd.f32 0.0, %v1596
      %v1598 = vpop.f32.mrb[0].mxu0
      %1599 = vdwg.mxu0
      %1603 = vrot.lane.b32.xlu0 %v1587, 16
      %v1604 = vpop.permute.xlu0 %1603
      %1605 = vrot.lane.b32.xlu0 %v1592, 16
      %v1606 = vpop.permute.xlu0 %1605
      %1607 = vrot.lane.b32.xlu0 %v1597, 16
      %v1608 = vpop.permute.xlu0 %1607
      %vm1612 = vcmask 261248
      %1613 = vst.msk [vmem:[#allocation2] sm:$0xff] %vm1612, %v1604
      %1614 = vst.msk [vmem:[#allocation2 + $0x8] sm:$0xff] %vm1612, %v1606
      %vm1615 = vcmask 257152
      %1616 = vst.msk [vmem:[#allocation2 + $0x10] sm:$0xf] %vm1615, %v1608
      %v1617 = vld [vmem:[#allocation2] sm:$0xff]
      %v1618 = vld [vmem:[#allocation2 + $0x8] sm:$0xff]
      %v1619 = vld [vmem:[#allocation2 + $0x10] sm:$0xf]
      %v1620 = vpack.c.bf16 %v1618, %v1617
      %v1621 = vpack.c.bf16 %v1619, %v1619
      %v1622 = vld [vmem:[%s7] sm:$0xf]
      %v1623 = vld [vmem:[%s7 + $0x4] sm:$0xf]
      %v1624 = vld [vmem:[%s7 + $0x8] sm:$0xf]
      %v1625 = vld [vmem:[%s7 + $0xc] sm:$0xf]
      %v1630 = vunpack.c.l.b16 %v1622
      %v1631 = vunpack.c.l.b16 %v1623
      %v1632 = vunpack.c.l.b16 %v1624
      %v1633 = vunpack.c.l.b16 %v1625
      %v1634 = vpack.c.b16 %v1631, %v1630
      %v1635 = vpack.c.b16 %v1633, %v1632
      %v1639 = vsel %vm983, %v1620, 0
      %v1642 = vsel %vm983, %v1621, 0
      %1644 = vmatprep.subr.bf16.mxu0 0
      %1645 = vmatpush1.bf16.msra.mxu0 %v1634
      %1646 = vmatprep.subr.bf16.mxu0 0
      %1647 = vmatpush1.bf16.msra.mxu0 %v1635
      %1648 = vmatprep.subr.bf16.mxu0 0
      %1649 = vmatpush1.bf16.msra.mxu0 0
      %1650 = vmatprep.subr.bf16.mxu0 0
      %1651 = vmatpush1.bf16.msra.mxu0 0
      %1652 = vmatprep.subr.bf16.mxu0 0
      %1653 = vmatpush1.bf16.msra.mxu0 0
      %1654 = vmatprep.subr.bf16.mxu0 0
      %1655 = vmatpush1.bf16.msra.mxu0 0
      %1656 = vmatprep.subr.bf16.mxu0 0
      %1657 = vmatpush1.bf16.msra.mxu0 0
      %1658 = vmatprep.subr.bf16.mxu0 0
      %1659 = vmatpush1.bf16.msra.mxu0 0
      %1660 = vmatprep.subr.bf16.mxu0 0
      %1661 = vmatpush1.bf16.msra.mxu0 0
      %1662 = vmatprep.subr.bf16.mxu0 0
      %1663 = vmatpush1.bf16.msra.mxu0 0
      %1664 = vmatprep.subr.bf16.mxu0 0
      %1665 = vmatpush1.bf16.msra.mxu0 0
      %1666 = vmatprep.subr.bf16.mxu0 0
      %1667 = vmatpush1.bf16.msra.mxu0 0
      %1668 = vmatprep.subr.bf16.mxu0 0
      %1669 = vmatpush1.bf16.msra.mxu0 0
      %1670 = vmatprep.subr.bf16.mxu0 0
      %1671 = vmatpush1.bf16.msra.mxu0 0
      %1672 = vmatprep.subr.bf16.mxu0 0
      %1673 = vmatpush1.bf16.msra.mxu0 0
      %1674 = vmatprep.subr.bf16.mxu0 0
      %1675 = vmatpush1.bf16.msra.mxu0 0
      %1676 = vmatprep.mubr.bf16.mxu0 0
      %1677 = vmatmul.mubr.bf16.gmra.mrb[0].mxu0 %v1639
      %v1678 = vpop.f32.mrb[0].mxu0
      %v1679 = vadd.f32 0.0, %v1678
      %v1680 = vpop.f32.mrb[0].mxu0
      %v1681 = vpop.f32.mrb[0].mxu0
      %v1682 = vadd.f32 0.0, %v1681
      %v1683 = vpop.f32.mrb[0].mxu0
      %1684 = vmatprep.mubr.bf16.mxu0 0
      %1685 = vmatmul.mubr.bf16.gmra.mrb[0].mxu0 %v1642
      %v1686 = vpop.f32.mrb[0].mxu0
      %v1687 = vadd.f32 0.0, %v1686
      %v1688 = vpop.f32.mrb[0].mxu0
      %v1689 = vpop.f32.mrb[0].mxu0
      %v1690 = vpop.f32.mrb[0].mxu0
      %1691 = vdwg.mxu0
      %v1692 = vadd.f32 %v979, %v1679
      %v1693 = vadd.f32 %v980, %v1682
      %v1694 = vadd.f32 %v981, %v1687
      %v1695 = vld [vmem:[%s8] sm:$0x1]
      %v1697 = vlaneseq
      %v1698 = vshrl.u32 %v1697, 7
      %v1699 = vsub.s32 0, %v1698
      %v1700 = vrot.slane %v1695, %v1699
      %v1702 = vadd.f32 %v1692, %v1700
      %v1703 = vadd.f32 %v1693, %v1700
      %v1704 = vadd.f32 %v1694, %v1700
      %v1705 = vld [vmem:[%s9] sm:$0x3]
      %v1706 = vsel %vm983, %v1702, 0.0
      %1707 = vadd.xlane.f32.xlu0 %v1706
      %v1708 = vpop.xlane.xlu0 %1707
      %v1709 = vsel %vm983, %v1703, 0.0
      %1710 = vadd.xlane.f32.xlu0 %v1709
      %v1711 = vpop.xlane.xlu0 %1710
      %v1712 = vsel %vm964, %v1704, 0.0
      %1713 = vadd.xlane.f32.xlu0 %v1712
      %v1714 = vpop.xlane.xlu0 %1713
      %v1715 = vmul.f32 %v1708, %v993
      %v1716 = vmul.f32 %v1711, %v993
      %v1717 = vmul.f32 %v1714, %v993
      %v1718 = vsub.f32 %v1702, %v1715
      %v1719 = vsub.f32 %v1703, %v1716
      %v1720 = vsub.f32 %v1704, %v1717
      %v1721 = vmul.f32 %v1718, %v1718
      %v1722 = vmul.f32 %v1719, %v1719
      %v1723 = vmul.f32 %v1720, %v1720
      %v1724 = vsel %vm983, %v1721, 0.0
      %1725 = vadd.xlane.f32.xlu0 %v1724
      %v1726 = vpop.xlane.xlu0 %1725
      %v1727 = vsel %vm983, %v1722, 0.0
      %1728 = vadd.xlane.f32.xlu0 %v1727
      %v1729 = vpop.xlane.xlu0 %1728
      %v1730 = vsel %vm964, %v1723, 0.0
      %1731 = vadd.xlane.f32.xlu0 %v1730
      %v1732 = vpop.xlane.xlu0 %1731
      %v1733 = vmul.f32 %v1726, %v993
      %v1734 = vmul.f32 %v1729, %v993
      %v1735 = vmul.f32 %v1732, %v993
      %v1736 = vadd.f32 %v1733, 1e-06
      %v1737 = vadd.f32 %v1734, 1e-06
      %v1738 = vadd.f32 %v1735, 1e-06
      %v1739 = vrsqrt.pop %v1736
      %v1740 = vrsqrt.pop %v1737
      %v1741 = vrsqrt.pop %v1738
      %v1742 = vmul.f32 %v1718, %v1739
      %v1743 = vmul.f32 %v1719, %v1740
      %v1744 = vmul.f32 %v1720, %v1741
      %v1745 = vlaneseq
      %v1746 = vshrl.u32 %v1745, 7
      %v1747 = vsub.s32 0, %v1746
      %v1748 = vrot.slane %v1705, %v1747
      %v1749 = vmul.f32 %v1742, %v1748
      %v1750 = vmul.f32 %v1743, %v1748
      %v1751 = vmul.f32 %v1744, %v1748
      %v1752 = vlaneseq
      %v1753 = vshrl.u32 %v1752, 7
      %v1754 = vsub.s32 1, %v1753
      %v1755 = vrot.slane %v1705, %v1754
      %v1756 = vadd.f32 %v1749, %v1755
      %v1757 = vadd.f32 %v1750, %v1755
      %v1758 = vadd.f32 %v1751, %v1755
      %v1759 = vpack.c.bf16 %v1757, %v1756
      %v1760 = vpack.c.bf16 %v1758, %v1758
      %v1761 = vld [vmem:[%s10] sm:$0xf]
      %v1762 = vld [vmem:[%s10 + $0x4] sm:$0xf]
      %v1763 = vld [vmem:[%s10 + $0x8] sm:$0xf]
      %v1764 = vld [vmem:[%s10 + $0xc] sm:$0xf]
      %v1765 = vld [vmem:[%s11] sm:$0x1]
      %v1767 = vlaneseq
      %v1768 = vshrl.u32 %v1767, 7
      %v1769 = vsub.s32 0, %v1768
      %v1770 = vrot.slane %v1765, %v1769
      %v1776 = vunpack.c.l.b16 %v1761
      %v1777 = vunpack.c.l.b16 %v1762
      %v1778 = vunpack.c.l.b16 %v1763
      %v1779 = vunpack.c.l.b16 %v1764
      %v1780 = vpack.c.b16 %v1777, %v1776
      %v1781 = vpack.c.b16 %v1779, %v1778
      %v1785 = vsel %vm983, %v1759, 0
      %v1788 = vsel %vm983, %v1760, 0
      %1790 = vmatprep.subr.bf16.mxu0 0
      %1791 = vmatpush1.bf16.msra.mxu0 %v1780
      %1792 = vmatprep.subr.bf16.mxu0 0
      %1793 = vmatpush1.bf16.msra.mxu0 %v1781
      %1794 = vmatprep.subr.bf16.mxu0 0
      %1795 = vmatpush1.bf16.msra.mxu0 0
      %1796 = vmatprep.subr.bf16.mxu0 0
      %1797 = vmatpush1.bf16.msra.mxu0 0
      %1798 = vmatprep.subr.bf16.mxu0 0
      %1799 = vmatpush1.bf16.msra.mxu0 0
      %1800 = vmatprep.subr.bf16.mxu0 0
      %1801 = vmatpush1.bf16.msra.mxu0 0
      %1802 = vmatprep.subr.bf16.mxu0 0
      %1803 = vmatpush1.bf16.msra.mxu0 0
      %1804 = vmatprep.subr.bf16.mxu0 0
      %1805 = vmatpush1.bf16.msra.mxu0 0
      %1806 = vmatprep.subr.bf16.mxu0 0
      %1807 = vmatpush1.bf16.msra.mxu0 0
      %1808 = vmatprep.subr.bf16.mxu0 0
      %1809 = vmatpush1.bf16.msra.mxu0 0
      %1810 = vmatprep.subr.bf16.mxu0 0
      %1811 = vmatpush1.bf16.msra.mxu0 0
      %1812 = vmatprep.subr.bf16.mxu0 0
      %1813 = vmatpush1.bf16.msra.mxu0 0
      %1814 = vmatprep.subr.bf16.mxu0 0
      %1815 = vmatpush1.bf16.msra.mxu0 0
      %1816 = vmatprep.subr.bf16.mxu0 0
      %1817 = vmatpush1.bf16.msra.mxu0 0
      %1818 = vmatprep.subr.bf16.mxu0 0
      %1819 = vmatpush1.bf16.msra.mxu0 0
      %1820 = vmatprep.subr.bf16.mxu0 0
      %1821 = vmatpush1.bf16.msra.mxu0 0
      %1822 = vmatprep.mubr.bf16.mxu0 0
      %1823 = vmatmul.mubr.bf16.gmra.mrb[0].mxu0 %v1785
      %v1824 = vpop.f32.mrb[0].mxu0
      %v1825 = vadd.f32 %v1770, %v1824
      %v1826 = vpop.f32.mrb[0].mxu0
      %v1827 = vpop.f32.mrb[0].mxu0
      %v1828 = vadd.f32 %v1770, %v1827
      %v1829 = vpop.f32.mrb[0].mxu0
      %1830 = vmatprep.mubr.bf16.mxu0 0
      %1831 = vmatmul.mubr.bf16.gmra.mrb[0].mxu0 %v1788
      %v1832 = vpop.f32.mrb[0].mxu0
      %v1833 = vadd.f32 %v1770, %v1832
      %v1834 = vpop.f32.mrb[0].mxu0
      %v1835 = vpop.f32.mrb[0].mxu0
      %v1836 = vpop.f32.mrb[0].mxu0
      %1837 = vdwg.mxu0
      %v1838 = vmul.f32 %v1825, 0.5
      %v1839 = vmul.f32 %v1828, 0.5
      %v1840 = vmul.f32 %v1833, 0.5
      %v1841 = vmul.f32 %v1825, 0.044715
      %v1842 = vmul.f32 %v1828, 0.044715
      %v1843 = vmul.f32 %v1833, 0.044715
      %v1844 = vmul.f32 %v1841, %v1825
      %v1845 = vmul.f32 %v1842, %v1828
      %v1846 = vmul.f32 %v1843, %v1833
      %v1847 = vmul.f32 %v1844, %v1825
      %v1848 = vmul.f32 %v1845, %v1828
      %v1849 = vmul.f32 %v1846, %v1833
      %v1850 = vadd.f32 %v1825, %v1847
      %v1851 = vadd.f32 %v1828, %v1848
      %v1852 = vadd.f32 %v1833, %v1849
      %v1853 = vmul.f32 %v1850, 0.7978846
      %v1854 = vmul.f32 %v1851, 0.7978846
      %v1855 = vmul.f32 %v1852, 0.7978846
      %v1856 = vtanh.pop %v1853
      %v1857 = vtanh.pop %v1854
      %v1858 = vtanh.pop %v1855
      %v1859 = vadd.f32 %v1856, 1.0
      %v1860 = vadd.f32 %v1857, 1.0
      %v1861 = vadd.f32 %v1858, 1.0
      %v1862 = vmul.f32 %v1838, %v1859
      %v1863 = vmul.f32 %v1839, %v1860
      %v1864 = vmul.f32 %v1840, %v1861
      %v1865 = vpack.c.bf16 %v1863, %v1862
      %v1866 = vpack.c.bf16 %v1864, %v1864
      %v1867 = vld [vmem:[%s12] sm:$0xf]
      %v1868 = vld [vmem:[%s12 + $0x4] sm:$0xf]
      %v1869 = vld [vmem:[%s12 + $0x8] sm:$0xf]
      %v1870 = vld [vmem:[%s12 + $0xc] sm:$0xf]
      %v1871 = vld [vmem:[%s12 + $0x10] sm:$0xf]
      %v1872 = vld [vmem:[%s12 + $0x14] sm:$0xf]
      %v1873 = vld [vmem:[%s12 + $0x18] sm:$0xf]
      %v1874 = vld [vmem:[%s12 + $0x1c] sm:$0xf]
      %v1875 = vld [vmem:[%s12 + $0x20] sm:$0xf]
      %v1876 = vld [vmem:[%s12 + $0x24] sm:$0xf]
      %v1877 = vld [vmem:[%s12 + $0x28] sm:$0xf]
      %v1878 = vld [vmem:[%s12 + $0x2c] sm:$0xf]
      %v1879 = vld [vmem:[%s12 + $0x30] sm:$0xf]
      %v1880 = vld [vmem:[%s12 + $0x34] sm:$0xf]
      %v1881 = vld [vmem:[%s12 + $0x38] sm:$0xf]
      %v1882 = vld [vmem:[%s12 + $0x3c] sm:$0xf]
      %v1899 = vunpack.c.l.b16 %v1867
      %v1900 = vunpack.c.l.b16 %v1868
      %v1901 = vunpack.c.l.b16 %v1869
      %v1902 = vunpack.c.l.b16 %v1870
      %v1903 = vunpack.c.l.b16 %v1871
      %v1904 = vunpack.c.l.b16 %v1872
      %v1905 = vunpack.c.l.b16 %v1873
      %v1906 = vunpack.c.l.b16 %v1874
      %v1907 = vunpack.c.l.b16 %v1875
      %v1908 = vunpack.c.l.b16 %v1876
      %v1909 = vunpack.c.l.b16 %v1877
      %v1910 = vunpack.c.l.b16 %v1878
      %v1911 = vunpack.c.l.b16 %v1879
      %v1912 = vunpack.c.l.b16 %v1880
      %v1913 = vunpack.c.l.b16 %v1881
      %v1914 = vunpack.c.l.b16 %v1882
      %v1915 = vpack.c.b16 %v1900, %v1899
      %v1916 = vpack.c.b16 %v1902, %v1901
      %v1917 = vpack.c.b16 %v1904, %v1903
      %v1918 = vpack.c.b16 %v1906, %v1905
      %v1919 = vpack.c.b16 %v1908, %v1907
      %v1920 = vpack.c.b16 %v1910, %v1909
      %v1921 = vpack.c.b16 %v1912, %v1911
      %v1922 = vpack.c.b16 %v1914, %v1913
      %1931 = vmatprep.subr.bf16.mxu0 0
      %1932 = vmatpush1.bf16.msra.mxu0 %v1915
      %1933 = vmatprep.subr.bf16.mxu0 0
      %1934 = vmatpush1.bf16.msra.mxu0 %v1916
      %1935 = vmatprep.subr.bf16.mxu0 0
      %1936 = vmatpush1.bf16.msra.mxu0 %v1917
      %1937 = vmatprep.subr.bf16.mxu0 0
      %1938 = vmatpush1.bf16.msra.mxu0 %v1918
      %1939 = vmatprep.subr.bf16.mxu0 0
      %1940 = vmatpush1.bf16.msra.mxu0 %v1919
      %1941 = vmatprep.subr.bf16.mxu0 0
      %1942 = vmatpush1.bf16.msra.mxu0 %v1920
      %1943 = vmatprep.subr.bf16.mxu0 0
      %1944 = vmatpush1.bf16.msra.mxu0 %v1921
      %1945 = vmatprep.subr.bf16.mxu0 0
      %1946 = vmatpush1.bf16.msra.mxu0 %v1922
      %1947 = vmatprep.subr.bf16.mxu0 0
      %1948 = vmatpush1.bf16.msra.mxu0 0
      %1949 = vmatprep.subr.bf16.mxu0 0
      %1950 = vmatpush1.bf16.msra.mxu0 0
      %1951 = vmatprep.subr.bf16.mxu0 0
      %1952 = vmatpush1.bf16.msra.mxu0 0
      %1953 = vmatprep.subr.bf16.mxu0 0
      %1954 = vmatpush1.bf16.msra.mxu0 0
      %1955 = vmatprep.subr.bf16.mxu0 0
      %1956 = vmatpush1.bf16.msra.mxu0 0
      %1957 = vmatprep.subr.bf16.mxu0 0
      %1958 = vmatpush1.bf16.msra.mxu0 0
      %1959 = vmatprep.subr.bf16.mxu0 0
      %1960 = vmatpush1.bf16.msra.mxu0 0
      %1961 = vmatprep.subr.bf16.mxu0 0
      %1962 = vmatpush1.bf16.msra.mxu0 0
      %1963 = vmatprep.mubr.bf16.mxu0 0
      %1964 = vmatmul.mubr.bf16.gmra.mrb[0].mxu0 %v1865
      %v1965 = vpop.f32.mrb[0].mxu0
      %v1966 = vadd.f32 0.0, %v1965
      %v1967 = vpop.f32.mrb[0].mxu0
      %v1968 = vpop.f32.mrb[0].mxu0
      %v1969 = vadd.f32 0.0, %v1968
      %v1970 = vpop.f32.mrb[0].mxu0
      %1971 = vmatprep.mubr.bf16.mxu0 0
      %1972 = vmatmul.mubr.bf16.gmra.mrb[0].mxu0 %v1866
      %v1973 = vpop.f32.mrb[0].mxu0
      %v1974 = vadd.f32 0.0, %v1973
      %v1975 = vpop.f32.mrb[0].mxu0
      %v1976 = vpop.f32.mrb[0].mxu0
      %v1977 = vpop.f32.mrb[0].mxu0
      %1978 = vdwg.mxu0
      %v1979 = vadd.f32 %v1702, %v1966
      %v1980 = vadd.f32 %v1703, %v1969
      %v1981 = vadd.f32 %v1704, %v1974
      %v1982 = vld [vmem:[%s13] sm:$0x1]
      %v1984 = vlaneseq
      %v1985 = vshrl.u32 %v1984, 7
      %v1986 = vsub.s32 0, %v1985
      %v1987 = vrot.slane %v1982, %v1986
      %v1989 = vadd.f32 %v1979, %v1987
      %v1990 = vadd.f32 %v1980, %v1987
      %v1991 = vadd.f32 %v1981, %v1987
      %s1992 = scalar_lea.vmem %s4, 2
      %v1993 = vld [vmem:[%s1992] sm:$0x3]
      %v1994 = vsel %vm983, %v1989, 0.0
      %1995 = vadd.xlane.f32.xlu0 %v1994
      %v1996 = vpop.xlane.xlu0 %1995
      %v1997 = vsel %vm983, %v1990, 0.0
      %1998 = vadd.xlane.f32.xlu0 %v1997
      %v1999 = vpop.xlane.xlu0 %1998
      %v2000 = vsel %vm964, %v1991, 0.0
      %2001 = vadd.xlane.f32.xlu0 %v2000
      %v2002 = vpop.xlane.xlu0 %2001
      %v2003 = vmul.f32 %v1996, %v993
      %v2004 = vmul.f32 %v1999, %v993
      %v2005 = vmul.f32 %v2002, %v993
      %v2006 = vsub.f32 %v1989, %v2003
      %v2007 = vsub.f32 %v1990, %v2004
      %v2008 = vsub.f32 %v1991, %v2005
      %v2009 = vmul.f32 %v2006, %v2006
      %v2010 = vmul.f32 %v2007, %v2007
      %v2011 = vmul.f32 %v2008, %v2008
      %v2012 = vsel %vm983, %v2009, 0.0
      %2013 = vadd.xlane.f32.xlu0 %v2012
      %v2014 = vpop.xlane.xlu0 %2013
      %v2015 = vsel %vm983, %v2010, 0.0
      %2016 = vadd.xlane.f32.xlu0 %v2015
      %v2017 = vpop.xlane.xlu0 %2016
      %v2018 = vsel %vm964, %v2011, 0.0
      %2019 = vadd.xlane.f32.xlu0 %v2018
      %v2020 = vpop.xlane.xlu0 %2019
      %v2021 = vmul.f32 %v2014, %v993
      %v2022 = vmul.f32 %v2017, %v993
      %v2023 = vmul.f32 %v2020, %v993
      %v2024 = vadd.f32 %v2021, 1e-06
      %v2025 = vadd.f32 %v2022, 1e-06
      %v2026 = vadd.f32 %v2023, 1e-06
      %v2027 = vrsqrt.pop %v2024
      %v2028 = vrsqrt.pop %v2025
      %v2029 = vrsqrt.pop %v2026
      %v2030 = vmul.f32 %v2006, %v2027
      %v2031 = vmul.f32 %v2007, %v2028
      %v2032 = vmul.f32 %v2008, %v2029
      %v2033 = vlaneseq
      %v2034 = vshrl.u32 %v2033, 7
      %v2035 = vsub.s32 0, %v2034
      %v2036 = vrot.slane %v1993, %v2035
      %v2037 = vmul.f32 %v2030, %v2036
      %v2038 = vmul.f32 %v2031, %v2036
      %v2039 = vmul.f32 %v2032, %v2036
      %v2040 = vlaneseq
      %v2041 = vshrl.u32 %v2040, 7
      %v2042 = vsub.s32 1, %v2041
      %v2043 = vrot.slane %v1993, %v2042
      %v2044 = vadd.f32 %v2037, %v2043
      %v2045 = vadd.f32 %v2038, %v2043
      %v2046 = vadd.f32 %v2039, %v2043
      %v2047 = vpack.c.bf16 %v2045, %v2044
      %v2048 = vpack.c.bf16 %v2046, %v2046
      %s2049 = scalar_lea.vmem %s5, 16
      %v2050 = vld [vmem:[%s2049] sm:$0xf]
      %v2051 = vld [vmem:[%s2049 + $0x4] sm:$0xf]
      %v2052 = vld [vmem:[%s2049 + $0x8] sm:$0xf]
      %v2053 = vld [vmem:[%s2049 + $0xc] sm:$0xf]
      %s2054 = scalar_lea.vmem %s6, 1
      %v2055 = vld [vmem:[%s2054] sm:$0x1]
      %v2057 = vlaneseq
      %v2058 = vshrl.u32 %v2057, 7
      %v2059 = vsub.s32 0, %v2058
      %v2060 = vrot.slane %v2055, %v2059
      %v2066 = vunpack.c.l.b16 %v2050
      %v2067 = vunpack.c.l.b16 %v2051
      %v2068 = vunpack.c.l.b16 %v2052
      %v2069 = vunpack.c.l.b16 %v2053
      %v2070 = vpack.c.b16 %v2067, %v2066
      %v2071 = vpack.c.b16 %v2069, %v2068
      %v2075 = vsel %vm983, %v2047, 0
      %v2078 = vsel %vm983, %v2048, 0
      %2080 = vmatprep.subr.bf16.mxu0 0
      %2081 = vmatpush1.bf16.msra.mxu0 %v2070
      %2082 = vmatprep.subr.bf16.mxu0 0
      %2083 = vmatpush1.bf16.msra.mxu0 %v2071
      %2084 = vmatprep.subr.bf16.mxu0 0
      %2085 = vmatpush1.bf16.msra.mxu0 0
      %2086 = vmatprep.subr.bf16.mxu0 0
      %2087 = vmatpush1.bf16.msra.mxu0 0
      %2088 = vmatprep.subr.bf16.mxu0 0
      %2089 = vmatpush1.bf16.msra.mxu0 0
      %2090 = vmatprep.subr.bf16.mxu0 0
      %2091 = vmatpush1.bf16.msra.mxu0 0
      %2092 = vmatprep.subr.bf16.mxu0 0
      %2093 = vmatpush1.bf16.msra.mxu0 0
      %2094 = vmatprep.subr.bf16.mxu0 0
      %2095 = vmatpush1.bf16.msra.mxu0 0
      %2096 = vmatprep.subr.bf16.mxu0 0
      %2097 = vmatpush1.bf16.msra.mxu0 0
      %2098 = vmatprep.subr.bf16.mxu0 0
      %2099 = vmatpush1.bf16.msra.mxu0 0
      %2100 = vmatprep.subr.bf16.mxu0 0
      %2101 = vmatpush1.bf16.msra.mxu0 0
      %2102 = vmatprep.subr.bf16.mxu0 0
      %2103 = vmatpush1.bf16.msra.mxu0 0
      %2104 = vmatprep.subr.bf16.mxu0 0
      %2105 = vmatpush1.bf16.msra.mxu0 0
      %2106 = vmatprep.subr.bf16.mxu0 0
      %2107 = vmatpush1.bf16.msra.mxu0 0
      %2108 = vmatprep.subr.bf16.mxu0 0
      %2109 = vmatpush1.bf16.msra.mxu0 0
      %2110 = vmatprep.subr.bf16.mxu0 0
      %2111 = vmatpush1.bf16.msra.mxu0 0
      %2112 = vmatprep.mubr.bf16.mxu0 0
      %2113 = vmatmul.mubr.bf16.gmra.mrb[0].mxu0 %v2075
      %v2114 = vpop.f32.mrb[0].mxu0
      %v2115 = vadd.f32 %v2060, %v2114
      %v2116 = vpop.f32.mrb[0].mxu0
      %v2117 = vpop.f32.mrb[0].mxu0
      %v2118 = vadd.f32 %v2060, %v2117
      %v2119 = vpop.f32.mrb[0].mxu0
      %2120 = vmatprep.mubr.bf16.mxu0 0
      %2121 = vmatmul.mubr.bf16.gmra.mrb[0].mxu0 %v2078
      %v2122 = vpop.f32.mrb[0].mxu0
      %v2123 = vadd.f32 %v2060, %v2122
      %v2124 = vpop.f32.mrb[0].mxu0
      %v2125 = vpop.f32.mrb[0].mxu0
      %v2126 = vpop.f32.mrb[0].mxu0
      %2127 = vdwg.mxu0
      %v2128 = vld [vmem:[%s3] sm:$0xff]
      %v2129 = vld [vmem:[%s3 + $0x8] sm:$0xff]
      %v2130 = vld [vmem:[%s3 + $0x10] sm:$0xf]
      %2134 = vrot.lane.b32.xlu0 %v2115, 96
      %v2135 = vpop.permute.xlu0 %2134
      %2136 = vrot.lane.b32.xlu0 %v2118, 96
      %v2137 = vpop.permute.xlu0 %2136
      %2138 = vrot.lane.b32.xlu0 %v2123, 96
      %v2139 = vpop.permute.xlu0 %2138
      %v2140 = vsel %vm1129, %v2115, 0
      %v2142 = vsel %vm1129, %v2118, 0
      %v2144 = vsel %vm1129, %v2123, 0
      %v2146 = vsel %vm1129, %v2135, 0
      %v2148 = vsel %vm1129, %v2137, 0
      %v2150 = vsel %vm1129, %v2139, 0
      %2152 = vmatprep.subr.mxu0 0.0
      %2153 = vmatpush1.xpose.msra.mxu0 %v2146
      %2154 = vmatprep.subr.mxu0 0.0
      %2155 = vmatpush1.xpose.msra.mxu0 %v2148
      %2156 = vmatprep.subr.mxu0 0.0
      %2157 = vmatpush1.xpose.msra.mxu0 %v2150
      %2158 = vmatprep.subr.mxu0 0.0
      %2159 = vmatpush1.xpose.msra.mxu0 0.0
      %2160 = vmatprep.subr.mxu0 0.0
      %2161 = vmatpush1.xpose.msra.mxu0 0.0
      %2162 = vmatprep.subr.mxu0 0.0
      %2163 = vmatpush1.xpose.msra.mxu0 0.0
      %2164 = vmatprep.subr.mxu0 0.0
      %2165 = vmatpush1.xpose.msra.mxu0 0.0
      %2166 = vmatprep.subr.mxu0 0.0
      %2167 = vmatpush1.xpose.msra.mxu0 0.0
      %2168 = vmatprep.subr.mxu0 0.0
      %2169 = vmatpush1.xpose.msra.mxu0 0.0
      %2170 = vmatprep.subr.mxu0 0.0
      %2171 = vmatpush1.xpose.msra.mxu0 0.0
      %2172 = vmatprep.subr.mxu0 0.0
      %2173 = vmatpush1.xpose.msra.mxu0 0.0
      %2174 = vmatprep.subr.mxu0 0.0
      %2175 = vmatpush1.xpose.msra.mxu0 0.0
      %2176 = vmatprep.subr.mxu0 0.0
      %2177 = vmatpush1.xpose.msra.mxu0 0.0
      %2178 = vmatprep.subr.mxu0 0.0
      %2179 = vmatpush1.xpose.msra.mxu0 0.0
      %2180 = vmatprep.subr.mxu0 0.0
      %2181 = vmatpush1.xpose.msra.mxu0 0.0
      %2182 = vmatprep.subr.mxu0 0.0
      %2183 = vmatpush1.xpose.msra.mxu0 0.0
      %2184 = vmatprep.subr.mxu0 0.0
      %2185 = vmatpush1.xpose.msra.mxu0 0.0
      %2186 = vmatprep.subr.mxu0 0.0
      %2187 = vmatpush1.xpose.msra.mxu0 0.0
      %2188 = vmatprep.subr.mxu0 0.0
      %2189 = vmatpush1.xpose.msra.mxu0 0.0
      %2190 = vmatprep.subr.mxu0 0.0
      %2191 = vmatpush1.xpose.msra.mxu0 0.0
      %2192 = vmatprep.subr.mxu0 0.0
      %2193 = vmatpush1.xpose.msra.mxu0 0.0
      %2194 = vmatprep.subr.mxu0 0.0
      %2195 = vmatpush1.xpose.msra.mxu0 0.0
      %2196 = vmatprep.subr.mxu0 0.0
      %2197 = vmatpush1.xpose.msra.mxu0 0.0
      %2198 = vmatprep.subr.mxu0 0.0
      %2199 = vmatpush1.xpose.msra.mxu0 0.0
      %2200 = vmatprep.subr.mxu0 0.0
      %2201 = vmatpush1.xpose.msra.mxu0 0.0
      %2202 = vmatprep.subr.mxu0 0.0
      %2203 = vmatpush1.xpose.msra.mxu0 0.0
      %2204 = vmatprep.subr.mxu0 0.0
      %2205 = vmatpush1.xpose.msra.mxu0 0.0
      %2206 = vmatprep.subr.mxu0 0.0
      %2207 = vmatpush1.xpose.msra.mxu0 0.0
      %2208 = vmatprep.subr.mxu0 0.0
      %2209 = vmatpush1.xpose.msra.mxu0 0.0
      %2210 = vmatprep.subr.mxu0 0.0
      %2211 = vmatpush1.xpose.msra.mxu0 0.0
      %2212 = vmatprep.subr.mxu0 0.0
      %2213 = vmatpush1.xpose.msra.mxu0 0.0
      %2214 = vmatprep.subr.mxu0 0.0
      %2215 = vmatpush1.xpose.msra.mxu0 0.0
      %2216 = vmatprep.mubr.f32.mxu0 0.0
      %2217 = vmatmul.mubr.f32.gmra.mrb[0].mxu0 %v2140
      %v2218 = vpop.f32.mrb[0].mxu0
      %v2219 = vadd.f32 %v2128, %v2218
      %v2220 = vpop.f32.mrb[0].mxu0
      %2221 = vmatprep.mubr.f32.mxu0 0.0
      %2222 = vmatmul.mubr.f32.gmra.mrb[0].mxu0 %v2142
      %v2223 = vpop.f32.mrb[0].mxu0
      %v2224 = vadd.f32 %v2129, %v2223
      %v2225 = vpop.f32.mrb[0].mxu0
      %2226 = vmatprep.mubr.f32.mxu0 0.0
      %2227 = vmatmul.mubr.f32.gmra.mrb[0].mxu0 %v2144
      %v2228 = vpop.f32.mrb[0].mxu0
      %v2229 = vadd.f32 %v2130, %v2228
      %v2230 = vpop.f32.mrb[0].mxu0
      %2231 = vdwg.mxu0
      %v2232 = vsel %vm1222, %v2219, -inf
      %2233 = vmax.xlane.f32.xlu0 %v2232
      %v2234 = vpop.xlane.xlu0 %2233
      %v2235 = vsel %vm1222, %v2224, -inf
      %2236 = vmax.xlane.f32.xlu0 %v2235
      %v2237 = vpop.xlane.xlu0 %2236
      %v2238 = vsel %vm1229, %v2229, -inf
      %2239 = vmax.xlane.f32.xlu0 %v2238
      %v2240 = vpop.xlane.xlu0 %2239
      %v2241 = vsub.f32 %v2219, %v2234
      %v2242 = vsub.f32 %v2224, %v2237
      %v2243 = vsub.f32 %v2229, %v2240
      %v2244 = vmul.f32 %v2241, 1.442695
      %v2245 = vpow.pop %v2244
      %v2246 = vmul.f32 %v2242, 1.442695
      %v2247 = vpow.pop %v2246
      %v2248 = vmul.f32 %v2243, 1.442695
      %v2249 = vpow.pop %v2248
      %v2250 = vsel %vm1222, %v2245, 0.0
      %2251 = vadd.xlane.f32.xlu0 %v2250
      %v2252 = vpop.xlane.xlu0 %2251
      %v2253 = vsel %vm1222, %v2247, 0.0
      %2254 = vadd.xlane.f32.xlu0 %v2253
      %v2255 = vpop.xlane.xlu0 %2254
      %v2256 = vsel %vm1229, %v2249, 0.0
      %2257 = vadd.xlane.f32.xlu0 %v2256
      %v2258 = vpop.xlane.xlu0 %2257
      %v2259 = vrcp.pop %v2252
      %v2260 = vrcp.pop %v2255
      %v2261 = vrcp.pop %v2258
      %v2262 = vmul.f32 %v2245, %v2259
      %v2263 = vmul.f32 %v2247, %v2260
      %v2264 = vmul.f32 %v2249, %v2261
      %2265 = vrot.lane.b32.xlu0 %v2115, 64
      %v2266 = vpop.permute.xlu0 %2265
      %2267 = vrot.lane.b32.xlu0 %v2118, 64
      %v2268 = vpop.permute.xlu0 %2267
      %2269 = vrot.lane.b32.xlu0 %v2123, 64
      %v2270 = vpop.permute.xlu0 %2269
      %v2274 = vsel %vm1222, %v2262, 0
      %v2277 = vsel %vm1222, %v2263, 0
      %v2280 = vsel %vm1222, %v2264, 0
      %v2282 = vsel %vm1274, %v2270, 0
      %2284 = vmatprep.subr.mxu0 0.0
      %2285 = vmatpush1.msra.mxu0 %v2266
      %2286 = vmatprep.subr.mxu0 0.0
      %2287 = vmatpush1.msra.mxu0 %v2268
      %2288 = vmatprep.subr.mxu0 0.0
      %2289 = vmatpush1.msra.mxu0 %v2282
      %2290 = vmatprep.subr.mxu0 0.0
      %2291 = vmatpush1.msra.mxu0 0.0
      %2292 = vmatprep.subr.mxu0 0.0
      %2293 = vmatpush1.msra.mxu0 0.0
      %2294 = vmatprep.subr.mxu0 0.0
      %2295 = vmatpush1.msra.mxu0 0.0
      %2296 = vmatprep.subr.mxu0 0.0
      %2297 = vmatpush1.msra.mxu0 0.0
      %2298 = vmatprep.subr.mxu0 0.0
      %2299 = vmatpush1.msra.mxu0 0.0
      %2300 = vmatprep.subr.mxu0 0.0
      %2301 = vmatpush1.msra.mxu0 0.0
      %2302 = vmatprep.subr.mxu0 0.0
      %2303 = vmatpush1.msra.mxu0 0.0
      %2304 = vmatprep.subr.mxu0 0.0
      %2305 = vmatpush1.msra.mxu0 0.0
      %2306 = vmatprep.subr.mxu0 0.0
      %2307 = vmatpush1.msra.mxu0 0.0
      %2308 = vmatprep.subr.mxu0 0.0
      %2309 = vmatpush1.msra.mxu0 0.0
      %2310 = vmatprep.subr.mxu0 0.0
      %2311 = vmatpush1.msra.mxu0 0.0
      %2312 = vmatprep.subr.mxu0 0.0
      %2313 = vmatpush1.msra.mxu0 0.0
      %2314 = vmatprep.subr.mxu0 0.0
      %2315 = vmatpush1.msra.mxu0 0.0
      %2316 = vmatprep.subr.mxu0 0.0
      %2317 = vmatpush1.msra.mxu0 0.0
      %2318 = vmatprep.subr.mxu0 0.0
      %2319 = vmatpush1.msra.mxu0 0.0
      %2320 = vmatprep.subr.mxu0 0.0
      %2321 = vmatpush1.msra.mxu0 0.0
      %2322 = vmatprep.subr.mxu0 0.0
      %2323 = vmatpush1.msra.mxu0 0.0
      %2324 = vmatprep.subr.mxu0 0.0
      %2325 = vmatpush1.msra.mxu0 0.0
      %2326 = vmatprep.subr.mxu0 0.0
      %2327 = vmatpush1.msra.mxu0 0.0
      %2328 = vmatprep.subr.mxu0 0.0
      %2329 = vmatpush1.msra.mxu0 0.0
      %2330 = vmatprep.subr.mxu0 0.0
      %2331 = vmatpush1.msra.mxu0 0.0
      %2332 = vmatprep.subr.mxu0 0.0
      %2333 = vmatpush1.msra.mxu0 0.0
      %2334 = vmatprep.subr.mxu0 0.0
      %2335 = vmatpush1.msra.mxu0 0.0
      %2336 = vmatprep.subr.mxu0 0.0
      %2337 = vmatpush1.msra.mxu0 0.0
      %2338 = vmatprep.subr.mxu0 0.0
      %2339 = vmatpush1.msra.mxu0 0.0
      %2340 = vmatprep.subr.mxu0 0.0
      %2341 = vmatpush1.msra.mxu0 0.0
      %2342 = vmatprep.subr.mxu0 0.0
      %2343 = vmatpush1.msra.mxu0 0.0
      %2344 = vmatprep.subr.mxu0 0.0
      %2345 = vmatpush1.msra.mxu0 0.0
      %2346 = vmatprep.subr.mxu0 0.0
      %2347 = vmatpush1.msra.mxu0 0.0
      %2348 = vmatprep.mubr.f32.mxu0 0.0
      %2349 = vmatmul.mubr.f32.gmra.mrb[0].mxu0 %v2274
      %v2350 = vpop.f32.mrb[0].mxu0
      %v2351 = vadd.f32 0.0, %v2350
      %v2352 = vpop.f32.mrb[0].mxu0
      %2353 = vmatprep.mubr.f32.mxu0 0.0
      %2354 = vmatmul.mubr.f32.gmra.mrb[0].mxu0 %v2277
      %v2355 = vpop.f32.mrb[0].mxu0
      %v2356 = vadd.f32 0.0, %v2355
      %v2357 = vpop.f32.mrb[0].mxu0
      %2358 = vmatprep.mubr.f32.mxu0 0.0
      %2359 = vmatmul.mubr.f32.gmra.mrb[0].mxu0 %v2280
      %v2360 = vpop.f32.mrb[0].mxu0
      %v2361 = vadd.f32 0.0, %v2360
      %v2362 = vpop.f32.mrb[0].mxu0
      %2363 = vdwg.mxu0
      %2364 = vst.msk [vmem:[#allocation2] sm:$0xff] %vm1129, %v2351
      %2365 = vst.msk [vmem:[#allocation2 + $0x8] sm:$0xff] %vm1129, %v2356
      %2366 = vst.msk [vmem:[#allocation2 + $0x10] sm:$0xf] %vm1359, %v2361
      %v2367 = vld [vmem:[%s3] sm:$0xff]
      %v2368 = vld [vmem:[%s3 + $0x8] sm:$0xff]
      %v2369 = vld [vmem:[%s3 + $0x10] sm:$0xf]
      %2370 = vrot.lane.b32.xlu0 %v2115, 112
      %v2371 = vpop.permute.xlu0 %2370
      %2372 = vrot.lane.b32.xlu0 %v2118, 112
      %v2373 = vpop.permute.xlu0 %2372
      %2374 = vrot.lane.b32.xlu0 %v2123, 112
      %v2375 = vpop.permute.xlu0 %2374
      %2376 = vrot.lane.b32.xlu0 %v2115, 80
      %v2377 = vpop.permute.xlu0 %2376
      %2378 = vrot.lane.b32.xlu0 %v2118, 80
      %v2379 = vpop.permute.xlu0 %2378
      %2380 = vrot.lane.b32.xlu0 %v2123, 80
      %v2381 = vpop.permute.xlu0 %2380
      %v2382 = vsel %vm1129, %v2371, 0
      %v2384 = vsel %vm1129, %v2373, 0
      %v2386 = vsel %vm1129, %v2375, 0
      %v2388 = vsel %vm1129, %v2377, 0
      %v2390 = vsel %vm1129, %v2379, 0
      %v2392 = vsel %vm1129, %v2381, 0
      %2394 = vmatprep.subr.mxu0 0.0
      %2395 = vmatpush1.xpose.msra.mxu0 %v2388
      %2396 = vmatprep.subr.mxu0 0.0
      %2397 = vmatpush1.xpose.msra.mxu0 %v2390
      %2398 = vmatprep.subr.mxu0 0.0
      %2399 = vmatpush1.xpose.msra.mxu0 %v2392
      %2400 = vmatprep.subr.mxu0 0.0
      %2401 = vmatpush1.xpose.msra.mxu0 0.0
      %2402 = vmatprep.subr.mxu0 0.0
      %2403 = vmatpush1.xpose.msra.mxu0 0.0
      %2404 = vmatprep.subr.mxu0 0.0
      %2405 = vmatpush1.xpose.msra.mxu0 0.0
      %2406 = vmatprep.subr.mxu0 0.0
      %2407 = vmatpush1.xpose.msra.mxu0 0.0
      %2408 = vmatprep.subr.mxu0 0.0
      %2409 = vmatpush1.xpose.msra.mxu0 0.0
      %2410 = vmatprep.subr.mxu0 0.0
      %2411 = vmatpush1.xpose.msra.mxu0 0.0
      %2412 = vmatprep.subr.mxu0 0.0
      %2413 = vmatpush1.xpose.msra.mxu0 0.0
      %2414 = vmatprep.subr.mxu0 0.0
      %2415 = vmatpush1.xpose.msra.mxu0 0.0
      %2416 = vmatprep.subr.mxu0 0.0
      %2417 = vmatpush1.xpose.msra.mxu0 0.0
      %2418 = vmatprep.subr.mxu0 0.0
      %2419 = vmatpush1.xpose.msra.mxu0 0.0
      %2420 = vmatprep.subr.mxu0 0.0
      %2421 = vmatpush1.xpose.msra.mxu0 0.0
      %2422 = vmatprep.subr.mxu0 0.0
      %2423 = vmatpush1.xpose.msra.mxu0 0.0
      %2424 = vmatprep.subr.mxu0 0.0
      %2425 = vmatpush1.xpose.msra.mxu0 0.0
      %2426 = vmatprep.subr.mxu0 0.0
      %2427 = vmatpush1.xpose.msra.mxu0 0.0
      %2428 = vmatprep.subr.mxu0 0.0
      %2429 = vmatpush1.xpose.msra.mxu0 0.0
      %2430 = vmatprep.subr.mxu0 0.0
      %2431 = vmatpush1.xpose.msra.mxu0 0.0
      %2432 = vmatprep.subr.mxu0 0.0
      %2433 = vmatpush1.xpose.msra.mxu0 0.0
      %2434 = vmatprep.subr.mxu0 0.0
      %2435 = vmatpush1.xpose.msra.mxu0 0.0
      %2436 = vmatprep.subr.mxu0 0.0
      %2437 = vmatpush1.xpose.msra.mxu0 0.0
      %2438 = vmatprep.subr.mxu0 0.0
      %2439 = vmatpush1.xpose.msra.mxu0 0.0
      %2440 = vmatprep.subr.mxu0 0.0
      %2441 = vmatpush1.xpose.msra.mxu0 0.0
      %2442 = vmatprep.subr.mxu0 0.0
      %2443 = vmatpush1.xpose.msra.mxu0 0.0
      %2444 = vmatprep.subr.mxu0 0.0
      %2445 = vmatpush1.xpose.msra.mxu0 0.0
      %2446 = vmatprep.subr.mxu0 0.0
      %2447 = vmatpush1.xpose.msra.mxu0 0.0
      %2448 = vmatprep.subr.mxu0 0.0
      %2449 = vmatpush1.xpose.msra.mxu0 0.0
      %2450 = vmatprep.subr.mxu0 0.0
      %2451 = vmatpush1.xpose.msra.mxu0 0.0
      %2452 = vmatprep.subr.mxu0 0.0
      %2453 = vmatpush1.xpose.msra.mxu0 0.0
      %2454 = vmatprep.subr.mxu0 0.0
      %2455 = vmatpush1.xpose.msra.mxu0 0.0
      %2456 = vmatprep.subr.mxu0 0.0
      %2457 = vmatpush1.xpose.msra.mxu0 0.0
      %2458 = vmatprep.mubr.f32.mxu0 0.0
      %2459 = vmatmul.mubr.f32.gmra.mrb[0].mxu0 %v2382
      %v2460 = vpop.f32.mrb[0].mxu0
      %v2461 = vadd.f32 %v2367, %v2460
      %v2462 = vpop.f32.mrb[0].mxu0
      %2463 = vmatprep.mubr.f32.mxu0 0.0
      %2464 = vmatmul.mubr.f32.gmra.mrb[0].mxu0 %v2384
      %v2465 = vpop.f32.mrb[0].mxu0
      %v2466 = vadd.f32 %v2368, %v2465
      %v2467 = vpop.f32.mrb[0].mxu0
      %2468 = vmatprep.mubr.f32.mxu0 0.0
      %2469 = vmatmul.mubr.f32.gmra.mrb[0].mxu0 %v2386
      %v2470 = vpop.f32.mrb[0].mxu0
      %v2471 = vadd.f32 %v2369, %v2470
      %v2472 = vpop.f32.mrb[0].mxu0
      %2473 = vdwg.mxu0
      %v2474 = vsel %vm1222, %v2461, -inf
      %2475 = vmax.xlane.f32.xlu0 %v2474
      %v2476 = vpop.xlane.xlu0 %2475
      %v2477 = vsel %vm1222, %v2466, -inf
      %2478 = vmax.xlane.f32.xlu0 %v2477
      %v2479 = vpop.xlane.xlu0 %2478
      %v2480 = vsel %vm1229, %v2471, -inf
      %2481 = vmax.xlane.f32.xlu0 %v2480
      %v2482 = vpop.xlane.xlu0 %2481
      %v2483 = vsub.f32 %v2461, %v2476
      %v2484 = vsub.f32 %v2466, %v2479
      %v2485 = vsub.f32 %v2471, %v2482
      %v2486 = vmul.f32 %v2483, 1.442695
      %v2487 = vpow.pop %v2486
      %v2488 = vmul.f32 %v2484, 1.442695
      %v2489 = vpow.pop %v2488
      %v2490 = vmul.f32 %v2485, 1.442695
      %v2491 = vpow.pop %v2490
      %v2492 = vsel %vm1222, %v2487, 0.0
      %2493 = vadd.xlane.f32.xlu0 %v2492
      %v2494 = vpop.xlane.xlu0 %2493
      %v2495 = vsel %vm1222, %v2489, 0.0
      %2496 = vadd.xlane.f32.xlu0 %v2495
      %v2497 = vpop.xlane.xlu0 %2496
      %v2498 = vsel %vm1229, %v2491, 0.0
      %2499 = vadd.xlane.f32.xlu0 %v2498
      %v2500 = vpop.xlane.xlu0 %2499
      %v2501 = vrcp.pop %v2494
      %v2502 = vrcp.pop %v2497
      %v2503 = vrcp.pop %v2500
      %v2504 = vmul.f32 %v2487, %v2501
      %v2505 = vmul.f32 %v2489, %v2502
      %v2506 = vmul.f32 %v2491, %v2503
      %2507 = vrot.lane.b32.xlu0 %v2115, 48
      %v2508 = vpop.permute.xlu0 %2507
      %2509 = vrot.lane.b32.xlu0 %v2118, 48
      %v2510 = vpop.permute.xlu0 %2509
      %2511 = vrot.lane.b32.xlu0 %v2123, 48
      %v2512 = vpop.permute.xlu0 %2511
      %v2516 = vsel %vm1222, %v2504, 0
      %v2519 = vsel %vm1222, %v2505, 0
      %v2522 = vsel %vm1222, %v2506, 0
      %v2524 = vsel %vm1274, %v2512, 0
      %2526 = vmatprep.subr.mxu0 0.0
      %2527 = vmatpush1.msra.mxu0 %v2508
      %2528 = vmatprep.subr.mxu0 0.0
      %2529 = vmatpush1.msra.mxu0 %v2510
      %2530 = vmatprep.subr.mxu0 0.0
      %2531 = vmatpush1.msra.mxu0 %v2524
      %2532 = vmatprep.subr.mxu0 0.0
      %2533 = vmatpush1.msra.mxu0 0.0
      %2534 = vmatprep.subr.mxu0 0.0
      %2535 = vmatpush1.msra.mxu0 0.0
      %2536 = vmatprep.subr.mxu0 0.0
      %2537 = vmatpush1.msra.mxu0 0.0
      %2538 = vmatprep.subr.mxu0 0.0
      %2539 = vmatpush1.msra.mxu0 0.0
      %2540 = vmatprep.subr.mxu0 0.0
      %2541 = vmatpush1.msra.mxu0 0.0
      %2542 = vmatprep.subr.mxu0 0.0
      %2543 = vmatpush1.msra.mxu0 0.0
      %2544 = vmatprep.subr.mxu0 0.0
      %2545 = vmatpush1.msra.mxu0 0.0
      %2546 = vmatprep.subr.mxu0 0.0
      %2547 = vmatpush1.msra.mxu0 0.0
      %2548 = vmatprep.subr.mxu0 0.0
      %2549 = vmatpush1.msra.mxu0 0.0
      %2550 = vmatprep.subr.mxu0 0.0
      %2551 = vmatpush1.msra.mxu0 0.0
      %2552 = vmatprep.subr.mxu0 0.0
      %2553 = vmatpush1.msra.mxu0 0.0
      %2554 = vmatprep.subr.mxu0 0.0
      %2555 = vmatpush1.msra.mxu0 0.0
      %2556 = vmatprep.subr.mxu0 0.0
      %2557 = vmatpush1.msra.mxu0 0.0
      %2558 = vmatprep.subr.mxu0 0.0
      %2559 = vmatpush1.msra.mxu0 0.0
      %2560 = vmatprep.subr.mxu0 0.0
      %2561 = vmatpush1.msra.mxu0 0.0
      %2562 = vmatprep.subr.mxu0 0.0
      %2563 = vmatpush1.msra.mxu0 0.0
      %2564 = vmatprep.subr.mxu0 0.0
      %2565 = vmatpush1.msra.mxu0 0.0
      %2566 = vmatprep.subr.mxu0 0.0
      %2567 = vmatpush1.msra.mxu0 0.0
      %2568 = vmatprep.subr.mxu0 0.0
      %2569 = vmatpush1.msra.mxu0 0.0
      %2570 = vmatprep.subr.mxu0 0.0
      %2571 = vmatpush1.msra.mxu0 0.0
      %2572 = vmatprep.subr.mxu0 0.0
      %2573 = vmatpush1.msra.mxu0 0.0
      %2574 = vmatprep.subr.mxu0 0.0
      %2575 = vmatpush1.msra.mxu0 0.0
      %2576 = vmatprep.subr.mxu0 0.0
      %2577 = vmatpush1.msra.mxu0 0.0
      %2578 = vmatprep.subr.mxu0 0.0
      %2579 = vmatpush1.msra.mxu0 0.0
      %2580 = vmatprep.subr.mxu0 0.0
      %2581 = vmatpush1.msra.mxu0 0.0
      %2582 = vmatprep.subr.mxu0 0.0
      %2583 = vmatpush1.msra.mxu0 0.0
      %2584 = vmatprep.subr.mxu0 0.0
      %2585 = vmatpush1.msra.mxu0 0.0
      %2586 = vmatprep.subr.mxu0 0.0
      %2587 = vmatpush1.msra.mxu0 0.0
      %2588 = vmatprep.subr.mxu0 0.0
      %2589 = vmatpush1.msra.mxu0 0.0
      %2590 = vmatprep.mubr.f32.mxu0 0.0
      %2591 = vmatmul.mubr.f32.gmra.mrb[0].mxu0 %v2516
      %v2592 = vpop.f32.mrb[0].mxu0
      %v2593 = vadd.f32 0.0, %v2592
      %v2594 = vpop.f32.mrb[0].mxu0
      %2595 = vmatprep.mubr.f32.mxu0 0.0
      %2596 = vmatmul.mubr.f32.gmra.mrb[0].mxu0 %v2519
      %v2597 = vpop.f32.mrb[0].mxu0
      %v2598 = vadd.f32 0.0, %v2597
      %v2599 = vpop.f32.mrb[0].mxu0
      %2600 = vmatprep.mubr.f32.mxu0 0.0
      %2601 = vmatmul.mubr.f32.gmra.mrb[0].mxu0 %v2522
      %v2602 = vpop.f32.mrb[0].mxu0
      %v2603 = vadd.f32 0.0, %v2602
      %v2604 = vpop.f32.mrb[0].mxu0
      %2605 = vdwg.mxu0
      %2609 = vrot.lane.b32.xlu0 %v2593, 16
      %v2610 = vpop.permute.xlu0 %2609
      %2611 = vrot.lane.b32.xlu0 %v2598, 16
      %v2612 = vpop.permute.xlu0 %2611
      %2613 = vrot.lane.b32.xlu0 %v2603, 16
      %v2614 = vpop.permute.xlu0 %2613
      %2618 = vst.msk [vmem:[#allocation2] sm:$0xff] %vm1612, %v2610
      %2619 = vst.msk [vmem:[#allocation2 + $0x8] sm:$0xff] %vm1612, %v2612
      %2620 = vst.msk [vmem:[#allocation2 + $0x10] sm:$0xf] %vm1615, %v2614
      %v2621 = vld [vmem:[#allocation2] sm:$0xff]
      %v2622 = vld [vmem:[#allocation2 + $0x8] sm:$0xff]
      %v2623 = vld [vmem:[#allocation2 + $0x10] sm:$0xf]
      %v2624 = vpack.c.bf16 %v2622, %v2621
      %v2625 = vpack.c.bf16 %v2623, %v2623
      %s2626 = scalar_lea.vmem %s7, 16
      %v2627 = vld [vmem:[%s2626] sm:$0xf]
      %v2628 = vld [vmem:[%s2626 + $0x4] sm:$0xf]
      %v2629 = vld [vmem:[%s2626 + $0x8] sm:$0xf]
      %v2630 = vld [vmem:[%s2626 + $0xc] sm:$0xf]
      %v2635 = vunpack.c.l.b16 %v2627
      %v2636 = vunpack.c.l.b16 %v2628
      %v2637 = vunpack.c.l.b16 %v2629
      %v2638 = vunpack.c.l.b16 %v2630
      %v2639 = vpack.c.b16 %v2636, %v2635
      %v2640 = vpack.c.b16 %v2638, %v2637
      %v2644 = vsel %vm983, %v2624, 0
      %v2647 = vsel %vm983, %v2625, 0
      %2649 = vmatprep.subr.bf16.mxu0 0
      %2650 = vmatpush1.bf16.msra.mxu0 %v2639
      %2651 = vmatprep.subr.bf16.mxu0 0
      %2652 = vmatpush1.bf16.msra.mxu0 %v2640
      %2653 = vmatprep.subr.bf16.mxu0 0
      %2654 = vmatpush1.bf16.msra.mxu0 0
      %2655 = vmatprep.subr.bf16.mxu0 0
      %2656 = vmatpush1.bf16.msra.mxu0 0
      %2657 = vmatprep.subr.bf16.mxu0 0
      %2658 = vmatpush1.bf16.msra.mxu0 0
      %2659 = vmatprep.subr.bf16.mxu0 0
      %2660 = vmatpush1.bf16.msra.mxu0 0
      %2661 = vmatprep.subr.bf16.mxu0 0
      %2662 = vmatpush1.bf16.msra.mxu0 0
      %2663 = vmatprep.subr.bf16.mxu0 0
      %2664 = vmatpush1.bf16.msra.mxu0 0
      %2665 = vmatprep.subr.bf16.mxu0 0
      %2666 = vmatpush1.bf16.msra.mxu0 0
      %2667 = vmatprep.subr.bf16.mxu0 0
      %2668 = vmatpush1.bf16.msra.mxu0 0
      %2669 = vmatprep.subr.bf16.mxu0 0
      %2670 = vmatpush1.bf16.msra.mxu0 0
      %2671 = vmatprep.subr.bf16.mxu0 0
      %2672 = vmatpush1.bf16.msra.mxu0 0
      %2673 = vmatprep.subr.bf16.mxu0 0
      %2674 = vmatpush1.bf16.msra.mxu0 0
      %2675 = vmatprep.subr.bf16.mxu0 0
      %2676 = vmatpush1.bf16.msra.mxu0 0
      %2677 = vmatprep.subr.bf16.mxu0 0
      %2678 = vmatpush1.bf16.msra.mxu0 0
      %2679 = vmatprep.subr.bf16.mxu0 0
      %2680 = vmatpush1.bf16.msra.mxu0 0
      %2681 = vmatprep.mubr.bf16.mxu0 0
      %2682 = vmatmul.mubr.bf16.gmra.mrb[0].mxu0 %v2644
      %v2683 = vpop.f32.mrb[0].mxu0
      %v2684 = vadd.f32 0.0, %v2683
      %v2685 = vpop.f32.mrb[0].mxu0
      %v2686 = vpop.f32.mrb[0].mxu0
      %v2687 = vadd.f32 0.0, %v2686
      %v2688 = vpop.f32.mrb[0].mxu0
      %2689 = vmatprep.mubr.bf16.mxu0 0
      %2690 = vmatmul.mubr.bf16.gmra.mrb[0].mxu0 %v2647
      %v2691 = vpop.f32.mrb[0].mxu0
      %v2692 = vadd.f32 0.0, %v2691
      %v2693 = vpop.f32.mrb[0].mxu0
      %v2694 = vpop.f32.mrb[0].mxu0
      %v2695 = vpop.f32.mrb[0].mxu0
      %2696 = vdwg.mxu0
      %v2697 = vadd.f32 %v1989, %v2684
      %v2698 = vadd.f32 %v1990, %v2687
      %v2699 = vadd.f32 %v1991, %v2692
      %s2700 = scalar_lea.vmem %s8, 1
      %v2701 = vld [vmem:[%s2700] sm:$0x1]
      %v2703 = vlaneseq
      %v2704 = vshrl.u32 %v2703, 7
      %v2705 = vsub.s32 0, %v2704
      %v2706 = vrot.slane %v2701, %v2705
      %v2708 = vadd.f32 %v2697, %v2706
      %v2709 = vadd.f32 %v2698, %v2706
      %v2710 = vadd.f32 %v2699, %v2706
      %s2711 = scalar_lea.vmem %s9, 2
      %v2712 = vld [vmem:[%s2711] sm:$0x3]
      %v2713 = vsel %vm983, %v2708, 0.0
      %2714 = vadd.xlane.f32.xlu0 %v2713
      %v2715 = vpop.xlane.xlu0 %2714
      %v2716 = vsel %vm983, %v2709, 0.0
      %2717 = vadd.xlane.f32.xlu0 %v2716
      %v2718 = vpop.xlane.xlu0 %2717
      %v2719 = vsel %vm964, %v2710, 0.0
      %2720 = vadd.xlane.f32.xlu0 %v2719
      %v2721 = vpop.xlane.xlu0 %2720
      %v2722 = vmul.f32 %v2715, %v993
      %v2723 = vmul.f32 %v2718, %v993
      %v2724 = vmul.f32 %v2721, %v993
      %v2725 = vsub.f32 %v2708, %v2722
      %v2726 = vsub.f32 %v2709, %v2723
      %v2727 = vsub.f32 %v2710, %v2724
      %v2728 = vmul.f32 %v2725, %v2725
      %v2729 = vmul.f32 %v2726, %v2726
      %v2730 = vmul.f32 %v2727, %v2727
      %v2731 = vsel %vm983, %v2728, 0.0
      %2732 = vadd.xlane.f32.xlu0 %v2731
      %v2733 = vpop.xlane.xlu0 %2732
      %v2734 = vsel %vm983, %v2729, 0.0
      %2735 = vadd.xlane.f32.xlu0 %v2734
      %v2736 = vpop.xlane.xlu0 %2735
      %v2737 = vsel %vm964, %v2730, 0.0
      %2738 = vadd.xlane.f32.xlu0 %v2737
      %v2739 = vpop.xlane.xlu0 %2738
      %v2740 = vmul.f32 %v2733, %v993
      %v2741 = vmul.f32 %v2736, %v993
      %v2742 = vmul.f32 %v2739, %v993
      %v2743 = vadd.f32 %v2740, 1e-06
      %v2744 = vadd.f32 %v2741, 1e-06
      %v2745 = vadd.f32 %v2742, 1e-06
      %v2746 = vrsqrt.pop %v2743
      %v2747 = vrsqrt.pop %v2744
      %v2748 = vrsqrt.pop %v2745
      %v2749 = vmul.f32 %v2725, %v2746
      %v2750 = vmul.f32 %v2726, %v2747
      %v2751 = vmul.f32 %v2727, %v2748
      %v2752 = vlaneseq
      %v2753 = vshrl.u32 %v2752, 7
      %v2754 = vsub.s32 0, %v2753
      %v2755 = vrot.slane %v2712, %v2754
      %v2756 = vmul.f32 %v2749, %v2755
      %v2757 = vmul.f32 %v2750, %v2755
      %v2758 = vmul.f32 %v2751, %v2755
      %v2759 = vlaneseq
      %v2760 = vshrl.u32 %v2759, 7
      %v2761 = vsub.s32 1, %v2760
      %v2762 = vrot.slane %v2712, %v2761
      %v2763 = vadd.f32 %v2756, %v2762
      %v2764 = vadd.f32 %v2757, %v2762
      %v2765 = vadd.f32 %v2758, %v2762
      %v2766 = vpack.c.bf16 %v2764, %v2763
      %v2767 = vpack.c.bf16 %v2765, %v2765
      %s2768 = scalar_lea.vmem %s10, 16
      %v2769 = vld [vmem:[%s2768] sm:$0xf]
      %v2770 = vld [vmem:[%s2768 + $0x4] sm:$0xf]
      %v2771 = vld [vmem:[%s2768 + $0x8] sm:$0xf]
      %v2772 = vld [vmem:[%s2768 + $0xc] sm:$0xf]
      %s2773 = scalar_lea.vmem %s11, 1
      %v2774 = vld [vmem:[%s2773] sm:$0x1]
      %v2776 = vlaneseq
      %v2777 = vshrl.u32 %v2776, 7
      %v2778 = vsub.s32 0, %v2777
      %v2779 = vrot.slane %v2774, %v2778
      %v2785 = vunpack.c.l.b16 %v2769
      %v2786 = vunpack.c.l.b16 %v2770
      %v2787 = vunpack.c.l.b16 %v2771
      %v2788 = vunpack.c.l.b16 %v2772
      %v2789 = vpack.c.b16 %v2786, %v2785
      %v2790 = vpack.c.b16 %v2788, %v2787
      %v2794 = vsel %vm983, %v2766, 0
      %v2797 = vsel %vm983, %v2767, 0
      %2799 = vmatprep.subr.bf16.mxu0 0
      %2800 = vmatpush1.bf16.msra.mxu0 %v2789
      %2801 = vmatprep.subr.bf16.mxu0 0
      %2802 = vmatpush1.bf16.msra.mxu0 %v2790
      %2803 = vmatprep.subr.bf16.mxu0 0
      %2804 = vmatpush1.bf16.msra.mxu0 0
      %2805 = vmatprep.subr.bf16.mxu0 0
      %2806 = vmatpush1.bf16.msra.mxu0 0
      %2807 = vmatprep.subr.bf16.mxu0 0
      %2808 = vmatpush1.bf16.msra.mxu0 0
      %2809 = vmatprep.subr.bf16.mxu0 0
      %2810 = vmatpush1.bf16.msra.mxu0 0
      %2811 = vmatprep.subr.bf16.mxu0 0
      %2812 = vmatpush1.bf16.msra.mxu0 0
      %2813 = vmatprep.subr.bf16.mxu0 0
      %2814 = vmatpush1.bf16.msra.mxu0 0
      %2815 = vmatprep.subr.bf16.mxu0 0
      %2816 = vmatpush1.bf16.msra.mxu0 0
      %2817 = vmatprep.subr.bf16.mxu0 0
      %2818 = vmatpush1.bf16.msra.mxu0 0
      %2819 = vmatprep.subr.bf16.mxu0 0
      %2820 = vmatpush1.bf16.msra.mxu0 0
      %2821 = vmatprep.subr.bf16.mxu0 0
      %2822 = vmatpush1.bf16.msra.mxu0 0
      %2823 = vmatprep.subr.bf16.mxu0 0
      %2824 = vmatpush1.bf16.msra.mxu0 0
      %2825 = vmatprep.subr.bf16.mxu0 0
      %2826 = vmatpush1.bf16.msra.mxu0 0
      %2827 = vmatprep.subr.bf16.mxu0 0
      %2828 = vmatpush1.bf16.msra.mxu0 0
      %2829 = vmatprep.subr.bf16.mxu0 0
      %2830 = vmatpush1.bf16.msra.mxu0 0
      %2831 = vmatprep.mubr.bf16.mxu0 0
      %2832 = vmatmul.mubr.bf16.gmra.mrb[0].mxu0 %v2794
      %v2833 = vpop.f32.mrb[0].mxu0
      %v2834 = vadd.f32 %v2779, %v2833
      %v2835 = vpop.f32.mrb[0].mxu0
      %v2836 = vpop.f32.mrb[0].mxu0
      %v2837 = vadd.f32 %v2779, %v2836
      %v2838 = vpop.f32.mrb[0].mxu0
      %2839 = vmatprep.mubr.bf16.mxu0 0
      %2840 = vmatmul.mubr.bf16.gmra.mrb[0].mxu0 %v2797
      %v2841 = vpop.f32.mrb[0].mxu0
      %v2842 = vadd.f32 %v2779, %v2841
      %v2843 = vpop.f32.mrb[0].mxu0
      %v2844 = vpop.f32.mrb[0].mxu0
      %v2845 = vpop.f32.mrb[0].mxu0
      %2846 = vdwg.mxu0
      %v2847 = vmul.f32 %v2834, 0.5
      %v2848 = vmul.f32 %v2837, 0.5
      %v2849 = vmul.f32 %v2842, 0.5
      %v2850 = vmul.f32 %v2834, 0.044715
      %v2851 = vmul.f32 %v2837, 0.044715
      %v2852 = vmul.f32 %v2842, 0.044715
      %v2853 = vmul.f32 %v2850, %v2834
      %v2854 = vmul.f32 %v2851, %v2837
      %v2855 = vmul.f32 %v2852, %v2842
      %v2856 = vmul.f32 %v2853, %v2834
      %v2857 = vmul.f32 %v2854, %v2837
      %v2858 = vmul.f32 %v2855, %v2842
      %v2859 = vadd.f32 %v2834, %v2856
      %v2860 = vadd.f32 %v2837, %v2857
      %v2861 = vadd.f32 %v2842, %v2858
      %v2862 = vmul.f32 %v2859, 0.7978846
      %v2863 = vmul.f32 %v2860, 0.7978846
      %v2864 = vmul.f32 %v2861, 0.7978846
      %v2865 = vtanh.pop %v2862
      %v2866 = vtanh.pop %v2863
      %v2867 = vtanh.pop %v2864
      %v2868 = vadd.f32 %v2865, 1.0
      %v2869 = vadd.f32 %v2866, 1.0
      %v2870 = vadd.f32 %v2867, 1.0
      %v2871 = vmul.f32 %v2847, %v2868
      %v2872 = vmul.f32 %v2848, %v2869
      %v2873 = vmul.f32 %v2849, %v2870
      %v2874 = vpack.c.bf16 %v2872, %v2871
      %v2875 = vpack.c.bf16 %v2873, %v2873
      %s2876 = scalar_lea.vmem %s12, 64
      %v2877 = vld [vmem:[%s2876] sm:$0xf]
      %v2878 = vld [vmem:[%s2876 + $0x4] sm:$0xf]
      %v2879 = vld [vmem:[%s2876 + $0x8] sm:$0xf]
      %v2880 = vld [vmem:[%s2876 + $0xc] sm:$0xf]
      %v2881 = vld [vmem:[%s2876 + $0x10] sm:$0xf]
      %v2882 = vld [vmem:[%s2876 + $0x14] sm:$0xf]
      %v2883 = vld [vmem:[%s2876 + $0x18] sm:$0xf]
      %v2884 = vld [vmem:[%s2876 + $0x1c] sm:$0xf]
      %v2885 = vld [vmem:[%s2876 + $0x20] sm:$0xf]
      %v2886 = vld [vmem:[%s2876 + $0x24] sm:$0xf]
      %v2887 = vld [vmem:[%s2876 + $0x28] sm:$0xf]
      %v2888 = vld [vmem:[%s2876 + $0x2c] sm:$0xf]
      %v2889 = vld [vmem:[%s2876 + $0x30] sm:$0xf]
      %v2890 = vld [vmem:[%s2876 + $0x34] sm:$0xf]
      %v2891 = vld [vmem:[%s2876 + $0x38] sm:$0xf]
      %v2892 = vld [vmem:[%s2876 + $0x3c] sm:$0xf]
      %v2909 = vunpack.c.l.b16 %v2877
      %v2910 = vunpack.c.l.b16 %v2878
      %v2911 = vunpack.c.l.b16 %v2879
      %v2912 = vunpack.c.l.b16 %v2880
      %v2913 = vunpack.c.l.b16 %v2881
      %v2914 = vunpack.c.l.b16 %v2882
      %v2915 = vunpack.c.l.b16 %v2883
      %v2916 = vunpack.c.l.b16 %v2884
      %v2917 = vunpack.c.l.b16 %v2885
      %v2918 = vunpack.c.l.b16 %v2886
      %v2919 = vunpack.c.l.b16 %v2887
      %v2920 = vunpack.c.l.b16 %v2888
      %v2921 = vunpack.c.l.b16 %v2889
      %v2922 = vunpack.c.l.b16 %v2890
      %v2923 = vunpack.c.l.b16 %v2891
      %v2924 = vunpack.c.l.b16 %v2892
      %v2925 = vpack.c.b16 %v2910, %v2909
      %v2926 = vpack.c.b16 %v2912, %v2911
      %v2927 = vpack.c.b16 %v2914, %v2913
      %v2928 = vpack.c.b16 %v2916, %v2915
      %v2929 = vpack.c.b16 %v2918, %v2917
      %v2930 = vpack.c.b16 %v2920, %v2919
      %v2931 = vpack.c.b16 %v2922, %v2921
      %v2932 = vpack.c.b16 %v2924, %v2923
      %2941 = vmatprep.subr.bf16.mxu0 0
      %2942 = vmatpush1.bf16.msra.mxu0 %v2925
      %2943 = vmatprep.subr.bf16.mxu0 0
      %2944 = vmatpush1.bf16.msra.mxu0 %v2926
      %2945 = vmatprep.subr.bf16.mxu0 0
      %2946 = vmatpush1.bf16.msra.mxu0 %v2927
      %2947 = vmatprep.subr.bf16.mxu0 0
      %2948 = vmatpush1.bf16.msra.mxu0 %v2928
      %2949 = vmatprep.subr.bf16.mxu0 0
      %2950 = vmatpush1.bf16.msra.mxu0 %v2929
      %2951 = vmatprep.subr.bf16.mxu0 0
      %2952 = vmatpush1.bf16.msra.mxu0 %v2930
      %2953 = vmatprep.subr.bf16.mxu0 0
      %2954 = vmatpush1.bf16.msra.mxu0 %v2931
      %2955 = vmatprep.subr.bf16.mxu0 0
      %2956 = vmatpush1.bf16.msra.mxu0 %v2932
      %2957 = vmatprep.subr.bf16.mxu0 0
      %2958 = vmatpush1.bf16.msra.mxu0 0
      %2959 = vmatprep.subr.bf16.mxu0 0
      %2960 = vmatpush1.bf16.msra.mxu0 0
      %2961 = vmatprep.subr.bf16.mxu0 0
      %2962 = vmatpush1.bf16.msra.mxu0 0
      %2963 = vmatprep.subr.bf16.mxu0 0
      %2964 = vmatpush1.bf16.msra.mxu0 0
      %2965 = vmatprep.subr.bf16.mxu0 0
      %2966 = vmatpush1.bf16.msra.mxu0 0
      %2967 = vmatprep.subr.bf16.mxu0 0
      %2968 = vmatpush1.bf16.msra.mxu0 0
      %2969 = vmatprep.subr.bf16.mxu0 0
      %2970 = vmatpush1.bf16.msra.mxu0 0
      %2971 = vmatprep.subr.bf16.mxu0 0
      %2972 = vmatpush1.bf16.msra.mxu0 0
      %2973 = vmatprep.mubr.bf16.mxu0 0
      %2974 = vmatmul.mubr.bf16.gmra.mrb[0].mxu0 %v2874
      %v2975 = vpop.f32.mrb[0].mxu0
      %v2976 = vadd.f32 0.0, %v2975
      %v2977 = vpop.f32.mrb[0].mxu0
      %v2978 = vpop.f32.mrb[0].mxu0
      %v2979 = vadd.f32 0.0, %v2978
      %v2980 = vpop.f32.mrb[0].mxu0
      %2981 = vmatprep.mubr.bf16.mxu0 0
      %2982 = vmatmul.mubr.bf16.gmra.mrb[0].mxu0 %v2875
      %v2983 = vpop.f32.mrb[0].mxu0
      %v2984 = vadd.f32 0.0, %v2983
      %v2985 = vpop.f32.mrb[0].mxu0
      %v2986 = vpop.f32.mrb[0].mxu0
      %v2987 = vpop.f32.mrb[0].mxu0
      %2988 = vdwg.mxu0
      %v2989 = vadd.f32 %v2708, %v2976
      %v2990 = vadd.f32 %v2709, %v2979
      %v2991 = vadd.f32 %v2710, %v2984
      %s2992 = scalar_lea.vmem %s13, 1
      %v2993 = vld [vmem:[%s2992] sm:$0x1]
      %v2995 = vlaneseq
      %v2996 = vshrl.u32 %v2995, 7
      %v2997 = vsub.s32 0, %v2996
      %v2998 = vrot.slane %v2993, %v2997
      %v3000 = vadd.f32 %v2989, %v2998
      %v3001 = vadd.f32 %v2990, %v2998
      %v3002 = vadd.f32 %v2991, %v2998
      %v3003 = vld [vmem:[%s14] sm:$0x3]
      %v3004 = vsel %vm983, %v3000, 0.0
      %3005 = vadd.xlane.f32.xlu0 %v3004
      %v3006 = vpop.xlane.xlu0 %3005
      %v3007 = vsel %vm983, %v3001, 0.0
      %3008 = vadd.xlane.f32.xlu0 %v3007
      %v3009 = vpop.xlane.xlu0 %3008
      %v3010 = vsel %vm964, %v3002, 0.0
      %3011 = vadd.xlane.f32.xlu0 %v3010
      %v3012 = vpop.xlane.xlu0 %3011
      %v3013 = vmul.f32 %v3006, %v993
      %v3014 = vmul.f32 %v3009, %v993
      %v3015 = vmul.f32 %v3012, %v993
      %v3016 = vsub.f32 %v3000, %v3013
      %v3017 = vsub.f32 %v3001, %v3014
      %v3018 = vsub.f32 %v3002, %v3015
      %v3019 = vmul.f32 %v3016, %v3016
      %v3020 = vmul.f32 %v3017, %v3017
      %v3021 = vmul.f32 %v3018, %v3018
      %v3022 = vsel %vm983, %v3019, 0.0
      %3023 = vadd.xlane.f32.xlu0 %v3022
      %v3024 = vpop.xlane.xlu0 %3023
      %v3025 = vsel %vm983, %v3020, 0.0
      %3026 = vadd.xlane.f32.xlu0 %v3025
      %v3027 = vpop.xlane.xlu0 %3026
      %v3028 = vsel %vm964, %v3021, 0.0
      %3029 = vadd.xlane.f32.xlu0 %v3028
      %v3030 = vpop.xlane.xlu0 %3029
      %v3031 = vmul.f32 %v3024, %v993
      %v3032 = vmul.f32 %v3027, %v993
      %v3033 = vmul.f32 %v3030, %v993
      %v3034 = vadd.f32 %v3031, 1e-06
      %v3035 = vadd.f32 %v3032, 1e-06
      %v3036 = vadd.f32 %v3033, 1e-06
      %v3037 = vrsqrt.pop %v3034
      %v3038 = vrsqrt.pop %v3035
      %v3039 = vrsqrt.pop %v3036
      %v3040 = vmul.f32 %v3016, %v3037
      %v3041 = vmul.f32 %v3017, %v3038
      %v3042 = vmul.f32 %v3018, %v3039
      %v3043 = vlaneseq
      %v3044 = vshrl.u32 %v3043, 7
      %v3045 = vsub.s32 0, %v3044
      %v3046 = vrot.slane %v3003, %v3045
      %v3047 = vmul.f32 %v3040, %v3046
      %v3048 = vmul.f32 %v3041, %v3046
      %v3049 = vmul.f32 %v3042, %v3046
      %v3050 = vlaneseq
      %v3051 = vshrl.u32 %v3050, 7
      %v3052 = vsub.s32 1, %v3051
      %v3053 = vrot.slane %v3003, %v3052
      %v3054 = vadd.f32 %v3047, %v3053
      %v3055 = vadd.f32 %v3048, %v3053
      %v3056 = vadd.f32 %v3049, %v3053
      %vm3057 = vcmask 258048
      %3058 = vst.msk [vmem:[%s499] sm:$0x1f] %vm3057, %v3054
      %s3059 = scalar_lea.vmem %s499, 8
      %vm3060 = vcmask 261125
      %3061 = vst.msk [vmem:[%s3059 - $0x5] sm:$0xe0] %vm3060, %v3054
      %vm3062 = vcmask 254976
      %3063 = vst.msk [vmem:[%s3059 + $0x3] sm:$0x3] %vm3062, %v3055
      %s3064 = scalar_lea.vmem %s499, 16
      %vm3065 = vcmask 260098
      %3066 = vst.msk [vmem:[%s3064 - $0x2] sm:$0x7c] %vm3065, %v3055
      %s3067 = scalar_lea.vmem %s499, 24
      %vm3068 = vcmask 261127
      %3069 = vst.msk [vmem:[%s3067 - $0x7] sm:$0x80] %vm3068, %v3055
      %3070 = vst.msk [vmem:[%s3067 + $0x1] sm:$0xf] %vm964, %v3056
      %s3071 = smul.u32 4, %s26
      %p3072 = scmp.lt.s32.totalorder %s3071, 7
      %s3073 = scalar_select %p3072, %s3071, 7
      %s3074 = smul.addr %s3073, 8
      %s3075 = scalar_lea.vmem %s15, %s3074
      // Predicated region
      $region81: #{dino_v2_forward.1} parent=79 // pred_check
        %p3076 = pneg %p364
      $region82: #{dino_v2_forward.1} parent=79 // pred_check_branch
        %3078 = sbr.rel (%p3076) target = $region84
      $region83: #{dino_v2_forward.1} parent=79 // pred_region
        %s3079 = smul.u32 4, %s26
      $region84: #{dino_v2_forward.1} parent=79 // pred_fallthru
        _
    $region80: #{dino_v2_forward.1} parent=5 // pred_fallthru
      _
    %p3080 = scmp.le.s32.totalorder 2, %s21
    // Predicated region
    $region85: #{dino_v2_forward.1} parent=5 // pred_check
      %p3081 = pneg %p3080
    $region86: #{dino_v2_forward.1} parent=5 // pred_check_branch
      %3083 = sbr.rel (%p3081) target = $region88
    $region87: #{dino_v2_forward.1} parent=5 // pred_region
      %s3084 = ssub.s32 %s21, 2
      // Predicated region
      $region89: #{dino_v2_forward.1} parent=87 // pred_check
        %p3085 = pneg %p370
      $region90: #{dino_v2_forward.1} parent=87 // pred_check_branch
        %3087 = sbr.rel (%p3085) target = $region92
      $region91: #{dino_v2_forward.1} parent=87 // pred_region
        %s3088 = smul.u32 4, %s27
        %p3089 = scmp.lt.s32.totalorder %s3088, 7
        %s3090 = scalar_select %p3089, %s3088, 7
        %s3091 = smul.addr %s3090, 8
        %s3092 = scalar_lea.vmem %s15, %s3091
      $region92: #{dino_v2_forward.1} parent=87 // pred_fallthru
        _
    $region88: #{dino_v2_forward.1} parent=5 // pred_fallthru
      _
  $region6: #{dino_v2_forward.1} parent=0 // loop_footer
    %s25 = sadd.s32 1, %s21
  $region7: #{dino_v2_forward.1} parent=0 // loop_footer_branch
    %20 = sbr.rel target = $region3
  $region8: #{dino_v2_forward.1} parent=0 // loop_exit
    _

</llo_original>
